<compile_context>
chip_gen: v7x
topology: tpu7x:2x2x1
jax: 0.10.0
libtpu: 0.0.40
codegen_flags: <defaults>
</compile_context>

<pallas_src>
import functools

import jax
import jax.numpy as jnp
from jax.experimental import pallas as pl
from jax.experimental.pallas import tpu as pltpu


_PARALLEL_1D = pltpu.CompilerParams(dimension_semantics=("parallel",))


def _round_up(x, m):
    return ((x + m - 1) // m) * m


def _layernorm_f32(x, gamma, beta, eps):
    # f32 elementwise math (v5e has no bf16 VPU/EUP path).
    mean = jnp.mean(x, axis=-1, keepdims=True)
    var = jnp.mean(jnp.square(x - mean), axis=-1, keepdims=True)
    return (x - mean) * jax.lax.rsqrt(var + eps) * gamma + beta


# ------------------------------------------------------------ embedding kernel --

def _embed_kernel(patch_ref, w_ref, b_ref, cls_ref, pos_ref, o_ref, *,
                  seq_len, seq_pad):
    """Patch projection + CLS concat + positional add, padded to seq_pad rows."""
    patches = patch_ref[0]                                   # (n_patch, C*p*p)
    emb = jnp.dot(patches.astype(w_ref.dtype), w_ref[...],
                  preferred_element_type=jnp.float32)
    pos = pos_ref[...].astype(jnp.float32)                   # (seq_len, D)
    emb = emb + b_ref[...].astype(jnp.float32) + pos[1:, :]
    cls_row = cls_ref[...].astype(jnp.float32) + pos[0:1, :]
    pad = jnp.zeros((seq_pad - seq_len, emb.shape[-1]), jnp.float32)
    o_ref[0] = jnp.concatenate([cls_row, emb, pad], axis=0).astype(o_ref.dtype)


def embed(patches, w, bias, cls_tok, pos, *, seq_len, seq_pad):
    B, n_patch, P = patches.shape
    D = w.shape[1]
    return pl.pallas_call(
        functools.partial(_embed_kernel, seq_len=seq_len, seq_pad=seq_pad),
        out_shape=jax.ShapeDtypeStruct((B, seq_pad, D), jnp.float32),
        grid=(B,),
        in_specs=[
            pl.BlockSpec((1, n_patch, P), lambda b: (b, 0, 0)),
            pl.BlockSpec((P, D), lambda b: (0, 0)),
            pl.BlockSpec((1, D), lambda b: (0, 0)),
            pl.BlockSpec((1, D), lambda b: (0, 0)),
            pl.BlockSpec((seq_len, D), lambda b: (0, 0)),
        ],
        out_specs=pl.BlockSpec((1, seq_pad, D), lambda b: (b, 0, 0)),
        compiler_params=_PARALLEL_1D,
    )(patches, w, bias.reshape(1, D), cls_tok.reshape(1, D),
      pos.reshape(seq_len, D))


# ---------------------------------------------------------- fused layer kernel --

def _vit_layer_kernel(x_ref,
                      ln1_g_ref, ln1_b_ref, wqkv_ref, bqkv_ref,
                      wo_ref, bo_ref,
                      ln2_g_ref, ln2_b_ref, wi_ref, bi_ref, wm_ref, bm_ref,
                      o_ref, *, eps, num_heads, head_dim, seq_len, scale):
    x = x_ref[0].astype(jnp.float32)                         # (S_pad, D)
    s_pad = x.shape[0]
    d_model = num_heads * head_dim
    mxu_dt = wqkv_ref.dtype                                  # bf16 MXU inputs

    # --- LN1 + packed QKV projection (f32 accumulation) ---
    h = _layernorm_f32(x, ln1_g_ref[...].astype(jnp.float32),
                       ln1_b_ref[...].astype(jnp.float32), eps)
    qkv = jnp.dot(h.astype(mxu_dt), wqkv_ref[...],
                  preferred_element_type=jnp.float32)
    qkv = qkv + bqkv_ref[...].astype(jnp.float32)            # (S_pad, 3D)

    # --- per-head attention on the packed tensor; padded keys masked ---
    key_valid = jax.lax.broadcasted_iota(jnp.int32, (s_pad, s_pad), 1) < seq_len
    ctx_heads = []
    for hd in range(num_heads):
        lo = hd * head_dim
        q = qkv[:, lo:lo + head_dim]
        k = qkv[:, d_model + lo:d_model + lo + head_dim]
        v = qkv[:, 2 * d_model + lo:2 * d_model + lo + head_dim]
        s = jax.lax.dot_general(q.astype(mxu_dt), k.astype(mxu_dt),
                                (((1,), (1,)), ((), ())),
                                preferred_element_type=jnp.float32) * scale
        s = jnp.where(key_valid, s, -1e30)
        s = s - jnp.max(s, axis=-1, keepdims=True)
        p = jnp.exp(s)
        denom = jnp.sum(p, axis=-1, keepdims=True)
        # TODO(synk): approx reciprocal (EUP) is not bit-identical to an exact divide.
        p = p * pl.reciprocal(denom, approx=True)
        ctx_heads.append(jnp.dot(p.astype(mxu_dt), v.astype(mxu_dt),
                                 preferred_element_type=jnp.float32))
    ctx = jnp.concatenate(ctx_heads, axis=-1)                 # (S_pad, D) lane-dense

    # --- attention output projection + residual ---
    attn_out = jnp.dot(ctx.astype(mxu_dt), wo_ref[...],
                       preferred_element_type=jnp.float32)
    x = x + attn_out + bo_ref[...].astype(jnp.float32)

    # --- LN2 + MLP(gelu) + residual (intermediate never leaves VMEM) ---
    h2 = _layernorm_f32(x, ln2_g_ref[...].astype(jnp.float32),
                        ln2_b_ref[...].astype(jnp.float32), eps)
    inter = jnp.dot(h2.astype(mxu_dt), wi_ref[...],
                    preferred_element_type=jnp.float32)
    # TODO(synk): HF ViT uses exact (erf) GELU; tanh approximation used here.
    inter = jax.nn.gelu(inter + bi_ref[...].astype(jnp.float32), approximate=True)
    mlp = jnp.dot(inter.astype(mxu_dt), wm_ref[...],
                  preferred_element_type=jnp.float32)
    x = x + mlp + bm_ref[...].astype(jnp.float32)

    o_ref[0] = x.astype(o_ref.dtype)


def vit_layer(x, layer, *, eps, num_heads, head_dim, seq_len, scale):
    B, s_pad, D = x.shape
    I = layer["wi"].shape[1]
    cost = pl.CostEstimate(
        flops=B * (2 * s_pad * D * 3 * D
                   + 4 * num_heads * s_pad * s_pad * head_dim
                   + 2 * s_pad * D * D
                   + 4 * s_pad * D * I),
        transcendentals=B * (num_heads * s_pad * s_pad + s_pad * I + 2 * s_pad),
        bytes_accessed=2 * B * s_pad * D * 4 + (4 * D * D + 2 * D * I) * 2,
    )
    full = lambda shape: pl.BlockSpec(shape, lambda b: (0, 0))
    kernel = functools.partial(
        _vit_layer_kernel, eps=eps, num_heads=num_heads, head_dim=head_dim,
        seq_len=seq_len, scale=scale)
    return pl.pallas_call(
        kernel,
        out_shape=jax.ShapeDtypeStruct((B, s_pad, D), x.dtype),
        grid=(B,),
        in_specs=[
            pl.BlockSpec((1, s_pad, D), lambda b: (b, 0, 0)),
            full((1, D)), full((1, D)),                 # ln1 gamma/beta
            full((D, 3 * D)), full((1, 3 * D)),         # packed qkv
            full((D, D)), full((1, D)),                 # output proj
            full((1, D)), full((1, D)),                 # ln2 gamma/beta
            full((D, I)), full((1, I)),                 # mlp in
            full((I, D)), full((1, D)),                 # mlp out
        ],
        out_specs=pl.BlockSpec((1, s_pad, D), lambda b: (b, 0, 0)),
        compiler_params=_PARALLEL_1D,
        cost_estimate=cost,
    )(x,
      layer["ln1_g"].reshape(1, D), layer["ln1_b"].reshape(1, D),
      layer["wqkv"], layer["bqkv"].reshape(1, 3 * D),
      layer["wo"], layer["bo"].reshape(1, D),
      layer["ln2_g"].reshape(1, D), layer["ln2_b"].reshape(1, D),
      layer["wi"], layer["bi"].reshape(1, I),
      layer["wm"], layer["bm"].reshape(1, D))


# --------------------------------------------------------------- CLS head kernel --

def _cls_head_kernel(x_ref, g_ref, bln_ref, pw_ref, pb_ref, fw_ref, fb_ref,
                     o_ref, *, eps):
    # Final LN + pooler (tanh Linear) + fc, on the CLS row only (LN is
    # per-token, so slicing CLS before the final layernorm is exact).
    cls = x_ref[...][:, 0, :].astype(jnp.float32)             # (B, D)
    h = _layernorm_f32(cls, g_ref[...].astype(jnp.float32),
                       bln_ref[...].astype(jnp.float32), eps)
    pooled = jnp.dot(h.astype(pw_ref.dtype), pw_ref[...],
                     preferred_element_type=jnp.float32)
    pooled = jnp.tanh(pooled + pb_ref[...].astype(jnp.float32))
    out = jnp.dot(pooled.astype(fw_ref.dtype), fw_ref[...],
                  preferred_element_type=jnp.float32)
    o_ref[...] = (out + fb_ref[...].astype(jnp.float32)).astype(o_ref.dtype)


def cls_head(x, gamma, beta, pool_w, pool_b, fc_w, fc_b, eps):
    B, s_pad, D = x.shape
    E = fc_w.shape[1]
    return pl.pallas_call(
        functools.partial(_cls_head_kernel, eps=eps),
        out_shape=jax.ShapeDtypeStruct((B, E), jnp.float32),
        grid=(1,),
        in_specs=[
            pl.BlockSpec((B, s_pad, D), lambda i: (0, 0, 0)),
            pl.BlockSpec((1, D), lambda i: (0, 0)),
            pl.BlockSpec((1, D), lambda i: (0, 0)),
            pl.BlockSpec((D, D), lambda i: (0, 0)),
            pl.BlockSpec((1, D), lambda i: (0, 0)),
            pl.BlockSpec((D, E), lambda i: (0, 0)),
            pl.BlockSpec((1, E), lambda i: (0, 0)),
        ],
        out_specs=pl.BlockSpec((B, E), lambda i: (0, 0)),
    )(x, gamma.reshape(1, D), beta.reshape(1, D),
      pool_w, pool_b.reshape(1, D), fc_w, fc_b.reshape(1, E))


# ------------------------------------------------------------------- parameters --

def init_params(key, cfg):
    D = cfg["hidden"]
    I = cfg["intermediate"]
    C = cfg["num_channels"]
    p = cfg["patch_size"]
    n_patches = (cfg["image_size"] // p) ** 2
    E = cfg["embed_dim"]
    wdt = cfg["weight_dtype"]

    def nxt():
        nonlocal key
        key, sub = jax.random.split(key)
        return sub

    def w(shape):  # bf16 weights: bf16 MXU inputs + half the weight DMA bytes
        return (0.02 * jax.random.normal(nxt(), shape, jnp.float32)).astype(wdt)

    def f32(shape):
        return 0.02 * jax.random.normal(nxt(), shape, jnp.float32)

    params = {
        "patch_w": w((C * p * p, D)),
        "patch_b": jnp.zeros((D,), jnp.float32),
        "cls": f32((1, 1, D)),
        "pos": f32((1, n_patches + 1, D)),
        "layers": [],
        "ln_g": jnp.ones((D,), jnp.float32),
        "ln_b": jnp.zeros((D,), jnp.float32),
        "pool_w": w((D, D)),
        "pool_b": jnp.zeros((D,), jnp.float32),
        "fc_w": w((D, E)),
        "fc_b": jnp.zeros((E,), jnp.float32),
    }
    for _ in range(cfg["num_layers"]):
        params["layers"].append({
            "ln1_g": jnp.ones((D,), jnp.float32), "ln1_b": jnp.zeros((D,), jnp.float32),
            # packed QKV: columns are [q | k | v]
            "wqkv": w((D, 3 * D)), "bqkv": jnp.zeros((3 * D,), jnp.float32),
            "wo": w((D, D)), "bo": jnp.zeros((D,), jnp.float32),
            "ln2_g": jnp.ones((D,), jnp.float32), "ln2_b": jnp.zeros((D,), jnp.float32),
            "wi": w((D, I)), "bi": jnp.zeros((I,), jnp.float32),
            "wm": w((I, D)), "bm": jnp.zeros((D,), jnp.float32),
        })
    return params


# ----------------------------------------------------------------------- forward --

def image_encoder_forward(params, images, cfg):
    B, C, H, W = images.shape
    p = cfg["patch_size"]
    nh, nw = H // p, W // p
    D = cfg["hidden"]
    Hh = cfg["num_heads"]
    Dh = D // Hh
    eps = cfg["eps"]
    scale = 1.0 / (Dh ** 0.5)
    S = nh * nw + 1
    S_pad = _round_up(S, 8)

    # Conv2d(kernel=stride=patch) == patchify + matmul.  The patchify relayout
    # of raw pixels stays in XLA (one cheap copy); everything afterwards runs
    # in 1 + num_layers + 1 fused pallas_calls with no intermediate HBM glue.
    patches = images.reshape(B, C, nh, p, nw, p)
    patches = patches.transpose(0, 2, 4, 1, 3, 5).reshape(B, nh * nw, C * p * p)

    # Patch projection + CLS token + positional embeddings, padded to S_pad.
    x = embed(patches, params["patch_w"], params["patch_b"],
              params["cls"], params["pos"], seq_len=S, seq_pad=S_pad)

    # Pre-LN ViT encoder: one fused pallas_call per layer.
    for layer in params["layers"]:
        x = vit_layer(x, layer, eps=eps, num_heads=Hh, head_dim=Dh,
                      seq_len=S, scale=scale)

    # Final LN + CLS pooler (tanh) + fc(embed_dim), padded rows dropped here.
    return cls_head(x, params["ln_g"], params["ln_b"],
                    params["pool_w"], params["pool_b"],
                    params["fc_w"], params["fc_b"], eps)


# -------------------------------------------------------------------------- main --

if __name__ == "__main__":
    cfg = dict(
        image_size=32,
        patch_size=8,
        num_channels=3,
        hidden=128,              # lane-dense feature dims (multiples of 128)
        num_heads=4,
        num_layers=2,
        intermediate=256,
        embed_dim=256,           # matches the PyTorch module default embed_dim
        eps=1e-12,
        weight_dtype=jnp.bfloat16,
    )

    key = jax.random.PRNGKey(0)
    k_img, k_par = jax.random.split(key)
    images = jax.random.normal(
        k_img,
        (2, cfg["num_channels"], cfg["image_size"], cfg["image_size"]),
        dtype=jnp.float32)
    params = init_params(k_par, cfg)

    fwd = jax.jit(functools.partial(image_encoder_forward, cfg=cfg))
    out = jax.block_until_ready(fwd(params, images))

    assert out.shape == (2, cfg["embed_dim"]), out.shape
    assert out.dtype == jnp.float32
    assert bool(jnp.all(jnp.isfinite(out)))
    print("KERNEL_OK")
</pallas_src>

<mosaic_0001>
module attributes {stable_mosaic.version = 11 : i64} {
  func.func @_embed_kernel(%arg0: i32, %arg1: memref<1x16x192xf32, #tpu.memory_space<vmem>>, %arg2: memref<192x128xbf16, #tpu.memory_space<vmem>>, %arg3: memref<1x128xf32, #tpu.memory_space<vmem>>, %arg4: memref<1x128xf32, #tpu.memory_space<vmem>>, %arg5: memref<17x128xf32, #tpu.memory_space<vmem>>, %arg6: memref<1x24x128xf32, #tpu.memory_space<vmem>>) attributes {dimension_semantics = [#tpu.dimension_semantics<parallel>], iteration_bounds = array<i64: 2>, scalar_prefetch = 0 : i64, scratch_operands = 0 : i64, tpu.core_type = #tpu.core_type<tc>, window_params = [{transform_indices = @transform_0, window_bounds = array<i64: 1, 16, 192>}, {pipeline_mode = #tpu.pipeline_mode<synchronous>, transform_indices = @transform_1, window_bounds = array<i64: 192, 128>}, {pipeline_mode = #tpu.pipeline_mode<synchronous>, transform_indices = @transform_2, window_bounds = array<i64: 1, 128>}, {pipeline_mode = #tpu.pipeline_mode<synchronous>, transform_indices = @transform_3, window_bounds = array<i64: 1, 128>}, {pipeline_mode = #tpu.pipeline_mode<synchronous>, transform_indices = @transform_4, window_bounds = array<i64: 17, 128>}, {transform_indices = @transform_5, window_bounds = array<i64: 1, 24, 128>}]} {
    %c0 = arith.constant 0 : index
    %c0_0 = arith.constant 0 : index
    %c0_1 = arith.constant 0 : index
    %0 = vector.load %arg1[%c0, %c0_0, %c0_1] : memref<1x16x192xf32, #tpu.memory_space<vmem>>, vector<1x16x192xf32>
    %1 = vector.shape_cast %0 : vector<1x16x192xf32> to vector<16x192xf32>
    %2 = arith.truncf %1 : vector<16x192xf32> to vector<16x192xbf16>
    %c0_2 = arith.constant 0 : index
    %c0_3 = arith.constant 0 : index
    %3 = vector.load %arg2[%c0_2, %c0_3] : memref<192x128xbf16, #tpu.memory_space<vmem>>, vector<192x128xbf16>
    %cst = arith.constant dense<0.000000e+00> : vector<16x128xf32>
    %4 = tpu.matmul %2, %3, %cst {dimension_numbers = #tpu.dot_dimension_numbers<[1], [0], [0], [1], [0, 0, 1, 1], [], []>} : vector<16x192xbf16>, vector<192x128xbf16>, vector<16x128xf32> -> vector<16x128xf32>
    %c0_4 = arith.constant 0 : index
    %c0_5 = arith.constant 0 : index
    %5 = vector.load %arg5[%c0_4, %c0_5] : memref<17x128xf32, #tpu.memory_space<vmem>>, vector<17x128xf32>
    %c0_6 = arith.constant 0 : index
    %c0_7 = arith.constant 0 : index
    %6 = vector.load %arg3[%c0_6, %c0_7] : memref<1x128xf32, #tpu.memory_space<vmem>>, vector<1x128xf32>
    %7 = vector.broadcast %6 : vector<1x128xf32> to vector<16x128xf32>
    %8 = arith.addf %4, %7 : vector<16x128xf32>
    %9 = vector.extract_strided_slice %5 {offsets = [1, 0], sizes = [16, 128], strides = [1, 1]} : vector<17x128xf32> to vector<16x128xf32>
    %10 = arith.addf %8, %9 : vector<16x128xf32>
    %c0_8 = arith.constant 0 : index
    %c0_9 = arith.constant 0 : index
    %11 = vector.load %arg4[%c0_8, %c0_9] : memref<1x128xf32, #tpu.memory_space<vmem>>, vector<1x128xf32>
    %12 = vector.extract_strided_slice %5 {offsets = [0, 0], sizes = [1, 128], strides = [1, 1]} : vector<17x128xf32> to vector<1x128xf32>
    %13 = arith.addf %11, %12 : vector<1x128xf32>
    %cst_10 = arith.constant 0.000000e+00 : f32
    %14 = vector.broadcast %cst_10 : f32 to vector<7x128xf32>
    %15 = tpu.concatenate %13, %10, %14 in 0 : vector<1x128xf32>, vector<16x128xf32>, vector<7x128xf32> -> vector<24x128xf32>
    %c0_11 = arith.constant 0 : index
    %c0_12 = arith.constant 0 : index
    %c0_13 = arith.constant 0 : index
    %16 = vector.load %arg6[%c0_11, %c0_12, %c0_13] : memref<1x24x128xf32, #tpu.memory_space<vmem>>, vector<1x24x128xf32>
    %17 = vector.shape_cast %16 : vector<1x24x128xf32> to vector<24x128xf32>
    %18 = vector.shape_cast %15 : vector<24x128xf32> to vector<1x24x128xf32>
    tpu.vector_store %arg6[%c0_11, %c0_12, %c0_13], %18 {strides = array<i32>} : memref<1x24x128xf32, #tpu.memory_space<vmem>>, vector<1x24x128xf32>,
    return
  }
  func.func @transform_0(%arg0: i32) -> (i32, i32, i32) {
    %c0_i32 = arith.constant 0 : i32
    %c0_i32_0 = arith.constant 0 : i32
    %c0_i32_1 = arith.constant 0 : i32
    return %arg0, %c0_i32, %c0_i32_0 : i32, i32, i32
  }
  func.func @transform_1(%arg0: i32) -> (i32, i32) {
    %c0_i32 = arith.constant 0 : i32
    %c0_i32_0 = arith.constant 0 : i32
    %c0_i32_1 = arith.constant 0 : i32
    return %c0_i32, %c0_i32_0 : i32, i32
  }
  func.func @transform_2(%arg0: i32) -> (i32, i32) {
    %c0_i32 = arith.constant 0 : i32
    %c0_i32_0 = arith.constant 0 : i32
    %c0_i32_1 = arith.constant 0 : i32
    return %c0_i32, %c0_i32_0 : i32, i32
  }
  func.func @transform_3(%arg0: i32) -> (i32, i32) {
    %c0_i32 = arith.constant 0 : i32
    %c0_i32_0 = arith.constant 0 : i32
    %c0_i32_1 = arith.constant 0 : i32
    return %c0_i32, %c0_i32_0 : i32, i32
  }
  func.func @transform_4(%arg0: i32) -> (i32, i32) {
    %c0_i32 = arith.constant 0 : i32
    %c0_i32_0 = arith.constant 0 : i32
    %c0_i32_1 = arith.constant 0 : i32
    return %c0_i32, %c0_i32_0 : i32, i32
  }
  func.func @transform_5(%arg0: i32) -> (i32, i32, i32) {
    %c0_i32 = arith.constant 0 : i32
    %c0_i32_0 = arith.constant 0 : i32
    %c0_i32_1 = arith.constant 0 : i32
    return %arg0, %c0_i32, %c0_i32_0 : i32, i32, i32
  }
}

module attributes {stable_mosaic.version = 11 : i64} {
  func.func @_cls_head_kernel(%arg0: i32, %arg1: memref<2x24x128xf32, #tpu.memory_space<vmem>>, %arg2: memref<1x128xf32, #tpu.memory_space<vmem>>, %arg3: memref<1x128xf32, #tpu.memory_space<vmem>>, %arg4: memref<128x128xbf16, #tpu.memory_space<vmem>>, %arg5: memref<1x128xf32, #tpu.memory_space<vmem>>, %arg6: memref<128x256xbf16, #tpu.memory_space<vmem>>, %arg7: memref<1x256xf32, #tpu.memory_space<vmem>>, %arg8: memref<2x256xf32, #tpu.memory_space<vmem>>) attributes {dimension_semantics = [#tpu.dimension_semantics<arbitrary>], iteration_bounds = array<i64: 1>, scalar_prefetch = 0 : i64, scratch_operands = 0 : i64, tpu.core_type = #tpu.core_type<tc>, window_params = [{pipeline_mode = #tpu.pipeline_mode<synchronous>, transform_indices = @transform_0, window_bounds = array<i64: 2, 24, 128>}, {pipeline_mode = #tpu.pipeline_mode<synchronous>, transform_indices = @transform_1, window_bounds = array<i64: 1, 128>}, {pipeline_mode = #tpu.pipeline_mode<synchronous>, transform_indices = @transform_2, window_bounds = array<i64: 1, 128>}, {pipeline_mode = #tpu.pipeline_mode<synchronous>, transform_indices = @transform_3, window_bounds = array<i64: 128, 128>}, {pipeline_mode = #tpu.pipeline_mode<synchronous>, transform_indices = @transform_4, window_bounds = array<i64: 1, 128>}, {pipeline_mode = #tpu.pipeline_mode<synchronous>, transform_indices = @transform_5, window_bounds = array<i64: 128, 256>}, {pipeline_mode = #tpu.pipeline_mode<synchronous>, transform_indices = @transform_6, window_bounds = array<i64: 1, 256>}, {pipeline_mode = #tpu.pipeline_mode<synchronous>, transform_indices = @transform_7, window_bounds = array<i64: 2, 256>}]} {
    %c0 = arith.constant 0 : index
    %c0_0 = arith.constant 0 : index
    %c0_1 = arith.constant 0 : index
    %0 = vector.load %arg1[%c0, %c0_0, %c0_1] : memref<2x24x128xf32, #tpu.memory_space<vmem>>, vector<2x24x128xf32>
    %1 = vector.extract_strided_slice %0 {offsets = [0, 0, 0], sizes = [2, 1, 128], strides = [1, 1, 1]} : vector<2x24x128xf32> to vector<2x1x128xf32>
    %2 = vector.shape_cast %1 : vector<2x1x128xf32> to vector<2x128xf32>
    %c0_2 = arith.constant 0 : index
    %c0_3 = arith.constant 0 : index
    %3 = vector.load %arg2[%c0_2, %c0_3] : memref<1x128xf32, #tpu.memory_space<vmem>>, vector<1x128xf32>
    %c0_4 = arith.constant 0 : index
    %c0_5 = arith.constant 0 : index
    %4 = vector.load %arg3[%c0_4, %c0_5] : memref<1x128xf32, #tpu.memory_space<vmem>>, vector<1x128xf32>
    %cst = arith.constant dense<0.000000e+00> : vector<2xf32>
    %5 = vector.multi_reduction <add>, %2, %cst [1] : vector<2x128xf32> to vector<2xf32>
    %6 = vector.shape_cast %5 : vector<2xf32> to vector<2x1xf32>
    %cst_6 = arith.constant 1.280000e+02 : f32
    %7 = vector.broadcast %cst_6 : f32 to vector<2x1xf32>
    %8 = arith.divf %6, %7 : vector<2x1xf32>
    %9 = vector.broadcast %8 : vector<2x1xf32> to vector<2x128xf32>
    %10 = arith.subf %2, %9 : vector<2x128xf32>
    %11 = arith.mulf %10, %10 : vector<2x128xf32>
    %cst_7 = arith.constant dense<0.000000e+00> : vector<2xf32>
    %12 = vector.multi_reduction <add>, %11, %cst_7 [1] : vector<2x128xf32> to vector<2xf32>
    %13 = vector.shape_cast %12 : vector<2xf32> to vector<2x1xf32>
    %cst_8 = arith.constant 1.280000e+02 : f32
    %14 = vector.broadcast %cst_8 : f32 to vector<2x1xf32>
    %15 = arith.divf %13, %14 : vector<2x1xf32>
    %16 = vector.broadcast %8 : vector<2x1xf32> to vector<2x128xf32>
    %17 = arith.subf %2, %16 : vector<2x128xf32>
    %cst_9 = arith.constant 9.99999996E-13 : f32
    %18 = vector.broadcast %cst_9 : f32 to vector<2x1xf32>
    %19 = arith.addf %15, %18 : vector<2x1xf32>
    %20 = math.rsqrt %19 : vector<2x1xf32>
    %21 = vector.broadcast %20 : vector<2x1xf32> to vector<2x128xf32>
    %22 = arith.mulf %17, %21 : vector<2x128xf32>
    %23 = vector.broadcast %3 : vector<1x128xf32> to vector<2x128xf32>
    %24 = arith.mulf %22, %23 : vector<2x128xf32>
    %25 = vector.broadcast %4 : vector<1x128xf32> to vector<2x128xf32>
    %26 = arith.addf %24, %25 : vector<2x128xf32>
    %27 = arith.truncf %26 : vector<2x128xf32> to vector<2x128xbf16>
    %c0_10 = arith.constant 0 : index
    %c0_11 = arith.constant 0 : index
    %28 = vector.load %arg4[%c0_10, %c0_11] : memref<128x128xbf16, #tpu.memory_space<vmem>>, vector<128x128xbf16>
    %cst_12 = arith.constant dense<0.000000e+00> : vector<2x128xf32>
    %29 = tpu.matmul %27, %28, %cst_12 {dimension_numbers = #tpu.dot_dimension_numbers<[1], [0], [0], [1], [0, 0, 1, 1], [], []>} : vector<2x128xbf16>, vector<128x128xbf16>, vector<2x128xf32> -> vector<2x128xf32>
    %c0_13 = arith.constant 0 : index
    %c0_14 = arith.constant 0 : index
    %30 = vector.load %arg5[%c0_13, %c0_14] : memref<1x128xf32, #tpu.memory_space<vmem>>, vector<1x128xf32>
    %31 = vector.broadcast %30 : vector<1x128xf32> to vector<2x128xf32>
    %32 = arith.addf %29, %31 : vector<2x128xf32>
    %33 = math.tanh %32 : vector<2x128xf32>
    %34 = arith.truncf %33 : vector<2x128xf32> to vector<2x128xbf16>
    %c0_15 = arith.constant 0 : index
    %c0_16 = arith.constant 0 : index
    %35 = vector.load %arg6[%c0_15, %c0_16] : memref<128x256xbf16, #tpu.memory_space<vmem>>, vector<128x256xbf16>
    %cst_17 = arith.constant dense<0.000000e+00> : vector<2x256xf32>
    %36 = tpu.matmul %34, %35, %cst_17 {dimension_numbers = #tpu.dot_dimension_numbers<[1], [0], [0], [1], [0, 0, 1, 1], [], []>} : vector<2x128xbf16>, vector<128x256xbf16>, vector<2x256xf32> -> vector<2x256xf32>
    %c0_18 = arith.constant 0 : index
    %c0_19 = arith.constant 0 : index
    %37 = vector.load %arg7[%c0_18, %c0_19] : memref<1x256xf32, #tpu.memory_space<vmem>>, vector<1x256xf32>
    %38 = vector.broadcast %37 : vector<1x256xf32> to vector<2x256xf32>
    %39 = arith.addf %36, %38 : vector<2x256xf32>
    %c0_20 = arith.constant 0 : index
    %c0_21 = arith.constant 0 : index
    %40 = vector.load %arg8[%c0_20, %c0_21] : memref<2x256xf32, #tpu.memory_space<vmem>>, vector<2x256xf32>
    tpu.vector_store %arg8[%c0_20, %c0_21], %39 {strides = array<i32>} : memref<2x256xf32, #tpu.memory_space<vmem>>, vector<2x256xf32>,
    return
  }
  func.func @transform_0(%arg0: i32) -> (i32, i32, i32) {
    %c0_i32 = arith.constant 0 : i32
    %c0_i32_0 = arith.constant 0 : i32
    %c0_i32_1 = arith.constant 0 : i32
    %c0_i32_2 = arith.constant 0 : i32
    return %c0_i32, %c0_i32_0, %c0_i32_1 : i32, i32, i32
  }
  func.func @transform_1(%arg0: i32) -> (i32, i32) {
    %c0_i32 = arith.constant 0 : i32
    %c0_i32_0 = arith.constant 0 : i32
    %c0_i32_1 = arith.constant 0 : i32
    return %c0_i32, %c0_i32_0 : i32, i32
  }
  func.func @transform_2(%arg0: i32) -> (i32, i32) {
    %c0_i32 = arith.constant 0 : i32
    %c0_i32_0 = arith.constant 0 : i32
    %c0_i32_1 = arith.constant 0 : i32
    return %c0_i32, %c0_i32_0 : i32, i32
  }
  func.func @transform_3(%arg0: i32) -> (i32, i32) {
    %c0_i32 = arith.constant 0 : i32
    %c0_i32_0 = arith.constant 0 : i32
    %c0_i32_1 = arith.constant 0 : i32
    return %c0_i32, %c0_i32_0 : i32, i32
  }
  func.func @transform_4(%arg0: i32) -> (i32, i32) {
    %c0_i32 = arith.constant 0 : i32
    %c0_i32_0 = arith.constant 0 : i32
    %c0_i32_1 = arith.constant 0 : i32
    return %c0_i32, %c0_i32_0 : i32, i32
  }
  func.func @transform_5(%arg0: i32) -> (i32, i32) {
    %c0_i32 = arith.constant 0 : i32
    %c0_i32_0 = arith.constant 0 : i32
    %c0_i32_1 = arith.constant 0 : i32
    return %c0_i32, %c0_i32_0 : i32, i32
  }
  func.func @transform_6(%arg0: i32) -> (i32, i32) {
    %c0_i32 = arith.constant 0 : i32
    %c0_i32_0 = arith.constant 0 : i32
    %c0_i32_1 = arith.constant 0 : i32
    return %c0_i32, %c0_i32_0 : i32, i32
  }
  func.func @transform_7(%arg0: i32) -> (i32, i32) {
    %c0_i32 = arith.constant 0 : i32
    %c0_i32_0 = arith.constant 0 : i32
    %c0_i32_1 = arith.constant 0 : i32
    return %c0_i32, %c0_i32_0 : i32, i32
  }
}

module attributes {stable_mosaic.version = 11 : i64} {
  func.func @_vit_layer_kernel(%arg0: i32, %arg1: memref<1x24x128xf32, #tpu.memory_space<vmem>>, %arg2: memref<1x128xf32, #tpu.memory_space<vmem>>, %arg3: memref<1x128xf32, #tpu.memory_space<vmem>>, %arg4: memref<128x384xbf16, #tpu.memory_space<vmem>>, %arg5: memref<1x384xf32, #tpu.memory_space<vmem>>, %arg6: memref<128x128xbf16, #tpu.memory_space<vmem>>, %arg7: memref<1x128xf32, #tpu.memory_space<vmem>>, %arg8: memref<1x128xf32, #tpu.memory_space<vmem>>, %arg9: memref<1x128xf32, #tpu.memory_space<vmem>>, %arg10: memref<128x256xbf16, #tpu.memory_space<vmem>>, %arg11: memref<1x256xf32, #tpu.memory_space<vmem>>, %arg12: memref<256x128xbf16, #tpu.memory_space<vmem>>, %arg13: memref<1x128xf32, #tpu.memory_space<vmem>>, %arg14: memref<1x24x128xf32, #tpu.memory_space<vmem>>) attributes {dimension_semantics = [#tpu.dimension_semantics<parallel>], iteration_bounds = array<i64: 2>, scalar_prefetch = 0 : i64, scratch_operands = 0 : i64, tpu.core_type = #tpu.core_type<tc>, window_params = [{transform_indices = @transform_0, window_bounds = array<i64: 1, 24, 128>}, {pipeline_mode = #tpu.pipeline_mode<synchronous>, transform_indices = @transform_1, window_bounds = array<i64: 1, 128>}, {pipeline_mode = #tpu.pipeline_mode<synchronous>, transform_indices = @transform_2, window_bounds = array<i64: 1, 128>}, {pipeline_mode = #tpu.pipeline_mode<synchronous>, transform_indices = @transform_3, window_bounds = array<i64: 128, 384>}, {pipeline_mode = #tpu.pipeline_mode<synchronous>, transform_indices = @transform_4, window_bounds = array<i64: 1, 384>}, {pipeline_mode = #tpu.pipeline_mode<synchronous>, transform_indices = @transform_5, window_bounds = array<i64: 128, 128>}, {pipeline_mode = #tpu.pipeline_mode<synchronous>, transform_indices = @transform_6, window_bounds = array<i64: 1, 128>}, {pipeline_mode = #tpu.pipeline_mode<synchronous>, transform_indices = @transform_7, window_bounds = array<i64: 1, 128>}, {pipeline_mode = #tpu.pipeline_mode<synchronous>, transform_indices = @transform_8, window_bounds = array<i64: 1, 128>}, {pipeline_mode = #tpu.pipeline_mode<synchronous>, transform_indices = @transform_9, window_bounds = array<i64: 128, 256>}, {pipeline_mode = #tpu.pipeline_mode<synchronous>, transform_indices = @transform_10, window_bounds = array<i64: 1, 256>}, {pipeline_mode = #tpu.pipeline_mode<synchronous>, transform_indices = @transform_11, window_bounds = array<i64: 256, 128>}, {pipeline_mode = #tpu.pipeline_mode<synchronous>, transform_indices = @transform_12, window_bounds = array<i64: 1, 128>}, {transform_indices = @transform_13, window_bounds = array<i64: 1, 24, 128>}]} {
    %c0 = arith.constant 0 : index
    %c0_0 = arith.constant 0 : index
    %c0_1 = arith.constant 0 : index
    %0 = vector.load %arg1[%c0, %c0_0, %c0_1] : memref<1x24x128xf32, #tpu.memory_space<vmem>>, vector<1x24x128xf32>
    %1 = vector.shape_cast %0 : vector<1x24x128xf32> to vector<24x128xf32>
    %c0_2 = arith.constant 0 : index
    %c0_3 = arith.constant 0 : index
    %2 = vector.load %arg2[%c0_2, %c0_3] : memref<1x128xf32, #tpu.memory_space<vmem>>, vector<1x128xf32>
    %c0_4 = arith.constant 0 : index
    %c0_5 = arith.constant 0 : index
    %3 = vector.load %arg3[%c0_4, %c0_5] : memref<1x128xf32, #tpu.memory_space<vmem>>, vector<1x128xf32>
    %cst = arith.constant dense<0.000000e+00> : vector<24xf32>
    %4 = vector.multi_reduction <add>, %1, %cst [1] : vector<24x128xf32> to vector<24xf32>
    %5 = vector.shape_cast %4 : vector<24xf32> to vector<24x1xf32>
    %cst_6 = arith.constant 1.280000e+02 : f32
    %6 = vector.broadcast %cst_6 : f32 to vector<24x1xf32>
    %7 = arith.divf %5, %6 : vector<24x1xf32>
    %8 = vector.broadcast %7 : vector<24x1xf32> to vector<24x128xf32>
    %9 = arith.subf %1, %8 : vector<24x128xf32>
    %10 = arith.mulf %9, %9 : vector<24x128xf32>
    %cst_7 = arith.constant dense<0.000000e+00> : vector<24xf32>
    %11 = vector.multi_reduction <add>, %10, %cst_7 [1] : vector<24x128xf32> to vector<24xf32>
    %12 = vector.shape_cast %11 : vector<24xf32> to vector<24x1xf32>
    %cst_8 = arith.constant 1.280000e+02 : f32
    %13 = vector.broadcast %cst_8 : f32 to vector<24x1xf32>
    %14 = arith.divf %12, %13 : vector<24x1xf32>
    %15 = vector.broadcast %7 : vector<24x1xf32> to vector<24x128xf32>
    %16 = arith.subf %1, %15 : vector<24x128xf32>
    %cst_9 = arith.constant 9.99999996E-13 : f32
    %17 = vector.broadcast %cst_9 : f32 to vector<24x1xf32>
    %18 = arith.addf %14, %17 : vector<24x1xf32>
    %19 = math.rsqrt %18 : vector<24x1xf32>
    %20 = vector.broadcast %19 : vector<24x1xf32> to vector<24x128xf32>
    %21 = arith.mulf %16, %20 : vector<24x128xf32>
    %22 = vector.broadcast %2 : vector<1x128xf32> to vector<24x128xf32>
    %23 = arith.mulf %21, %22 : vector<24x128xf32>
    %24 = vector.broadcast %3 : vector<1x128xf32> to vector<24x128xf32>
    %25 = arith.addf %23, %24 : vector<24x128xf32>
    %26 = arith.truncf %25 : vector<24x128xf32> to vector<24x128xbf16>
    %c0_10 = arith.constant 0 : index
    %c0_11 = arith.constant 0 : index
    %27 = vector.load %arg4[%c0_10, %c0_11] : memref<128x384xbf16, #tpu.memory_space<vmem>>, vector<128x384xbf16>
    %cst_12 = arith.constant dense<0.000000e+00> : vector<24x384xf32>
    %28 = tpu.matmul %26, %27, %cst_12 {dimension_numbers = #tpu.dot_dimension_numbers<[1], [0], [0], [1], [0, 0, 1, 1], [], []>} : vector<24x128xbf16>, vector<128x384xbf16>, vector<24x384xf32> -> vector<24x384xf32>
    %c0_13 = arith.constant 0 : index
    %c0_14 = arith.constant 0 : index
    %29 = vector.load %arg5[%c0_13, %c0_14] : memref<1x384xf32, #tpu.memory_space<vmem>>, vector<1x384xf32>
    %30 = vector.broadcast %29 : vector<1x384xf32> to vector<24x384xf32>
    %31 = arith.addf %28, %30 : vector<24x384xf32>
    %32 = tpu.iota {dimensions = array<i32: 1>} : vector<24x24xi32>
    %c17_i32 = arith.constant 17 : i32
    %33 = vector.broadcast %c17_i32 : i32 to vector<24x24xi32>
    %34 = arith.cmpi slt, %32, %33 : vector<24x24xi32>
    %35 = vector.extract_strided_slice %31 {offsets = [0, 0], sizes = [24, 32], strides = [1, 1]} : vector<24x384xf32> to vector<24x32xf32>
    %36 = vector.extract_strided_slice %31 {offsets = [0, 128], sizes = [24, 32], strides = [1, 1]} : vector<24x384xf32> to vector<24x32xf32>
    %37 = vector.extract_strided_slice %31 {offsets = [0, 256], sizes = [24, 32], strides = [1, 1]} : vector<24x384xf32> to vector<24x32xf32>
    %38 = arith.truncf %35 : vector<24x32xf32> to vector<24x32xbf16>
    %39 = arith.truncf %36 : vector<24x32xf32> to vector<24x32xbf16>
    %cst_15 = arith.constant dense<0.000000e+00> : vector<24x24xf32>
    %40 = tpu.matmul %38, %39, %cst_15 {dimension_numbers = #tpu.dot_dimension_numbers<[1], [1], [0], [0], [0, 0, 1, 0], [], []>} : vector<24x32xbf16>, vector<24x32xbf16>, vector<24x24xf32> -> vector<24x24xf32>
    %cst_16 = arith.constant 0.176776692 : f32
    %41 = vector.broadcast %cst_16 : f32 to vector<24x24xf32>
    %42 = arith.mulf %40, %41 : vector<24x24xf32>
    %cst_17 = arith.constant -1.000000e+30 : f32
    %43 = vector.broadcast %cst_17 : f32 to vector<24x24xf32>
    %44 = arith.select %34, %42, %43 : vector<24x24xi1>, vector<24x24xf32>
    %cst_18 = arith.constant dense<0xFF800000> : vector<24xf32>
    %45 = vector.multi_reduction <maximumf>, %44, %cst_18 [1] : vector<24x24xf32> to vector<24xf32>
    %46 = vector.shape_cast %45 : vector<24xf32> to vector<24x1xf32>
    %47 = vector.broadcast %46 : vector<24x1xf32> to vector<24x24xf32>
    %48 = arith.subf %44, %47 : vector<24x24xf32>
    %49 = math.exp %48 : vector<24x24xf32>
    %cst_19 = arith.constant dense<0.000000e+00> : vector<24xf32>
    %50 = vector.multi_reduction <add>, %49, %cst_19 [1] : vector<24x24xf32> to vector<24xf32>
    %51 = vector.shape_cast %50 : vector<24xf32> to vector<24x1xf32>
    %52 = tpu.reciprocal %51 {approx = true} : vector<24x1xf32> -> vector<24x1xf32>
    %53 = vector.broadcast %52 : vector<24x1xf32> to vector<24x24xf32>
    %54 = arith.mulf %49, %53 : vector<24x24xf32>
    %55 = arith.truncf %54 : vector<24x24xf32> to vector<24x24xbf16>
    %56 = arith.truncf %37 : vector<24x32xf32> to vector<24x32xbf16>
    %cst_20 = arith.constant dense<0.000000e+00> : vector<24x32xf32>
    %57 = tpu.matmul %55, %56, %cst_20 {dimension_numbers = #tpu.dot_dimension_numbers<[1], [0], [0], [1], [0, 0, 1, 1], [], []>} : vector<24x24xbf16>, vector<24x32xbf16>, vector<24x32xf32> -> vector<24x32xf32>
    %58 = vector.extract_strided_slice %31 {offsets = [0, 32], sizes = [24, 32], strides = [1, 1]} : vector<24x384xf32> to vector<24x32xf32>
    %59 = vector.extract_strided_slice %31 {offsets = [0, 160], sizes = [24, 32], strides = [1, 1]} : vector<24x384xf32> to vector<24x32xf32>
    %60 = vector.extract_strided_slice %31 {offsets = [0, 288], sizes = [24, 32], strides = [1, 1]} : vector<24x384xf32> to vector<24x32xf32>
    %61 = arith.truncf %58 : vector<24x32xf32> to vector<24x32xbf16>
    %62 = arith.truncf %59 : vector<24x32xf32> to vector<24x32xbf16>
    %cst_21 = arith.constant dense<0.000000e+00> : vector<24x24xf32>
    %63 = tpu.matmul %61, %62, %cst_21 {dimension_numbers = #tpu.dot_dimension_numbers<[1], [1], [0], [0], [0, 0, 1, 0], [], []>} : vector<24x32xbf16>, vector<24x32xbf16>, vector<24x24xf32> -> vector<24x24xf32>
    %cst_22 = arith.constant 0.176776692 : f32
    %64 = vector.broadcast %cst_22 : f32 to vector<24x24xf32>
    %65 = arith.mulf %63, %64 : vector<24x24xf32>
    %cst_23 = arith.constant -1.000000e+30 : f32
    %66 = vector.broadcast %cst_23 : f32 to vector<24x24xf32>
    %67 = arith.select %34, %65, %66 : vector<24x24xi1>, vector<24x24xf32>
    %cst_24 = arith.constant dense<0xFF800000> : vector<24xf32>
    %68 = vector.multi_reduction <maximumf>, %67, %cst_24 [1] : vector<24x24xf32> to vector<24xf32>
    %69 = vector.shape_cast %68 : vector<24xf32> to vector<24x1xf32>
    %70 = vector.broadcast %69 : vector<24x1xf32> to vector<24x24xf32>
    %71 = arith.subf %67, %70 : vector<24x24xf32>
    %72 = math.exp %71 : vector<24x24xf32>
    %cst_25 = arith.constant dense<0.000000e+00> : vector<24xf32>
    %73 = vector.multi_reduction <add>, %72, %cst_25 [1] : vector<24x24xf32> to vector<24xf32>
    %74 = vector.shape_cast %73 : vector<24xf32> to vector<24x1xf32>
    %75 = tpu.reciprocal %74 {approx = true} : vector<24x1xf32> -> vector<24x1xf32>
    %76 = vector.broadcast %75 : vector<24x1xf32> to vector<24x24xf32>
    %77 = arith.mulf %72, %76 : vector<24x24xf32>
    %78 = arith.truncf %77 : vector<24x24xf32> to vector<24x24xbf16>
    %79 = arith.truncf %60 : vector<24x32xf32> to vector<24x32xbf16>
    %cst_26 = arith.constant dense<0.000000e+00> : vector<24x32xf32>
    %80 = tpu.matmul %78, %79, %cst_26 {dimension_numbers = #tpu.dot_dimension_numbers<[1], [0], [0], [1], [0, 0, 1, 1], [], []>} : vector<24x24xbf16>, vector<24x32xbf16>, vector<24x32xf32> -> vector<24x32xf32>
    %81 = vector.extract_strided_slice %31 {offsets = [0, 64], sizes = [24, 32], strides = [1, 1]} : vector<24x384xf32> to vector<24x32xf32>
    %82 = vector.extract_strided_slice %31 {offsets = [0, 192], sizes = [24, 32], strides = [1, 1]} : vector<24x384xf32> to vector<24x32xf32>
    %83 = vector.extract_strided_slice %31 {offsets = [0, 320], sizes = [24, 32], strides = [1, 1]} : vector<24x384xf32> to vector<24x32xf32>
    %84 = arith.truncf %81 : vector<24x32xf32> to vector<24x32xbf16>
    %85 = arith.truncf %82 : vector<24x32xf32> to vector<24x32xbf16>
    %cst_27 = arith.constant dense<0.000000e+00> : vector<24x24xf32>
    %86 = tpu.matmul %84, %85, %cst_27 {dimension_numbers = #tpu.dot_dimension_numbers<[1], [1], [0], [0], [0, 0, 1, 0], [], []>} : vector<24x32xbf16>, vector<24x32xbf16>, vector<24x24xf32> -> vector<24x24xf32>
    %cst_28 = arith.constant 0.176776692 : f32
    %87 = vector.broadcast %cst_28 : f32 to vector<24x24xf32>
    %88 = arith.mulf %86, %87 : vector<24x24xf32>
    %cst_29 = arith.constant -1.000000e+30 : f32
    %89 = vector.broadcast %cst_29 : f32 to vector<24x24xf32>
    %90 = arith.select %34, %88, %89 : vector<24x24xi1>, vector<24x24xf32>
    %cst_30 = arith.constant dense<0xFF800000> : vector<24xf32>
    %91 = vector.multi_reduction <maximumf>, %90, %cst_30 [1] : vector<24x24xf32> to vector<24xf32>
    %92 = vector.shape_cast %91 : vector<24xf32> to vector<24x1xf32>
    %93 = vector.broadcast %92 : vector<24x1xf32> to vector<24x24xf32>
    %94 = arith.subf %90, %93 : vector<24x24xf32>
    %95 = math.exp %94 : vector<24x24xf32>
    %cst_31 = arith.constant dense<0.000000e+00> : vector<24xf32>
    %96 = vector.multi_reduction <add>, %95, %cst_31 [1] : vector<24x24xf32> to vector<24xf32>
    %97 = vector.shape_cast %96 : vector<24xf32> to vector<24x1xf32>
    %98 = tpu.reciprocal %97 {approx = true} : vector<24x1xf32> -> vector<24x1xf32>
    %99 = vector.broadcast %98 : vector<24x1xf32> to vector<24x24xf32>
    %100 = arith.mulf %95, %99 : vector<24x24xf32>
    %101 = arith.truncf %100 : vector<24x24xf32> to vector<24x24xbf16>
    %102 = arith.truncf %83 : vector<24x32xf32> to vector<24x32xbf16>
    %cst_32 = arith.constant dense<0.000000e+00> : vector<24x32xf32>
    %103 = tpu.matmul %101, %102, %cst_32 {dimension_numbers = #tpu.dot_dimension_numbers<[1], [0], [0], [1], [0, 0, 1, 1], [], []>} : vector<24x24xbf16>, vector<24x32xbf16>, vector<24x32xf32> -> vector<24x32xf32>
    %104 = vector.extract_strided_slice %31 {offsets = [0, 96], sizes = [24, 32], strides = [1, 1]} : vector<24x384xf32> to vector<24x32xf32>
    %105 = vector.extract_strided_slice %31 {offsets = [0, 224], sizes = [24, 32], strides = [1, 1]} : vector<24x384xf32> to vector<24x32xf32>
    %106 = vector.extract_strided_slice %31 {offsets = [0, 352], sizes = [24, 32], strides = [1, 1]} : vector<24x384xf32> to vector<24x32xf32>
    %107 = arith.truncf %104 : vector<24x32xf32> to vector<24x32xbf16>
    %108 = arith.truncf %105 : vector<24x32xf32> to vector<24x32xbf16>
    %cst_33 = arith.constant dense<0.000000e+00> : vector<24x24xf32>
    %109 = tpu.matmul %107, %108, %cst_33 {dimension_numbers = #tpu.dot_dimension_numbers<[1], [1], [0], [0], [0, 0, 1, 0], [], []>} : vector<24x32xbf16>, vector<24x32xbf16>, vector<24x24xf32> -> vector<24x24xf32>
    %cst_34 = arith.constant 0.176776692 : f32
    %110 = vector.broadcast %cst_34 : f32 to vector<24x24xf32>
    %111 = arith.mulf %109, %110 : vector<24x24xf32>
    %cst_35 = arith.constant -1.000000e+30 : f32
    %112 = vector.broadcast %cst_35 : f32 to vector<24x24xf32>
    %113 = arith.select %34, %111, %112 : vector<24x24xi1>, vector<24x24xf32>
    %cst_36 = arith.constant dense<0xFF800000> : vector<24xf32>
    %114 = vector.multi_reduction <maximumf>, %113, %cst_36 [1] : vector<24x24xf32> to vector<24xf32>
    %115 = vector.shape_cast %114 : vector<24xf32> to vector<24x1xf32>
    %116 = vector.broadcast %115 : vector<24x1xf32> to vector<24x24xf32>
    %117 = arith.subf %113, %116 : vector<24x24xf32>
    %118 = math.exp %117 : vector<24x24xf32>
    %cst_37 = arith.constant dense<0.000000e+00> : vector<24xf32>
    %119 = vector.multi_reduction <add>, %118, %cst_37 [1] : vector<24x24xf32> to vector<24xf32>
    %120 = vector.shape_cast %119 : vector<24xf32> to vector<24x1xf32>
    %121 = tpu.reciprocal %120 {approx = true} : vector<24x1xf32> -> vector<24x1xf32>
    %122 = vector.broadcast %121 : vector<24x1xf32> to vector<24x24xf32>
    %123 = arith.mulf %118, %122 : vector<24x24xf32>
    %124 = arith.truncf %123 : vector<24x24xf32> to vector<24x24xbf16>
    %125 = arith.truncf %106 : vector<24x32xf32> to vector<24x32xbf16>
    %cst_38 = arith.constant dense<0.000000e+00> : vector<24x32xf32>
    %126 = tpu.matmul %124, %125, %cst_38 {dimension_numbers = #tpu.dot_dimension_numbers<[1], [0], [0], [1], [0, 0, 1, 1], [], []>} : vector<24x24xbf16>, vector<24x32xbf16>, vector<24x32xf32> -> vector<24x32xf32>
    %127 = tpu.concatenate %57, %80, %103, %126 in 1 : vector<24x32xf32>, vector<24x32xf32>, vector<24x32xf32>, vector<24x32xf32> -> vector<24x128xf32>
    %128 = arith.truncf %127 : vector<24x128xf32> to vector<24x128xbf16>
    %c0_39 = arith.constant 0 : index
    %c0_40 = arith.constant 0 : index
    %129 = vector.load %arg6[%c0_39, %c0_40] : memref<128x128xbf16, #tpu.memory_space<vmem>>, vector<128x128xbf16>
    %cst_41 = arith.constant dense<0.000000e+00> : vector<24x128xf32>
    %130 = tpu.matmul %128, %129, %cst_41 {dimension_numbers = #tpu.dot_dimension_numbers<[1], [0], [0], [1], [0, 0, 1, 1], [], []>} : vector<24x128xbf16>, vector<128x128xbf16>, vector<24x128xf32> -> vector<24x128xf32>
    %131 = arith.addf %1, %130 : vector<24x128xf32>
    %c0_42 = arith.constant 0 : index
    %c0_43 = arith.constant 0 : index
    %132 = vector.load %arg7[%c0_42, %c0_43] : memref<1x128xf32, #tpu.memory_space<vmem>>, vector<1x128xf32>
    %133 = vector.broadcast %132 : vector<1x128xf32> to vector<24x128xf32>
    %134 = arith.addf %131, %133 : vector<24x128xf32>
    %c0_44 = arith.constant 0 : index
    %c0_45 = arith.constant 0 : index
    %135 = vector.load %arg8[%c0_44, %c0_45] : memref<1x128xf32, #tpu.memory_space<vmem>>, vector<1x128xf32>
    %c0_46 = arith.constant 0 : index
    %c0_47 = arith.constant 0 : index
    %136 = vector.load %arg9[%c0_46, %c0_47] : memref<1x128xf32, #tpu.memory_space<vmem>>, vector<1x128xf32>
    %cst_48 = arith.constant dense<0.000000e+00> : vector<24xf32>
    %137 = vector.multi_reduction <add>, %134, %cst_48 [1] : vector<24x128xf32> to vector<24xf32>
    %138 = vector.shape_cast %137 : vector<24xf32> to vector<24x1xf32>
    %cst_49 = arith.constant 1.280000e+02 : f32
    %139 = vector.broadcast %cst_49 : f32 to vector<24x1xf32>
    %140 = arith.divf %138, %139 : vector<24x1xf32>
    %141 = vector.broadcast %140 : vector<24x1xf32> to vector<24x128xf32>
    %142 = arith.subf %134, %141 : vector<24x128xf32>
    %143 = arith.mulf %142, %142 : vector<24x128xf32>
    %cst_50 = arith.constant dense<0.000000e+00> : vector<24xf32>
    %144 = vector.multi_reduction <add>, %143, %cst_50 [1] : vector<24x128xf32> to vector<24xf32>
    %145 = vector.shape_cast %144 : vector<24xf32> to vector<24x1xf32>
    %cst_51 = arith.constant 1.280000e+02 : f32
    %146 = vector.broadcast %cst_51 : f32 to vector<24x1xf32>
    %147 = arith.divf %145, %146 : vector<24x1xf32>
    %148 = vector.broadcast %140 : vector<24x1xf32> to vector<24x128xf32>
    %149 = arith.subf %134, %148 : vector<24x128xf32>
    %cst_52 = arith.constant 9.99999996E-13 : f32
    %150 = vector.broadcast %cst_52 : f32 to vector<24x1xf32>
    %151 = arith.addf %147, %150 : vector<24x1xf32>
    %152 = math.rsqrt %151 : vector<24x1xf32>
    %153 = vector.broadcast %152 : vector<24x1xf32> to vector<24x128xf32>
    %154 = arith.mulf %149, %153 : vector<24x128xf32>
    %155 = vector.broadcast %135 : vector<1x128xf32> to vector<24x128xf32>
    %156 = arith.mulf %154, %155 : vector<24x128xf32>
    %157 = vector.broadcast %136 : vector<1x128xf32> to vector<24x128xf32>
    %158 = arith.addf %156, %157 : vector<24x128xf32>
    %159 = arith.truncf %158 : vector<24x128xf32> to vector<24x128xbf16>
    %c0_53 = arith.constant 0 : index
    %c0_54 = arith.constant 0 : index
    %160 = vector.load %arg10[%c0_53, %c0_54] : memref<128x256xbf16, #tpu.memory_space<vmem>>, vector<128x256xbf16>
    %cst_55 = arith.constant dense<0.000000e+00> : vector<24x256xf32>
    %161 = tpu.matmul %159, %160, %cst_55 {dimension_numbers = #tpu.dot_dimension_numbers<[1], [0], [0], [1], [0, 0, 1, 1], [], []>} : vector<24x128xbf16>, vector<128x256xbf16>, vector<24x256xf32> -> vector<24x256xf32>
    %c0_56 = arith.constant 0 : index
    %c0_57 = arith.constant 0 : index
    %162 = vector.load %arg11[%c0_56, %c0_57] : memref<1x256xf32, #tpu.memory_space<vmem>>, vector<1x256xf32>
    %163 = vector.broadcast %162 : vector<1x256xf32> to vector<24x256xf32>
    %164 = arith.addf %161, %163 : vector<24x256xf32>
    %165 = arith.mulf %164, %164 : vector<24x256xf32>
    %166 = arith.mulf %164, %165 : vector<24x256xf32>
    %cst_58 = arith.constant 4.471500e-02 : f32
    %167 = vector.broadcast %cst_58 : f32 to vector<24x256xf32>
    %168 = arith.mulf %167, %166 : vector<24x256xf32>
    %169 = arith.addf %164, %168 : vector<24x256xf32>
    %cst_59 = arith.constant 0.797884583 : f32
    %170 = vector.broadcast %cst_59 : f32 to vector<24x256xf32>
    %171 = arith.mulf %170, %169 : vector<24x256xf32>
    %172 = math.tanh %171 : vector<24x256xf32>
    %cst_60 = arith.constant 1.000000e+00 : f32
    %173 = vector.broadcast %cst_60 : f32 to vector<24x256xf32>
    %174 = arith.addf %173, %172 : vector<24x256xf32>
    %cst_61 = arith.constant 5.000000e-01 : f32
    %175 = vector.broadcast %cst_61 : f32 to vector<24x256xf32>
    %176 = arith.mulf %175, %174 : vector<24x256xf32>
    %177 = arith.mulf %164, %176 : vector<24x256xf32>
    %178 = arith.truncf %177 : vector<24x256xf32> to vector<24x256xbf16>
    %c0_62 = arith.constant 0 : index
    %c0_63 = arith.constant 0 : index
    %179 = vector.load %arg12[%c0_62, %c0_63] : memref<256x128xbf16, #tpu.memory_space<vmem>>, vector<256x128xbf16>
    %cst_64 = arith.constant dense<0.000000e+00> : vector<24x128xf32>
    %180 = tpu.matmul %178, %179, %cst_64 {dimension_numbers = #tpu.dot_dimension_numbers<[1], [0], [0], [1], [0, 0, 1, 1], [], []>} : vector<24x256xbf16>, vector<256x128xbf16>, vector<24x128xf32> -> vector<24x128xf32>
    %181 = arith.addf %134, %180 : vector<24x128xf32>
    %c0_65 = arith.constant 0 : index
    %c0_66 = arith.constant 0 : index
    %182 = vector.load %arg13[%c0_65, %c0_66] : memref<1x128xf32, #tpu.memory_space<vmem>>, vector<1x128xf32>
    %183 = vector.broadcast %182 : vector<1x128xf32> to vector<24x128xf32>
    %184 = arith.addf %181, %183 : vector<24x128xf32>
    %c0_67 = arith.constant 0 : index
    %c0_68 = arith.constant 0 : index
    %c0_69 = arith.constant 0 : index
    %185 = vector.load %arg14[%c0_67, %c0_68, %c0_69] : memref<1x24x128xf32, #tpu.memory_space<vmem>>, vector<1x24x128xf32>
    %186 = vector.shape_cast %185 : vector<1x24x128xf32> to vector<24x128xf32>
    %187 = vector.shape_cast %184 : vector<24x128xf32> to vector<1x24x128xf32>
    tpu.vector_store %arg14[%c0_67, %c0_68, %c0_69], %187 {strides = array<i32>} : memref<1x24x128xf32, #tpu.memory_space<vmem>>, vector<1x24x128xf32>,
    return
  }
  func.func @transform_0(%arg0: i32) -> (i32, i32, i32) {
    %c0_i32 = arith.constant 0 : i32
    %c0_i32_0 = arith.constant 0 : i32
    %c0_i32_1 = arith.constant 0 : i32
    return %arg0, %c0_i32, %c0_i32_0 : i32, i32, i32
  }
  func.func @transform_1(%arg0: i32) -> (i32, i32) {
    %c0_i32 = arith.constant 0 : i32
    %c0_i32_0 = arith.constant 0 : i32
    %c0_i32_1 = arith.constant 0 : i32
    return %c0_i32, %c0_i32_0 : i32, i32
  }
  func.func @transform_2(%arg0: i32) -> (i32, i32) {
    %c0_i32 = arith.constant 0 : i32
    %c0_i32_0 = arith.constant 0 : i32
    %c0_i32_1 = arith.constant 0 : i32
    return %c0_i32, %c0_i32_0 : i32, i32
  }
  func.func @transform_3(%arg0: i32) -> (i32, i32) {
    %c0_i32 = arith.constant 0 : i32
    %c0_i32_0 = arith.constant 0 : i32
    %c0_i32_1 = arith.constant 0 : i32
    return %c0_i32, %c0_i32_0 : i32, i32
  }
  func.func @transform_4(%arg0: i32) -> (i32, i32) {
    %c0_i32 = arith.constant 0 : i32
    %c0_i32_0 = arith.constant 0 : i32
    %c0_i32_1 = arith.constant 0 : i32
    return %c0_i32, %c0_i32_0 : i32, i32
  }
  func.func @transform_5(%arg0: i32) -> (i32, i32) {
    %c0_i32 = arith.constant 0 : i32
    %c0_i32_0 = arith.constant 0 : i32
    %c0_i32_1 = arith.constant 0 : i32
    return %c0_i32, %c0_i32_0 : i32, i32
  }
  func.func @transform_6(%arg0: i32) -> (i32, i32) {
    %c0_i32 = arith.constant 0 : i32
    %c0_i32_0 = arith.constant 0 : i32
    %c0_i32_1 = arith.constant 0 : i32
    return %c0_i32, %c0_i32_0 : i32, i32
  }
  func.func @transform_7(%arg0: i32) -> (i32, i32) {
    %c0_i32 = arith.constant 0 : i32
    %c0_i32_0 = arith.constant 0 : i32
    %c0_i32_1 = arith.constant 0 : i32
    return %c0_i32, %c0_i32_0 : i32, i32
  }
  func.func @transform_8(%arg0: i32) -> (i32, i32) {
    %c0_i32 = arith.constant 0 : i32
    %c0_i32_0 = arith.constant 0 : i32
    %c0_i32_1 = arith.constant 0 : i32
    return %c0_i32, %c0_i32_0 : i32, i32
  }
  func.func @transform_9(%arg0: i32) -> (i32, i32) {
    %c0_i32 = arith.constant 0 : i32
    %c0_i32_0 = arith.constant 0 : i32
    %c0_i32_1 = arith.constant 0 : i32
    return %c0_i32, %c0_i32_0 : i32, i32
  }
  func.func @transform_10(%arg0: i32) -> (i32, i32) {
    %c0_i32 = arith.constant 0 : i32
    %c0_i32_0 = arith.constant 0 : i32
    %c0_i32_1 = arith.constant 0 : i32
    return %c0_i32, %c0_i32_0 : i32, i32
  }
  func.func @transform_11(%arg0: i32) -> (i32, i32) {
    %c0_i32 = arith.constant 0 : i32
    %c0_i32_0 = arith.constant 0 : i32
    %c0_i32_1 = arith.constant 0 : i32
    return %c0_i32, %c0_i32_0 : i32, i32
  }
  func.func @transform_12(%arg0: i32) -> (i32, i32) {
    %c0_i32 = arith.constant 0 : i32
    %c0_i32_0 = arith.constant 0 : i32
    %c0_i32_1 = arith.constant 0 : i32
    return %c0_i32, %c0_i32_0 : i32, i32
  }
  func.func @transform_13(%arg0: i32) -> (i32, i32, i32) {
    %c0_i32 = arith.constant 0 : i32
    %c0_i32_0 = arith.constant 0 : i32
    %c0_i32_1 = arith.constant 0 : i32
    return %arg0, %c0_i32, %c0_i32_0 : i32, i32, i32
  }
}

</mosaic_0001>

<llo_original>
// kernel: image_encoder_forward.4
$region0: #{image_encoder_forward.4}
  #allocation0 [shape = 'u32[]', space=smem, size = 0x4, offset = 0x4, fixed_abs, tag = 'smem constant byte address 0x4 - core index']
  #allocation1 [shape = 'u32[144,128]{1,0:T(1,128)}', space=vmem, size = 0x12000, scoped, tag = 'internal scratch']
  %s0 = inlined_call_operand.vmem [shape: f32[2,16,192], index: 0, kind: input, shape index: {}]
  %s1 = inlined_call_operand.vmem [shape: bf16[192,128], index: 1, kind: input, shape index: {}]
  %s2 = inlined_call_operand.vmem [shape: f32[1,128], index: 2, kind: input, shape index: {}]
  %s3 = inlined_call_operand.vmem [shape: f32[1,128], index: 3, kind: input, shape index: {}]
  %s4 = inlined_call_operand.vmem [shape: f32[17,128], index: 4, kind: input, shape index: {}]
  %s5 = inlined_call_operand.vmem [shape: f32[2,24,128], index: 5, kind: output, shape index: {}]
  %s6 = sld [smem:[#allocation0]]
  $region53: #{image_encoder_forward.4} parent=0
    _
  %s8 = ssub.s32 1, %s6
  %s9 = scalar_select 0, %s8, %s6
  loop: start=0, step=1, limit=4
  $region2: #{image_encoder_forward.4} parent=0 // loop_pre_header
    _
  $region3: #{image_encoder_forward.4} parent=0 // loop_header
    %s11 = sphi 0, %s15
    %p12 = scmp.ge.s32.totalorder %s11, 4
    %s21 = sphi 0, %s23
    %s24 = sphi 0, %s21
    %s25 = sphi 0, %s24
    %s41 = sphi 0, %s25
    %s45 = sphi 0, %s45
    %s47 = sphi 0, %s45
    %s48 = sphi 0, %s47
    %s62 = sphi 0, %s48
    %s66 = sphi 0, %s66
    %s68 = sphi 0, %s66
    %s69 = sphi 0, %s68
    %s83 = sphi 0, %s69
    %s87 = sphi 0, %s87
    %s89 = sphi 0, %s87
    %s90 = sphi 0, %s89
    %s104 = sphi 0, %s90
    %s108 = sphi 0, %s108
    %s110 = sphi 0, %s108
    %s111 = sphi 0, %s110
    %s125 = sphi 0, %s111
    %s131 = sphi 0, %s133
    %s134 = sphi 0, %s131
    %s135 = sphi 0, %s134
    %s151 = sphi 0, %s135
  $region4: #{image_encoder_forward.4} parent=0 // loop_header_branch
    %14 = sbr.rel (%p12) target = $region8
  $region5: #{image_encoder_forward.4} parent=0 // loop_body
    %s16 = ssub.s32 %s11, 1
    %s17 = ssub.s32 %s11, 2
    %s18 = sadd.s32 %s11, 1
    %s19 = ssub.s32 %s11, %s18
    %p20 = scmp.eq.s32.totalorder %s19, 0
    %s22 = sadd.s32 %s21, 1
    %s23 = scalar_select %p20, %s21, %s22
    %p26 = pneg %p20
    %p27 = scmp.eq.s32.totalorder %s11, 1
    %p28 = por %p26, %p27
    %p29 = scmp.ne.s32.totalorder %s21, %s24
    %p30 = scmp.eq.s32.totalorder %s11, 0
    %p31 = por %p29, %p30
    %p32 = scmp.ne.s32.totalorder %s21, %s24
    %p33 = scmp.eq.s32.totalorder %s16, 1
    %p34 = por %p32, %p33
    %p35 = scmp.ne.s32.totalorder %s24, %s25
    %p36 = scmp.eq.s32.totalorder %s16, 0
    %p37 = por %p35, %p36
    %p38 = scmp.ne.s32.totalorder %s24, %s25
    %p39 = scmp.eq.s32.totalorder %s17, 1
    %p40 = por %p38, %p39
    %p42 = scmp.ne.s32.totalorder %s25, %s41
    %p43 = scmp.eq.s32.totalorder %s17, 0
    %p44 = por %p42, %p43
    %s46 = sadd.s32 %s45, 1
    %p49 = scmp.eq.s32.totalorder %s11, 1
    %p50 = scmp.ne.s32.totalorder %s45, %s47
    %p51 = scmp.eq.s32.totalorder %s11, 0
    %p52 = por %p50, %p51
    %p53 = scmp.ne.s32.totalorder %s45, %s47
    %p54 = scmp.eq.s32.totalorder %s16, 1
    %p55 = por %p53, %p54
    %p56 = scmp.ne.s32.totalorder %s47, %s48
    %p57 = scmp.eq.s32.totalorder %s16, 0
    %p58 = por %p56, %p57
    %p59 = scmp.ne.s32.totalorder %s47, %s48
    %p60 = scmp.eq.s32.totalorder %s17, 1
    %p61 = por %p59, %p60
    %p63 = scmp.ne.s32.totalorder %s48, %s62
    %p64 = scmp.eq.s32.totalorder %s17, 0
    %p65 = por %p63, %p64
    %s67 = sadd.s32 %s66, 1
    %p70 = scmp.eq.s32.totalorder %s11, 1
    %p71 = scmp.ne.s32.totalorder %s66, %s68
    %p72 = scmp.eq.s32.totalorder %s11, 0
    %p73 = por %p71, %p72
    %p74 = scmp.ne.s32.totalorder %s66, %s68
    %p75 = scmp.eq.s32.totalorder %s16, 1
    %p76 = por %p74, %p75
    %p77 = scmp.ne.s32.totalorder %s68, %s69
    %p78 = scmp.eq.s32.totalorder %s16, 0
    %p79 = por %p77, %p78
    %p80 = scmp.ne.s32.totalorder %s68, %s69
    %p81 = scmp.eq.s32.totalorder %s17, 1
    %p82 = por %p80, %p81
    %p84 = scmp.ne.s32.totalorder %s69, %s83
    %p85 = scmp.eq.s32.totalorder %s17, 0
    %p86 = por %p84, %p85
    %s88 = sadd.s32 %s87, 1
    %p91 = scmp.eq.s32.totalorder %s11, 1
    %p92 = scmp.ne.s32.totalorder %s87, %s89
    %p93 = scmp.eq.s32.totalorder %s11, 0
    %p94 = por %p92, %p93
    %p95 = scmp.ne.s32.totalorder %s87, %s89
    %p96 = scmp.eq.s32.totalorder %s16, 1
    %p97 = por %p95, %p96
    %p98 = scmp.ne.s32.totalorder %s89, %s90
    %p99 = scmp.eq.s32.totalorder %s16, 0
    %p100 = por %p98, %p99
    %p101 = scmp.ne.s32.totalorder %s89, %s90
    %p102 = scmp.eq.s32.totalorder %s17, 1
    %p103 = por %p101, %p102
    %p105 = scmp.ne.s32.totalorder %s90, %s104
    %p106 = scmp.eq.s32.totalorder %s17, 0
    %p107 = por %p105, %p106
    %s109 = sadd.s32 %s108, 1
    %p112 = scmp.eq.s32.totalorder %s11, 1
    %p113 = scmp.ne.s32.totalorder %s108, %s110
    %p114 = scmp.eq.s32.totalorder %s11, 0
    %p115 = por %p113, %p114
    %p116 = scmp.ne.s32.totalorder %s108, %s110
    %p117 = scmp.eq.s32.totalorder %s16, 1
    %p118 = por %p116, %p117
    %p119 = scmp.ne.s32.totalorder %s110, %s111
    %p120 = scmp.eq.s32.totalorder %s16, 0
    %p121 = por %p119, %p120
    %p122 = scmp.ne.s32.totalorder %s110, %s111
    %p123 = scmp.eq.s32.totalorder %s17, 1
    %p124 = por %p122, %p123
    %p126 = scmp.ne.s32.totalorder %s111, %s125
    %p127 = scmp.eq.s32.totalorder %s17, 0
    %p128 = por %p126, %p127
    %s129 = ssub.s32 %s11, %s18
    %p130 = scmp.eq.s32.totalorder %s129, 0
    %s132 = sadd.s32 %s131, 1
    %s133 = scalar_select %p130, %s131, %s132
    %p136 = pneg %p130
    %p137 = scmp.eq.s32.totalorder %s11, 1
    %p138 = por %p136, %p137
    %p139 = scmp.ne.s32.totalorder %s131, %s134
    %p140 = scmp.eq.s32.totalorder %s11, 0
    %p141 = por %p139, %p140
    %p142 = scmp.ne.s32.totalorder %s131, %s134
    %p143 = scmp.eq.s32.totalorder %s16, 1
    %p144 = por %p142, %p143
    %p145 = scmp.ne.s32.totalorder %s134, %s135
    %p146 = scmp.eq.s32.totalorder %s16, 0
    %p147 = por %p145, %p146
    %p148 = scmp.ne.s32.totalorder %s134, %s135
    %p149 = scmp.eq.s32.totalorder %s17, 1
    %p150 = por %p148, %p149
    %p152 = scmp.ne.s32.totalorder %s135, %s151
    %p153 = scmp.eq.s32.totalorder %s17, 0
    %p154 = por %p152, %p153
    %p155 = scmp.le.s32.totalorder 1, %s11
    %p156 = scmp.lt.s32.totalorder %s11, 3
    %p157 = pnand %p155, %p156
    %p158 = pneg %p157
    // Predicated region
    $region9: #{image_encoder_forward.4} parent=5 // pred_check
      _
    $region10: #{image_encoder_forward.4} parent=5 // pred_check_branch
      %160 = sbr.rel (%p157) target = $region12
    $region11: #{image_encoder_forward.4} parent=5 // pred_region
      %s161 = ssub.s32 %s11, 1
      // Predicated region
      $region13: #{image_encoder_forward.4} parent=11 // pred_check
        %p162 = pneg %p58
      $region14: #{image_encoder_forward.4} parent=11 // pred_check_branch
        %164 = sbr.rel (%p162) target = $region16
      $region15: #{image_encoder_forward.4} parent=11 // pred_region
        _
      $region16: #{image_encoder_forward.4} parent=11 // pred_fallthru
        _
      // Predicated region
      $region17: #{image_encoder_forward.4} parent=11 // pred_check
        %p165 = pneg %p79
      $region18: #{image_encoder_forward.4} parent=11 // pred_check_branch
        %167 = sbr.rel (%p165) target = $region20
      $region19: #{image_encoder_forward.4} parent=11 // pred_region
        _
      $region20: #{image_encoder_forward.4} parent=11 // pred_fallthru
        _
      // Predicated region
      $region21: #{image_encoder_forward.4} parent=11 // pred_check
        %p168 = pneg %p100
      $region22: #{image_encoder_forward.4} parent=11 // pred_check_branch
        %170 = sbr.rel (%p168) target = $region24
      $region23: #{image_encoder_forward.4} parent=11 // pred_region
        _
      $region24: #{image_encoder_forward.4} parent=11 // pred_fallthru
        _
      // Predicated region
      $region25: #{image_encoder_forward.4} parent=11 // pred_check
        %p171 = pneg %p121
      $region26: #{image_encoder_forward.4} parent=11 // pred_check_branch
        %173 = sbr.rel (%p171) target = $region28
      $region27: #{image_encoder_forward.4} parent=11 // pred_region
        _
      $region28: #{image_encoder_forward.4} parent=11 // pred_fallthru
        _
    $region12: #{image_encoder_forward.4} parent=5 // pred_fallthru
      _
    %p174 = scmp.lt.s32.totalorder %s11, 2
    // Predicated region
    $region29: #{image_encoder_forward.4} parent=5 // pred_check
      %p175 = pneg %p174
    $region30: #{image_encoder_forward.4} parent=5 // pred_check_branch
      %177 = sbr.rel (%p175) target = $region32
    $region31: #{image_encoder_forward.4} parent=5 // pred_region
      // Predicated region
      $region33: #{image_encoder_forward.4} parent=31 // pred_check
        %p178 = pneg %p31
      $region34: #{image_encoder_forward.4} parent=31 // pred_check_branch
        %180 = sbr.rel (%p178) target = $region36
      $region35: #{image_encoder_forward.4} parent=31 // pred_region
        %p181 = scmp.lt.s32.totalorder %s11, 1
        %s182 = scalar_select %p181, %s11, 1
        %s183 = smul.addr %s182, 4
        %s184 = smul.addr %s183, 8
        %s185 = scalar_lea.vmem %s0, %s184
      $region36: #{image_encoder_forward.4} parent=31 // pred_fallthru
        _
    $region32: #{image_encoder_forward.4} parent=5 // pred_fallthru
      _
    %p186 = scmp.le.s32.totalorder 1, %s11
    %p187 = scmp.lt.s32.totalorder %s11, 3
    %p188 = pnand %p186, %p187
    %p189 = pneg %p188
    // Predicated region
    $region37: #{image_encoder_forward.4} parent=5 // pred_check
      _
    $region38: #{image_encoder_forward.4} parent=5 // pred_check_branch
      %191 = sbr.rel (%p188) target = $region40
    $region39: #{image_encoder_forward.4} parent=5 // pred_region
      %s192 = ssub.s32 %s11, 1
      %p193 = scmp.lt.s32.totalorder %s16, 1
      %s194 = scalar_select %p193, %s16, 1
      %s195 = smul.addr %s194, 4
      %s196 = smul.addr %s195, 8
      %s197 = scalar_lea.vmem %s0, %s196
      %p198 = pneg %p37
      %p199 = pneg %p34
      %p200 = pneg %p58
      %p201 = pneg %p55
      %p202 = pneg %p79
      %p203 = pneg %p76
      %p204 = pneg %p100
      %p205 = pneg %p97
      %p206 = pneg %p121
      %p207 = pneg %p118
      %p208 = pneg %p147
      %p209 = pneg %p144
      %p210 = scmp.lt.s32.totalorder %s16, 1
      %s211 = scalar_select %p210, %s16, 1
      %s212 = smul.addr %s211, 3
      %s213 = smul.addr %s212, 8
      %s214 = scalar_lea.vmem %s5, %s213
      %p215 = scmp.lt.s32.totalorder %s16, 1
      %s216 = scalar_select %p215, %s16, 1
      %s217 = smul.addr %s216, 4
      %s218 = smul.addr %s217, 8
      %s219 = scalar_lea.vmem %s0, %s218
      %p220 = scmp.lt.s32.totalorder %s16, 1
      %s221 = scalar_select %p220, %s16, 1
      %s222 = smul.addr %s221, 3
      %s223 = smul.addr %s222, 8
      %s224 = scalar_lea.vmem %s5, %s223
      %v226 = vld [vmem:[%s219] sm:$0xff]
      %v227 = vld [vmem:[%s219 + $0x8] sm:$0xff]
      %v228 = vld [vmem:[%s219 + $0x10] sm:$0xff]
      %v229 = vld [vmem:[%s219 + $0x18] sm:$0xff]
      %v230 = vpack.c.bf16 %v228, %v226
      %v231 = vpack.c.bf16 %v229, %v227
      %v232 = vld [vmem:[%s1] sm:$0xf]
      %v233 = vld [vmem:[%s1 + $0x4] sm:$0xf]
      %v234 = vld [vmem:[%s1 + $0x8] sm:$0xf]
      %v235 = vld [vmem:[%s1 + $0xc] sm:$0xf]
      %v236 = vld [vmem:[%s1 + $0x10] sm:$0xf]
      %v237 = vld [vmem:[%s1 + $0x14] sm:$0xf]
      %v238 = vld [vmem:[%s1 + $0x18] sm:$0xf]
      %v239 = vld [vmem:[%s1 + $0x1c] sm:$0xf]
      %v240 = vld [vmem:[%s1 + $0x20] sm:$0xf]
      %v241 = vld [vmem:[%s1 + $0x24] sm:$0xf]
      %v242 = vld [vmem:[%s1 + $0x28] sm:$0xf]
      %v243 = vld [vmem:[%s1 + $0x2c] sm:$0xf]
      %v244 = vld [vmem:[%s1 + $0x30] sm:$0xf]
      %v245 = vld [vmem:[%s1 + $0x34] sm:$0xf]
      %v246 = vld [vmem:[%s1 + $0x38] sm:$0xf]
      %v247 = vld [vmem:[%s1 + $0x3c] sm:$0xf]
      %v248 = vld [vmem:[%s1 + $0x40] sm:$0xf]
      %v249 = vld [vmem:[%s1 + $0x44] sm:$0xf]
      %v250 = vld [vmem:[%s1 + $0x48] sm:$0xf]
      %v251 = vld [vmem:[%s1 + $0x4c] sm:$0xf]
      %v252 = vld [vmem:[%s1 + $0x50] sm:$0xf]
      %v253 = vld [vmem:[%s1 + $0x54] sm:$0xf]
      %v254 = vld [vmem:[%s1 + $0x58] sm:$0xf]
      %v255 = vld [vmem:[%s1 + $0x5c] sm:$0xf]
      %v256 = vld [vmem:[%s4] sm:$0xff]
      %v257 = vld [vmem:[%s4 + $0x8] sm:$0xff]
      %v258 = vld [vmem:[%s4 + $0x10] sm:$0x1]
      %v259 = vld [vmem:[%s2] sm:$0x1]
      %v261 = vlaneseq
      %v262 = vshrl.u32 %v261, 7
      %v263 = vsub.s32 0, %v262
      %v264 = vrot.slane %v259, %v263
      %v290 = vunpack.c.l.b16 %v232
      %v291 = vunpack.c.l.b16 %v233
      %v292 = vunpack.c.l.b16 %v234
      %v293 = vunpack.c.l.b16 %v235
      %v294 = vunpack.c.l.b16 %v236
      %v295 = vunpack.c.l.b16 %v237
      %v296 = vunpack.c.l.b16 %v238
      %v297 = vunpack.c.l.b16 %v239
      %v298 = vunpack.c.l.b16 %v240
      %v299 = vunpack.c.l.b16 %v241
      %v300 = vunpack.c.l.b16 %v242
      %v301 = vunpack.c.l.b16 %v243
      %v302 = vunpack.c.l.b16 %v244
      %v303 = vunpack.c.l.b16 %v245
      %v304 = vunpack.c.l.b16 %v246
      %v305 = vunpack.c.l.b16 %v247
      %v306 = vunpack.c.l.b16 %v248
      %v307 = vunpack.c.l.b16 %v249
      %v308 = vunpack.c.l.b16 %v250
      %v309 = vunpack.c.l.b16 %v251
      %v310 = vunpack.c.l.b16 %v252
      %v311 = vunpack.c.l.b16 %v253
      %v312 = vunpack.c.l.b16 %v254
      %v313 = vunpack.c.l.b16 %v255
      %v314 = vpack.c.b16 %v291, %v290
      %v315 = vpack.c.b16 %v293, %v292
      %v316 = vpack.c.b16 %v295, %v294
      %v317 = vpack.c.b16 %v297, %v296
      %v318 = vpack.c.b16 %v299, %v298
      %v319 = vpack.c.b16 %v301, %v300
      %v320 = vpack.c.b16 %v303, %v302
      %v321 = vpack.c.b16 %v305, %v304
      %v322 = vpack.c.b16 %v307, %v306
      %v323 = vpack.c.b16 %v309, %v308
      %v324 = vpack.c.b16 %v311, %v310
      %v325 = vpack.c.b16 %v313, %v312
      %vm338 = vcmask 523264
      %v340 = vsel %vm338, %v231, 0
      %342 = vmatprep.subr.bf16.mxu0 0
      %343 = vmatpush1.bf16.msra.mxu0 %v314
      %344 = vmatprep.subr.bf16.mxu0 0
      %345 = vmatpush1.bf16.msra.mxu0 %v315
      %346 = vmatprep.subr.bf16.mxu0 0
      %347 = vmatpush1.bf16.msra.mxu0 %v316
      %348 = vmatprep.subr.bf16.mxu0 0
      %349 = vmatpush1.bf16.msra.mxu0 %v317
      %350 = vmatprep.subr.bf16.mxu0 0
      %351 = vmatpush1.bf16.msra.mxu0 %v318
      %352 = vmatprep.subr.bf16.mxu0 0
      %353 = vmatpush1.bf16.msra.mxu0 %v319
      %354 = vmatprep.subr.bf16.mxu0 0
      %355 = vmatpush1.bf16.msra.mxu0 %v320
      %356 = vmatprep.subr.bf16.mxu0 0
      %357 = vmatpush1.bf16.msra.mxu0 %v321
      %358 = vmatprep.subr.bf16.mxu0 0
      %359 = vmatpush1.bf16.msra.mxu0 %v322
      %360 = vmatprep.subr.bf16.mxu0 0
      %361 = vmatpush1.bf16.msra.mxu0 %v323
      %362 = vmatprep.subr.bf16.mxu0 0
      %363 = vmatpush1.bf16.msra.mxu0 %v324
      %364 = vmatprep.subr.bf16.mxu0 0
      %365 = vmatpush1.bf16.msra.mxu0 %v325
      %366 = vmatprep.subr.bf16.mxu0 0
      %367 = vmatpush1.bf16.msra.mxu0 0
      %368 = vmatprep.subr.bf16.mxu0 0
      %369 = vmatpush1.bf16.msra.mxu0 0
      %370 = vmatprep.subr.bf16.mxu0 0
      %371 = vmatpush1.bf16.msra.mxu0 0
      %372 = vmatprep.subr.bf16.mxu0 0
      %373 = vmatpush1.bf16.msra.mxu0 0
      %374 = vmatprep.mubr.bf16.mxu0 %v340
      %375 = vmatmul.mubr.bf16.gmra.mrb[0].mxu0 %v230
      %v376 = vpop.f32.mrb[0].mxu0
      %v377 = vadd.f32 %v264, %v376
      %v378 = vpop.f32.mrb[0].mxu0
      %v379 = vpop.f32.mrb[0].mxu0
      %v380 = vadd.f32 %v264, %v379
      %v381 = vpop.f32.mrb[0].mxu0
      %382 = vdwg.mxu0
      %vm386 = vcmask 1046528
      %v387 = vrot.slane %v256, 1
      %v388 = vrot.slane %v257, 1
      %v389 = vsel %vm386, %v387, %v388
      %v390 = vrot.slane %v258, 1
      %v391 = vsel %vm386, %v388, %v390
      %v394 = vadd.f32 %v377, %v389
      %v395 = vadd.f32 %v380, %v391
      %v396 = vld [vmem:[%s3] sm:$0x1]
      %v397 = vadd.f32 %v396, %v256
      %vm400 = vcmask 1040384
      %v401 = vrot.slane %v394, 7
      %v402 = vrot.slane %v395, 7
      %v403 = vsel %vm400, %v401, %v402
      %v407 = vsel %vm400, %v397, %v401
      %v408 = vsel %vm400, %v402, 0.0
      %409 = vst [vmem:[%s224] sm:$0xff] %v407
      %410 = vst [vmem:[%s224 + $0x8] sm:$0xff] %v403
      %411 = vst [vmem:[%s224 + $0x10] sm:$0xff] %v408
      %p412 = scmp.lt.s32.totalorder %s16, 1
      %s413 = scalar_select %p412, %s16, 1
      %s414 = smul.addr %s413, 3
      %s415 = smul.addr %s414, 8
      %s416 = scalar_lea.vmem %s5, %s415
      // Predicated region
      $region41: #{image_encoder_forward.4} parent=39 // pred_check
        %p417 = pneg %p144
      $region42: #{image_encoder_forward.4} parent=39 // pred_check_branch
        %419 = sbr.rel (%p417) target = $region44
      $region43: #{image_encoder_forward.4} parent=39 // pred_region
        _
      $region44: #{image_encoder_forward.4} parent=39 // pred_fallthru
        _
    $region40: #{image_encoder_forward.4} parent=5 // pred_fallthru
      _
    %p420 = scmp.le.s32.totalorder 2, %s11
    // Predicated region
    $region45: #{image_encoder_forward.4} parent=5 // pred_check
      %p421 = pneg %p420
    $region46: #{image_encoder_forward.4} parent=5 // pred_check_branch
      %423 = sbr.rel (%p421) target = $region48
    $region47: #{image_encoder_forward.4} parent=5 // pred_region
      %s424 = ssub.s32 %s11, 2
      // Predicated region
      $region49: #{image_encoder_forward.4} parent=47 // pred_check
        %p425 = pneg %p150
      $region50: #{image_encoder_forward.4} parent=47 // pred_check_branch
        %427 = sbr.rel (%p425) target = $region52
      $region51: #{image_encoder_forward.4} parent=47 // pred_region
        %p428 = scmp.lt.s32.totalorder %s17, 1
        %s429 = scalar_select %p428, %s17, 1
        %s430 = smul.addr %s429, 3
        %s431 = smul.addr %s430, 8
        %s432 = scalar_lea.vmem %s5, %s431
      $region52: #{image_encoder_forward.4} parent=47 // pred_fallthru
        _
    $region48: #{image_encoder_forward.4} parent=5 // pred_fallthru
      _
  $region6: #{image_encoder_forward.4} parent=0 // loop_footer
    %s15 = sadd.s32 1, %s11
  $region7: #{image_encoder_forward.4} parent=0 // loop_footer_branch
    %10 = sbr.rel target = $region3
  $region8: #{image_encoder_forward.4} parent=0 // loop_exit
    _

// kernel: image_encoder_forward.7
$region0: #{image_encoder_forward.7}
  #allocation0 [shape = 'u32[]', space=smem, size = 0x4, offset = 0x4, fixed_abs, tag = 'smem constant byte address 0x4 - core index']
  #allocation1 [shape = 'u32[144,128]{1,0:T(1,128)}', space=vmem, size = 0x12000, scoped, tag = 'internal scratch']
  %s0 = inlined_call_operand.vmem [shape: f32[2,24,128], index: 0, kind: input, shape index: {}]
  %s1 = inlined_call_operand.vmem [shape: f32[1,128], index: 1, kind: input, shape index: {}]
  %s2 = inlined_call_operand.vmem [shape: f32[1,128], index: 2, kind: input, shape index: {}]
  %s3 = inlined_call_operand.vmem [shape: bf16[128,128], index: 3, kind: input, shape index: {}]
  %s4 = inlined_call_operand.vmem [shape: f32[1,128], index: 4, kind: input, shape index: {}]
  %s5 = inlined_call_operand.vmem [shape: bf16[128,256], index: 5, kind: input, shape index: {}]
  %s6 = inlined_call_operand.vmem [shape: f32[1,256], index: 6, kind: input, shape index: {}]
  %s7 = inlined_call_operand.hbm [shape: f32[2,256], index: 7, kind: output, shape index: {}]
  %s8 = sld [smem:[#allocation0]]
  $region38: #{image_encoder_forward.7} parent=0
    _
  %s10 = ssub.s32 1, %s8
  %s11 = scalar_select 0, %s10, %s8
  $region1: #{image_encoder_forward.7} parent=0
    #allocation2 [shape = 'u8[2048]{0}', space=vmem, size = 0x800, scoped, tag = 'output window, operand 0, single buffered']
    #allocation3 [shape = 's32[1]{0}', space=sflag, size = 0x4, scoped, tag = 'scoped memory for image_encoder_forward.7']
    %12 = vsyncpa [#allocation3], 0
    // Predicated region
    $region2: #{image_encoder_forward.7} parent=1 // pred_check
      _
    $region3: #{image_encoder_forward.7} parent=1 // pred_check_branch
      %14 = sbr.rel (0) target = $region5
    $region4: #{image_encoder_forward.7} parent=1 // pred_region
      _
    $region5: #{image_encoder_forward.7} parent=1 // pred_fallthru
      _
    // Predicated region
    $region6: #{image_encoder_forward.7} parent=1 // pred_check
      _
    $region7: #{image_encoder_forward.7} parent=1 // pred_check_branch
      %16 = sbr.rel (0) target = $region9
    $region8: #{image_encoder_forward.7} parent=1 // pred_region
      _
    $region9: #{image_encoder_forward.7} parent=1 // pred_fallthru
      _
    // Predicated region
    $region10: #{image_encoder_forward.7} parent=1 // pred_check
      _
    $region11: #{image_encoder_forward.7} parent=1 // pred_check_branch
      %18 = sbr.rel (0) target = $region13
    $region12: #{image_encoder_forward.7} parent=1 // pred_region
      _
    $region13: #{image_encoder_forward.7} parent=1 // pred_fallthru
      _
    // Predicated region
    $region14: #{image_encoder_forward.7} parent=1 // pred_check
      _
    $region15: #{image_encoder_forward.7} parent=1 // pred_check_branch
      %20 = sbr.rel (0) target = $region17
    $region16: #{image_encoder_forward.7} parent=1 // pred_region
      _
    $region17: #{image_encoder_forward.7} parent=1 // pred_fallthru
      _
    // Predicated region
    $region18: #{image_encoder_forward.7} parent=1 // pred_check
      _
    $region19: #{image_encoder_forward.7} parent=1 // pred_check_branch
      %22 = sbr.rel (0) target = $region21
    $region20: #{image_encoder_forward.7} parent=1 // pred_region
      _
    $region21: #{image_encoder_forward.7} parent=1 // pred_fallthru
      _
    // Predicated region
    $region22: #{image_encoder_forward.7} parent=1 // pred_check
      _
    $region23: #{image_encoder_forward.7} parent=1 // pred_check_branch
      %24 = sbr.rel (0) target = $region25
    $region24: #{image_encoder_forward.7} parent=1 // pred_region
      _
    $region25: #{image_encoder_forward.7} parent=1 // pred_fallthru
      _
    // Predicated region
    $region26: #{image_encoder_forward.7} parent=1 // pred_check
      _
    $region27: #{image_encoder_forward.7} parent=1 // pred_check_branch
      %26 = sbr.rel (0) target = $region29
    $region28: #{image_encoder_forward.7} parent=1 // pred_region
      _
    $region29: #{image_encoder_forward.7} parent=1 // pred_fallthru
      _
    %v28 = vld [vmem:[%s0] sm:$0xff]
    %v29 = vld [vmem:[%s0 + $0x18] sm:$0xff]
    %v30 = vld [vmem:[%s1] sm:$0x1]
    %v31 = vld [vmem:[%s2] sm:$0x1]
    %v34 = vrot.slane %v29, 7
    %vm35 = vcmask 1041409
    %v36 = vsel %vm35, %v34, %v28
    %vm38 = vcmask 1041408
    %v39 = vsel %vm38, %v36, 0.0
    %40 = vadd.xlane.f32.xlu0 %v39
    %v41 = vpop.xlane.xlu0 %40
    %v42 = vrcp.pop 128.0
    %v43 = vmul.f32 %v41, %v42
    %v45 = vrot.slane %v43, 1
    %v48 = vsub.f32 %v28, %v43
    %v49 = vsub.f32 %v29, %v45
    %v50 = vmul.f32 %v48, %v48
    %v51 = vmul.f32 %v49, %v49
    %v54 = vrot.slane %v51, 7
    %v55 = vsel %vm35, %v54, %v50
    %v57 = vsel %vm38, %v55, 0.0
    %58 = vadd.xlane.f32.xlu0 %v57
    %v59 = vpop.xlane.xlu0 %58
    %v60 = vmul.f32 %v59, %v42
    %v61 = vadd.f32 %v60, 1e-12
    %v62 = vrsqrt.pop %v61
    %v64 = vrot.slane %v62, 1
    %v67 = vmul.f32 %v48, %v62
    %v68 = vmul.f32 %v49, %v64
    %v70 = vlaneseq
    %v71 = vshrl.u32 %v70, 7
    %v72 = vsub.s32 0, %v71
    %v73 = vrot.slane %v30, %v72
    %v75 = vmul.f32 %v67, %v73
    %v76 = vmul.f32 %v68, %v73
    %v78 = vlaneseq
    %v79 = vshrl.u32 %v78, 7
    %v80 = vsub.s32 0, %v79
    %v81 = vrot.slane %v31, %v80
    %v83 = vadd.f32 %v75, %v81
    %v84 = vadd.f32 %v76, %v81
    %v85 = vpack.c.bf16 %v83, %v83
    %v86 = vpack.c.bf16 %v84, %v84
    %v87 = vld [vmem:[%s3] sm:$0xf]
    %v88 = vld [vmem:[%s3 + $0x4] sm:$0xf]
    %v89 = vld [vmem:[%s3 + $0x8] sm:$0xf]
    %v90 = vld [vmem:[%s3 + $0xc] sm:$0xf]
    %v91 = vld [vmem:[%s3 + $0x10] sm:$0xf]
    %v92 = vld [vmem:[%s3 + $0x14] sm:$0xf]
    %v93 = vld [vmem:[%s3 + $0x18] sm:$0xf]
    %v94 = vld [vmem:[%s3 + $0x1c] sm:$0xf]
    %v95 = vld [vmem:[%s3 + $0x20] sm:$0xf]
    %v96 = vld [vmem:[%s3 + $0x24] sm:$0xf]
    %v97 = vld [vmem:[%s3 + $0x28] sm:$0xf]
    %v98 = vld [vmem:[%s3 + $0x2c] sm:$0xf]
    %v99 = vld [vmem:[%s3 + $0x30] sm:$0xf]
    %v100 = vld [vmem:[%s3 + $0x34] sm:$0xf]
    %v101 = vld [vmem:[%s3 + $0x38] sm:$0xf]
    %v102 = vld [vmem:[%s3 + $0x3c] sm:$0xf]
    %v103 = vld [vmem:[%s4] sm:$0x1]
    %v105 = vlaneseq
    %v106 = vshrl.u32 %v105, 7
    %v107 = vsub.s32 0, %v106
    %v108 = vrot.slane %v103, %v107
    %v112 = vunpack.c.l.b16 %v85
    %v113 = vunpack.c.l.b16 %v86
    %v114 = vrot.slane %v113, 7
    %v115 = vsel %vm35, %v114, %v112
    %v116 = vpack.c.b16 %v115, %v115
    %v134 = vunpack.c.l.b16 %v87
    %v135 = vunpack.c.l.b16 %v88
    %v136 = vunpack.c.l.b16 %v89
    %v137 = vunpack.c.l.b16 %v90
    %v138 = vunpack.c.l.b16 %v91
    %v139 = vunpack.c.l.b16 %v92
    %v140 = vunpack.c.l.b16 %v93
    %v141 = vunpack.c.l.b16 %v94
    %v142 = vunpack.c.l.b16 %v95
    %v143 = vunpack.c.l.b16 %v96
    %v144 = vunpack.c.l.b16 %v97
    %v145 = vunpack.c.l.b16 %v98
    %v146 = vunpack.c.l.b16 %v99
    %v147 = vunpack.c.l.b16 %v100
    %v148 = vunpack.c.l.b16 %v101
    %v149 = vunpack.c.l.b16 %v102
    %v150 = vpack.c.b16 %v135, %v134
    %v151 = vpack.c.b16 %v137, %v136
    %v152 = vpack.c.b16 %v139, %v138
    %v153 = vpack.c.b16 %v141, %v140
    %v154 = vpack.c.b16 %v143, %v142
    %v155 = vpack.c.b16 %v145, %v144
    %v156 = vpack.c.b16 %v147, %v146
    %v157 = vpack.c.b16 %v149, %v148
    %166 = vmatprep.subr.bf16.mxu0 0
    %167 = vmatpush1.bf16.msra.mxu0 %v150
    %168 = vmatprep.subr.bf16.mxu0 0
    %169 = vmatpush1.bf16.msra.mxu0 %v151
    %170 = vmatprep.subr.bf16.mxu0 0
    %171 = vmatpush1.bf16.msra.mxu0 %v152
    %172 = vmatprep.subr.bf16.mxu0 0
    %173 = vmatpush1.bf16.msra.mxu0 %v153
    %174 = vmatprep.subr.bf16.mxu0 0
    %175 = vmatpush1.bf16.msra.mxu0 %v154
    %176 = vmatprep.subr.bf16.mxu0 0
    %177 = vmatpush1.bf16.msra.mxu0 %v155
    %178 = vmatprep.subr.bf16.mxu0 0
    %179 = vmatpush1.bf16.msra.mxu0 %v156
    %180 = vmatprep.subr.bf16.mxu0 0
    %181 = vmatpush1.bf16.msra.mxu0 %v157
    %182 = vmatprep.subr.bf16.mxu0 0
    %183 = vmatpush1.bf16.msra.mxu0 0
    %184 = vmatprep.subr.bf16.mxu0 0
    %185 = vmatpush1.bf16.msra.mxu0 0
    %186 = vmatprep.subr.bf16.mxu0 0
    %187 = vmatpush1.bf16.msra.mxu0 0
    %188 = vmatprep.subr.bf16.mxu0 0
    %189 = vmatpush1.bf16.msra.mxu0 0
    %190 = vmatprep.subr.bf16.mxu0 0
    %191 = vmatpush1.bf16.msra.mxu0 0
    %192 = vmatprep.subr.bf16.mxu0 0
    %193 = vmatpush1.bf16.msra.mxu0 0
    %194 = vmatprep.subr.bf16.mxu0 0
    %195 = vmatpush1.bf16.msra.mxu0 0
    %196 = vmatprep.subr.bf16.mxu0 0
    %197 = vmatpush1.bf16.msra.mxu0 0
    %198 = vmatprep.mubr.bf16.mxu0 0
    %199 = vmatmul.mubr.bf16.gmra.mrb[0].mxu0 %v116
    %v200 = vpop.f32.mrb[0].mxu0
    %v201 = vadd.f32 %v108, %v200
    %v202 = vpop.f32.mrb[0].mxu0
    %v203 = vpop.f32.mrb[0].mxu0
    %v204 = vpop.f32.mrb[0].mxu0
    %205 = vdwg.mxu0
    %v206 = vtanh.pop %v201
    %v207 = vpack.c.bf16 %v206, %v206
    %v208 = vld [vmem:[%s5] sm:$0xff]
    %v209 = vld [vmem:[%s5 + $0x8] sm:$0xff]
    %v210 = vld [vmem:[%s5 + $0x10] sm:$0xff]
    %v211 = vld [vmem:[%s5 + $0x18] sm:$0xff]
    %v212 = vld [vmem:[%s5 + $0x20] sm:$0xff]
    %v213 = vld [vmem:[%s5 + $0x28] sm:$0xff]
    %v214 = vld [vmem:[%s5 + $0x30] sm:$0xff]
    %v215 = vld [vmem:[%s5 + $0x38] sm:$0xff]
    %v216 = vld [vmem:[%s5 + $0x40] sm:$0xff]
    %v217 = vld [vmem:[%s5 + $0x48] sm:$0xff]
    %v218 = vld [vmem:[%s5 + $0x50] sm:$0xff]
    %v219 = vld [vmem:[%s5 + $0x58] sm:$0xff]
    %v220 = vld [vmem:[%s5 + $0x60] sm:$0xff]
    %v221 = vld [vmem:[%s5 + $0x68] sm:$0xff]
    %v222 = vld [vmem:[%s5 + $0x70] sm:$0xff]
    %v223 = vld [vmem:[%s5 + $0x78] sm:$0xff]
    %v224 = vld [vmem:[%s6] sm:$0x3]
    %v226 = vlaneseq
    %v227 = vshrl.u32 %v226, 7
    %v228 = vsub.s32 0, %v227
    %v229 = vrot.slane %v224, %v228
    %v230 = vlaneseq
    %v231 = vshrl.u32 %v230, 7
    %v232 = vsub.s32 1, %v231
    %v233 = vrot.slane %v224, %v232
    %v252 = vunpack.c.l.b16 %v208
    %v253 = vunpack.c.h.b16 %v208
    %v254 = vunpack.c.l.b16 %v209
    %v255 = vunpack.c.h.b16 %v209
    %v256 = vunpack.c.l.b16 %v210
    %v257 = vunpack.c.h.b16 %v210
    %v258 = vunpack.c.l.b16 %v211
    %v259 = vunpack.c.h.b16 %v211
    %v260 = vunpack.c.l.b16 %v212
    %v261 = vunpack.c.h.b16 %v212
    %v262 = vunpack.c.l.b16 %v213
    %v263 = vunpack.c.h.b16 %v213
    %v264 = vunpack.c.l.b16 %v214
    %v265 = vunpack.c.h.b16 %v214
    %v266 = vunpack.c.l.b16 %v215
    %v267 = vunpack.c.h.b16 %v215
    %v268 = vunpack.c.l.b16 %v216
    %v269 = vunpack.c.h.b16 %v216
    %v270 = vunpack.c.l.b16 %v217
    %v271 = vunpack.c.h.b16 %v217
    %v272 = vunpack.c.l.b16 %v218
    %v273 = vunpack.c.h.b16 %v218
    %v274 = vunpack.c.l.b16 %v219
    %v275 = vunpack.c.h.b16 %v219
    %v276 = vunpack.c.l.b16 %v220
    %v277 = vunpack.c.h.b16 %v220
    %v278 = vunpack.c.l.b16 %v221
    %v279 = vunpack.c.h.b16 %v221
    %v280 = vunpack.c.l.b16 %v222
    %v281 = vunpack.c.h.b16 %v222
    %v282 = vunpack.c.l.b16 %v223
    %v283 = vunpack.c.h.b16 %v223
    %v284 = vpack.c.b16 %v254, %v252
    %v285 = vpack.c.b16 %v255, %v253
    %v286 = vpack.c.b16 %v258, %v256
    %v287 = vpack.c.b16 %v259, %v257
    %v288 = vpack.c.b16 %v262, %v260
    %v289 = vpack.c.b16 %v263, %v261
    %v290 = vpack.c.b16 %v266, %v264
    %v291 = vpack.c.b16 %v267, %v265
    %v292 = vpack.c.b16 %v270, %v268
    %v293 = vpack.c.b16 %v271, %v269
    %v294 = vpack.c.b16 %v274, %v272
    %v295 = vpack.c.b16 %v275, %v273
    %v296 = vpack.c.b16 %v278, %v276
    %v297 = vpack.c.b16 %v279, %v277
    %v298 = vpack.c.b16 %v282, %v280
    %v299 = vpack.c.b16 %v283, %v281
    %316 = vmatprep.subr.bf16.mxu0 %v285
    %317 = vmatpush1.bf16.msra.mxu0 %v284
    %318 = vmatprep.subr.bf16.mxu0 %v287
    %319 = vmatpush1.bf16.msra.mxu0 %v286
    %320 = vmatprep.subr.bf16.mxu0 %v289
    %321 = vmatpush1.bf16.msra.mxu0 %v288
    %322 = vmatprep.subr.bf16.mxu0 %v291
    %323 = vmatpush1.bf16.msra.mxu0 %v290
    %324 = vmatprep.subr.bf16.mxu0 %v293
    %325 = vmatpush1.bf16.msra.mxu0 %v292
    %326 = vmatprep.subr.bf16.mxu0 %v295
    %327 = vmatpush1.bf16.msra.mxu0 %v294
    %328 = vmatprep.subr.bf16.mxu0 %v297
    %329 = vmatpush1.bf16.msra.mxu0 %v296
    %330 = vmatprep.subr.bf16.mxu0 %v299
    %331 = vmatpush1.bf16.msra.mxu0 %v298
    %332 = vmatprep.subr.bf16.mxu0 0
    %333 = vmatpush1.bf16.msra.mxu0 0
    %334 = vmatprep.subr.bf16.mxu0 0
    %335 = vmatpush1.bf16.msra.mxu0 0
    %336 = vmatprep.subr.bf16.mxu0 0
    %337 = vmatpush1.bf16.msra.mxu0 0
    %338 = vmatprep.subr.bf16.mxu0 0
    %339 = vmatpush1.bf16.msra.mxu0 0
    %340 = vmatprep.subr.bf16.mxu0 0
    %341 = vmatpush1.bf16.msra.mxu0 0
    %342 = vmatprep.subr.bf16.mxu0 0
    %343 = vmatpush1.bf16.msra.mxu0 0
    %344 = vmatprep.subr.bf16.mxu0 0
    %345 = vmatpush1.bf16.msra.mxu0 0
    %346 = vmatprep.subr.bf16.mxu0 0
    %347 = vmatpush1.bf16.msra.mxu0 0
    %348 = vmatprep.mubr.bf16.mxu0 0
    %349 = vmatmul.mubr.bf16.gmra.mrb[0].mxu0 %v207
    %v350 = vpop.f32.mrb[0].mxu0
    %v351 = vadd.f32 %v229, %v350
    %v352 = vpop.f32.mrb[0].mxu0
    %v353 = vadd.f32 %v233, %v352
    %v354 = vpop.f32.mrb[0].mxu0
    %v355 = vpop.f32.mrb[0].mxu0
    %356 = vdwg.mxu0
    %v359 = vcombine.low %v351, %v353
    %v361 = vunpack.c.l.s4 1983009808
    %v362 = vunpack.c.0.s8 %v361
    %v363 = vlaneseq
    %v364 = vshrl.u32 %v363, 7
    %v365 = vsub.s32 %v362, %v364
    %v366 = vrot.slane %v359, %v365
    %368 = vst [vmem:[#allocation2] sm:$0xf] %v366
    // Predicated region
    $region30: #{image_encoder_forward.7} parent=1 // pred_check
      _
    $region31: #{image_encoder_forward.7} parent=1 // pred_check_branch
      %370 = sbr.rel (0) target = $region33
    $region32: #{image_encoder_forward.7} parent=1 // pred_region
      %s372 = ssub.s32 64, 64
      %373 = vsyncadd [#allocation3], %s372
      %s375 = sshll.u32 [#allocation2], 4
      %s376 = int_to_ptr.vmem [resolvable:$true] %s375
      %378 = dma.vmem_to_hbm [thread:$0]  %s376, 64, %s7, [#allocation3]
    $region33: #{image_encoder_forward.7} parent=1 // pred_fallthru
      _
    // Predicated region
    $region34: #{image_encoder_forward.7} parent=1 // pred_check
      _
    $region35: #{image_encoder_forward.7} parent=1 // pred_check_branch
      %380 = sbr.rel (0) target = $region37
    $region36: #{image_encoder_forward.7} parent=1 // pred_region
      %381 = dma.done [#allocation3], 64
    $region37: #{image_encoder_forward.7} parent=1 // pred_fallthru
      _
    %382 = vsyncpa [#allocation3], 1

// kernel: image_encoder_forward.5
$region0: #{image_encoder_forward.5}
  #allocation0 [shape = 'u32[]', space=smem, size = 0x4, offset = 0x4, fixed_abs, tag = 'smem constant byte address 0x4 - core index']
  #allocation1 [shape = 'u32[144,128]{1,0:T(1,128)}', space=vmem, size = 0x12000, scoped, tag = 'internal scratch']
  %s0 = inlined_call_operand.vmem [shape: f32[2,24,128], index: 0, kind: input, shape index: {}]
  %s1 = inlined_call_operand.vmem [shape: f32[1,128], index: 1, kind: input, shape index: {}]
  %s2 = inlined_call_operand.vmem [shape: f32[1,128], index: 2, kind: input, shape index: {}]
  %s3 = inlined_call_operand.vmem [shape: bf16[128,384], index: 3, kind: input, shape index: {}]
  %s4 = inlined_call_operand.vmem [shape: f32[1,384], index: 4, kind: input, shape index: {}]
  %s5 = inlined_call_operand.vmem [shape: bf16[128,128], index: 5, kind: input, shape index: {}]
  %s6 = inlined_call_operand.vmem [shape: f32[1,128], index: 6, kind: input, shape index: {}]
  %s7 = inlined_call_operand.vmem [shape: f32[1,128], index: 7, kind: input, shape index: {}]
  %s8 = inlined_call_operand.vmem [shape: f32[1,128], index: 8, kind: input, shape index: {}]
  %s9 = inlined_call_operand.vmem [shape: bf16[128,256], index: 9, kind: input, shape index: {}]
  %s10 = inlined_call_operand.vmem [shape: f32[1,256], index: 10, kind: input, shape index: {}]
  %s11 = inlined_call_operand.vmem [shape: bf16[256,128], index: 11, kind: input, shape index: {}]
  %s12 = inlined_call_operand.vmem [shape: f32[1,128], index: 12, kind: input, shape index: {}]
  %s13 = inlined_call_operand.vmem [shape: f32[2,24,128], index: 13, kind: output, shape index: {}]
  %s14 = sld [smem:[#allocation0]]
  $region85: #{image_encoder_forward.5} parent=0
    _
  %s16 = ssub.s32 1, %s14
  %s17 = scalar_select 0, %s16, %s14
  loop: start=0, step=1, limit=4
  $region2: #{image_encoder_forward.5} parent=0 // loop_pre_header
    _
  $region3: #{image_encoder_forward.5} parent=0 // loop_header
    %s19 = sphi 0, %s23
    %p20 = scmp.ge.s32.totalorder %s19, 4
    %s29 = sphi 0, %s31
    %s32 = sphi 0, %s29
    %s33 = sphi 0, %s32
    %s49 = sphi 0, %s33
    %s53 = sphi 0, %s53
    %s55 = sphi 0, %s53
    %s56 = sphi 0, %s55
    %s70 = sphi 0, %s56
    %s74 = sphi 0, %s74
    %s76 = sphi 0, %s74
    %s77 = sphi 0, %s76
    %s91 = sphi 0, %s77
    %s95 = sphi 0, %s95
    %s97 = sphi 0, %s95
    %s98 = sphi 0, %s97
    %s112 = sphi 0, %s98
    %s116 = sphi 0, %s116
    %s118 = sphi 0, %s116
    %s119 = sphi 0, %s118
    %s133 = sphi 0, %s119
    %s137 = sphi 0, %s137
    %s139 = sphi 0, %s137
    %s140 = sphi 0, %s139
    %s154 = sphi 0, %s140
    %s158 = sphi 0, %s158
    %s160 = sphi 0, %s158
    %s161 = sphi 0, %s160
    %s175 = sphi 0, %s161
    %s179 = sphi 0, %s179
    %s181 = sphi 0, %s179
    %s182 = sphi 0, %s181
    %s196 = sphi 0, %s182
    %s200 = sphi 0, %s200
    %s202 = sphi 0, %s200
    %s203 = sphi 0, %s202
    %s217 = sphi 0, %s203
    %s221 = sphi 0, %s221
    %s223 = sphi 0, %s221
    %s224 = sphi 0, %s223
    %s238 = sphi 0, %s224
    %s242 = sphi 0, %s242
    %s244 = sphi 0, %s242
    %s245 = sphi 0, %s244
    %s259 = sphi 0, %s245
    %s263 = sphi 0, %s263
    %s265 = sphi 0, %s263
    %s266 = sphi 0, %s265
    %s280 = sphi 0, %s266
    %s284 = sphi 0, %s284
    %s286 = sphi 0, %s284
    %s287 = sphi 0, %s286
    %s301 = sphi 0, %s287
    %s307 = sphi 0, %s309
    %s310 = sphi 0, %s307
    %s311 = sphi 0, %s310
    %s327 = sphi 0, %s311
  $region4: #{image_encoder_forward.5} parent=0 // loop_header_branch
    %22 = sbr.rel (%p20) target = $region8
  $region5: #{image_encoder_forward.5} parent=0 // loop_body
    %s24 = ssub.s32 %s19, 1
    %s25 = ssub.s32 %s19, 2
    %s26 = sadd.s32 %s19, 1
    %s27 = ssub.s32 %s19, %s26
    %p28 = scmp.eq.s32.totalorder %s27, 0
    %s30 = sadd.s32 %s29, 1
    %s31 = scalar_select %p28, %s29, %s30
    %p34 = pneg %p28
    %p35 = scmp.eq.s32.totalorder %s19, 1
    %p36 = por %p34, %p35
    %p37 = scmp.ne.s32.totalorder %s29, %s32
    %p38 = scmp.eq.s32.totalorder %s19, 0
    %p39 = por %p37, %p38
    %p40 = scmp.ne.s32.totalorder %s29, %s32
    %p41 = scmp.eq.s32.totalorder %s24, 1
    %p42 = por %p40, %p41
    %p43 = scmp.ne.s32.totalorder %s32, %s33
    %p44 = scmp.eq.s32.totalorder %s24, 0
    %p45 = por %p43, %p44
    %p46 = scmp.ne.s32.totalorder %s32, %s33
    %p47 = scmp.eq.s32.totalorder %s25, 1
    %p48 = por %p46, %p47
    %p50 = scmp.ne.s32.totalorder %s33, %s49
    %p51 = scmp.eq.s32.totalorder %s25, 0
    %p52 = por %p50, %p51
    %s54 = sadd.s32 %s53, 1
    %p57 = scmp.eq.s32.totalorder %s19, 1
    %p58 = scmp.ne.s32.totalorder %s53, %s55
    %p59 = scmp.eq.s32.totalorder %s19, 0
    %p60 = por %p58, %p59
    %p61 = scmp.ne.s32.totalorder %s53, %s55
    %p62 = scmp.eq.s32.totalorder %s24, 1
    %p63 = por %p61, %p62
    %p64 = scmp.ne.s32.totalorder %s55, %s56
    %p65 = scmp.eq.s32.totalorder %s24, 0
    %p66 = por %p64, %p65
    %p67 = scmp.ne.s32.totalorder %s55, %s56
    %p68 = scmp.eq.s32.totalorder %s25, 1
    %p69 = por %p67, %p68
    %p71 = scmp.ne.s32.totalorder %s56, %s70
    %p72 = scmp.eq.s32.totalorder %s25, 0
    %p73 = por %p71, %p72
    %s75 = sadd.s32 %s74, 1
    %p78 = scmp.eq.s32.totalorder %s19, 1
    %p79 = scmp.ne.s32.totalorder %s74, %s76
    %p80 = scmp.eq.s32.totalorder %s19, 0
    %p81 = por %p79, %p80
    %p82 = scmp.ne.s32.totalorder %s74, %s76
    %p83 = scmp.eq.s32.totalorder %s24, 1
    %p84 = por %p82, %p83
    %p85 = scmp.ne.s32.totalorder %s76, %s77
    %p86 = scmp.eq.s32.totalorder %s24, 0
    %p87 = por %p85, %p86
    %p88 = scmp.ne.s32.totalorder %s76, %s77
    %p89 = scmp.eq.s32.totalorder %s25, 1
    %p90 = por %p88, %p89
    %p92 = scmp.ne.s32.totalorder %s77, %s91
    %p93 = scmp.eq.s32.totalorder %s25, 0
    %p94 = por %p92, %p93
    %s96 = sadd.s32 %s95, 1
    %p99 = scmp.eq.s32.totalorder %s19, 1
    %p100 = scmp.ne.s32.totalorder %s95, %s97
    %p101 = scmp.eq.s32.totalorder %s19, 0
    %p102 = por %p100, %p101
    %p103 = scmp.ne.s32.totalorder %s95, %s97
    %p104 = scmp.eq.s32.totalorder %s24, 1
    %p105 = por %p103, %p104
    %p106 = scmp.ne.s32.totalorder %s97, %s98
    %p107 = scmp.eq.s32.totalorder %s24, 0
    %p108 = por %p106, %p107
    %p109 = scmp.ne.s32.totalorder %s97, %s98
    %p110 = scmp.eq.s32.totalorder %s25, 1
    %p111 = por %p109, %p110
    %p113 = scmp.ne.s32.totalorder %s98, %s112
    %p114 = scmp.eq.s32.totalorder %s25, 0
    %p115 = por %p113, %p114
    %s117 = sadd.s32 %s116, 1
    %p120 = scmp.eq.s32.totalorder %s19, 1
    %p121 = scmp.ne.s32.totalorder %s116, %s118
    %p122 = scmp.eq.s32.totalorder %s19, 0
    %p123 = por %p121, %p122
    %p124 = scmp.ne.s32.totalorder %s116, %s118
    %p125 = scmp.eq.s32.totalorder %s24, 1
    %p126 = por %p124, %p125
    %p127 = scmp.ne.s32.totalorder %s118, %s119
    %p128 = scmp.eq.s32.totalorder %s24, 0
    %p129 = por %p127, %p128
    %p130 = scmp.ne.s32.totalorder %s118, %s119
    %p131 = scmp.eq.s32.totalorder %s25, 1
    %p132 = por %p130, %p131
    %p134 = scmp.ne.s32.totalorder %s119, %s133
    %p135 = scmp.eq.s32.totalorder %s25, 0
    %p136 = por %p134, %p135
    %s138 = sadd.s32 %s137, 1
    %p141 = scmp.eq.s32.totalorder %s19, 1
    %p142 = scmp.ne.s32.totalorder %s137, %s139
    %p143 = scmp.eq.s32.totalorder %s19, 0
    %p144 = por %p142, %p143
    %p145 = scmp.ne.s32.totalorder %s137, %s139
    %p146 = scmp.eq.s32.totalorder %s24, 1
    %p147 = por %p145, %p146
    %p148 = scmp.ne.s32.totalorder %s139, %s140
    %p149 = scmp.eq.s32.totalorder %s24, 0
    %p150 = por %p148, %p149
    %p151 = scmp.ne.s32.totalorder %s139, %s140
    %p152 = scmp.eq.s32.totalorder %s25, 1
    %p153 = por %p151, %p152
    %p155 = scmp.ne.s32.totalorder %s140, %s154
    %p156 = scmp.eq.s32.totalorder %s25, 0
    %p157 = por %p155, %p156
    %s159 = sadd.s32 %s158, 1
    %p162 = scmp.eq.s32.totalorder %s19, 1
    %p163 = scmp.ne.s32.totalorder %s158, %s160
    %p164 = scmp.eq.s32.totalorder %s19, 0
    %p165 = por %p163, %p164
    %p166 = scmp.ne.s32.totalorder %s158, %s160
    %p167 = scmp.eq.s32.totalorder %s24, 1
    %p168 = por %p166, %p167
    %p169 = scmp.ne.s32.totalorder %s160, %s161
    %p170 = scmp.eq.s32.totalorder %s24, 0
    %p171 = por %p169, %p170
    %p172 = scmp.ne.s32.totalorder %s160, %s161
    %p173 = scmp.eq.s32.totalorder %s25, 1
    %p174 = por %p172, %p173
    %p176 = scmp.ne.s32.totalorder %s161, %s175
    %p177 = scmp.eq.s32.totalorder %s25, 0
    %p178 = por %p176, %p177
    %s180 = sadd.s32 %s179, 1
    %p183 = scmp.eq.s32.totalorder %s19, 1
    %p184 = scmp.ne.s32.totalorder %s179, %s181
    %p185 = scmp.eq.s32.totalorder %s19, 0
    %p186 = por %p184, %p185
    %p187 = scmp.ne.s32.totalorder %s179, %s181
    %p188 = scmp.eq.s32.totalorder %s24, 1
    %p189 = por %p187, %p188
    %p190 = scmp.ne.s32.totalorder %s181, %s182
    %p191 = scmp.eq.s32.totalorder %s24, 0
    %p192 = por %p190, %p191
    %p193 = scmp.ne.s32.totalorder %s181, %s182
    %p194 = scmp.eq.s32.totalorder %s25, 1
    %p195 = por %p193, %p194
    %p197 = scmp.ne.s32.totalorder %s182, %s196
    %p198 = scmp.eq.s32.totalorder %s25, 0
    %p199 = por %p197, %p198
    %s201 = sadd.s32 %s200, 1
    %p204 = scmp.eq.s32.totalorder %s19, 1
    %p205 = scmp.ne.s32.totalorder %s200, %s202
    %p206 = scmp.eq.s32.totalorder %s19, 0
    %p207 = por %p205, %p206
    %p208 = scmp.ne.s32.totalorder %s200, %s202
    %p209 = scmp.eq.s32.totalorder %s24, 1
    %p210 = por %p208, %p209
    %p211 = scmp.ne.s32.totalorder %s202, %s203
    %p212 = scmp.eq.s32.totalorder %s24, 0
    %p213 = por %p211, %p212
    %p214 = scmp.ne.s32.totalorder %s202, %s203
    %p215 = scmp.eq.s32.totalorder %s25, 1
    %p216 = por %p214, %p215
    %p218 = scmp.ne.s32.totalorder %s203, %s217
    %p219 = scmp.eq.s32.totalorder %s25, 0
    %p220 = por %p218, %p219
    %s222 = sadd.s32 %s221, 1
    %p225 = scmp.eq.s32.totalorder %s19, 1
    %p226 = scmp.ne.s32.totalorder %s221, %s223
    %p227 = scmp.eq.s32.totalorder %s19, 0
    %p228 = por %p226, %p227
    %p229 = scmp.ne.s32.totalorder %s221, %s223
    %p230 = scmp.eq.s32.totalorder %s24, 1
    %p231 = por %p229, %p230
    %p232 = scmp.ne.s32.totalorder %s223, %s224
    %p233 = scmp.eq.s32.totalorder %s24, 0
    %p234 = por %p232, %p233
    %p235 = scmp.ne.s32.totalorder %s223, %s224
    %p236 = scmp.eq.s32.totalorder %s25, 1
    %p237 = por %p235, %p236
    %p239 = scmp.ne.s32.totalorder %s224, %s238
    %p240 = scmp.eq.s32.totalorder %s25, 0
    %p241 = por %p239, %p240
    %s243 = sadd.s32 %s242, 1
    %p246 = scmp.eq.s32.totalorder %s19, 1
    %p247 = scmp.ne.s32.totalorder %s242, %s244
    %p248 = scmp.eq.s32.totalorder %s19, 0
    %p249 = por %p247, %p248
    %p250 = scmp.ne.s32.totalorder %s242, %s244
    %p251 = scmp.eq.s32.totalorder %s24, 1
    %p252 = por %p250, %p251
    %p253 = scmp.ne.s32.totalorder %s244, %s245
    %p254 = scmp.eq.s32.totalorder %s24, 0
    %p255 = por %p253, %p254
    %p256 = scmp.ne.s32.totalorder %s244, %s245
    %p257 = scmp.eq.s32.totalorder %s25, 1
    %p258 = por %p256, %p257
    %p260 = scmp.ne.s32.totalorder %s245, %s259
    %p261 = scmp.eq.s32.totalorder %s25, 0
    %p262 = por %p260, %p261
    %s264 = sadd.s32 %s263, 1
    %p267 = scmp.eq.s32.totalorder %s19, 1
    %p268 = scmp.ne.s32.totalorder %s263, %s265
    %p269 = scmp.eq.s32.totalorder %s19, 0
    %p270 = por %p268, %p269
    %p271 = scmp.ne.s32.totalorder %s263, %s265
    %p272 = scmp.eq.s32.totalorder %s24, 1
    %p273 = por %p271, %p272
    %p274 = scmp.ne.s32.totalorder %s265, %s266
    %p275 = scmp.eq.s32.totalorder %s24, 0
    %p276 = por %p274, %p275
    %p277 = scmp.ne.s32.totalorder %s265, %s266
    %p278 = scmp.eq.s32.totalorder %s25, 1
    %p279 = por %p277, %p278
    %p281 = scmp.ne.s32.totalorder %s266, %s280
    %p282 = scmp.eq.s32.totalorder %s25, 0
    %p283 = por %p281, %p282
    %s285 = sadd.s32 %s284, 1
    %p288 = scmp.eq.s32.totalorder %s19, 1
    %p289 = scmp.ne.s32.totalorder %s284, %s286
    %p290 = scmp.eq.s32.totalorder %s19, 0
    %p291 = por %p289, %p290
    %p292 = scmp.ne.s32.totalorder %s284, %s286
    %p293 = scmp.eq.s32.totalorder %s24, 1
    %p294 = por %p292, %p293
    %p295 = scmp.ne.s32.totalorder %s286, %s287
    %p296 = scmp.eq.s32.totalorder %s24, 0
    %p297 = por %p295, %p296
    %p298 = scmp.ne.s32.totalorder %s286, %s287
    %p299 = scmp.eq.s32.totalorder %s25, 1
    %p300 = por %p298, %p299
    %p302 = scmp.ne.s32.totalorder %s287, %s301
    %p303 = scmp.eq.s32.totalorder %s25, 0
    %p304 = por %p302, %p303
    %s305 = ssub.s32 %s19, %s26
    %p306 = scmp.eq.s32.totalorder %s305, 0
    %s308 = sadd.s32 %s307, 1
    %s309 = scalar_select %p306, %s307, %s308
    %p312 = pneg %p306
    %p313 = scmp.eq.s32.totalorder %s19, 1
    %p314 = por %p312, %p313
    %p315 = scmp.ne.s32.totalorder %s307, %s310
    %p316 = scmp.eq.s32.totalorder %s19, 0
    %p317 = por %p315, %p316
    %p318 = scmp.ne.s32.totalorder %s307, %s310
    %p319 = scmp.eq.s32.totalorder %s24, 1
    %p320 = por %p318, %p319
    %p321 = scmp.ne.s32.totalorder %s310, %s311
    %p322 = scmp.eq.s32.totalorder %s24, 0
    %p323 = por %p321, %p322
    %p324 = scmp.ne.s32.totalorder %s310, %s311
    %p325 = scmp.eq.s32.totalorder %s25, 1
    %p326 = por %p324, %p325
    %p328 = scmp.ne.s32.totalorder %s311, %s327
    %p329 = scmp.eq.s32.totalorder %s25, 0
    %p330 = por %p328, %p329
    %p331 = scmp.le.s32.totalorder 1, %s19
    %p332 = scmp.lt.s32.totalorder %s19, 3
    %p333 = pnand %p331, %p332
    %p334 = pneg %p333
    // Predicated region
    $region9: #{image_encoder_forward.5} parent=5 // pred_check
      _
    $region10: #{image_encoder_forward.5} parent=5 // pred_check_branch
      %336 = sbr.rel (%p333) target = $region12
    $region11: #{image_encoder_forward.5} parent=5 // pred_region
      %s337 = ssub.s32 %s19, 1
      // Predicated region
      $region13: #{image_encoder_forward.5} parent=11 // pred_check
        %p338 = pneg %p66
      $region14: #{image_encoder_forward.5} parent=11 // pred_check_branch
        %340 = sbr.rel (%p338) target = $region16
      $region15: #{image_encoder_forward.5} parent=11 // pred_region
        _
      $region16: #{image_encoder_forward.5} parent=11 // pred_fallthru
        _
      // Predicated region
      $region17: #{image_encoder_forward.5} parent=11 // pred_check
        %p341 = pneg %p87
      $region18: #{image_encoder_forward.5} parent=11 // pred_check_branch
        %343 = sbr.rel (%p341) target = $region20
      $region19: #{image_encoder_forward.5} parent=11 // pred_region
        _
      $region20: #{image_encoder_forward.5} parent=11 // pred_fallthru
        _
      // Predicated region
      $region21: #{image_encoder_forward.5} parent=11 // pred_check
        %p344 = pneg %p108
      $region22: #{image_encoder_forward.5} parent=11 // pred_check_branch
        %346 = sbr.rel (%p344) target = $region24
      $region23: #{image_encoder_forward.5} parent=11 // pred_region
        _
      $region24: #{image_encoder_forward.5} parent=11 // pred_fallthru
        _
      // Predicated region
      $region25: #{image_encoder_forward.5} parent=11 // pred_check
        %p347 = pneg %p129
      $region26: #{image_encoder_forward.5} parent=11 // pred_check_branch
        %349 = sbr.rel (%p347) target = $region28
      $region27: #{image_encoder_forward.5} parent=11 // pred_region
        _
      $region28: #{image_encoder_forward.5} parent=11 // pred_fallthru
        _
      // Predicated region
      $region29: #{image_encoder_forward.5} parent=11 // pred_check
        %p350 = pneg %p150
      $region30: #{image_encoder_forward.5} parent=11 // pred_check_branch
        %352 = sbr.rel (%p350) target = $region32
      $region31: #{image_encoder_forward.5} parent=11 // pred_region
        _
      $region32: #{image_encoder_forward.5} parent=11 // pred_fallthru
        _
      // Predicated region
      $region33: #{image_encoder_forward.5} parent=11 // pred_check
        %p353 = pneg %p171
      $region34: #{image_encoder_forward.5} parent=11 // pred_check_branch
        %355 = sbr.rel (%p353) target = $region36
      $region35: #{image_encoder_forward.5} parent=11 // pred_region
        _
      $region36: #{image_encoder_forward.5} parent=11 // pred_fallthru
        _
      // Predicated region
      $region37: #{image_encoder_forward.5} parent=11 // pred_check
        %p356 = pneg %p192
      $region38: #{image_encoder_forward.5} parent=11 // pred_check_branch
        %358 = sbr.rel (%p356) target = $region40
      $region39: #{image_encoder_forward.5} parent=11 // pred_region
        _
      $region40: #{image_encoder_forward.5} parent=11 // pred_fallthru
        _
      // Predicated region
      $region41: #{image_encoder_forward.5} parent=11 // pred_check
        %p359 = pneg %p213
      $region42: #{image_encoder_forward.5} parent=11 // pred_check_branch
        %361 = sbr.rel (%p359) target = $region44
      $region43: #{image_encoder_forward.5} parent=11 // pred_region
        _
      $region44: #{image_encoder_forward.5} parent=11 // pred_fallthru
        _
      // Predicated region
      $region45: #{image_encoder_forward.5} parent=11 // pred_check
        %p362 = pneg %p234
      $region46: #{image_encoder_forward.5} parent=11 // pred_check_branch
        %364 = sbr.rel (%p362) target = $region48
      $region47: #{image_encoder_forward.5} parent=11 // pred_region
        _
      $region48: #{image_encoder_forward.5} parent=11 // pred_fallthru
        _
      // Predicated region
      $region49: #{image_encoder_forward.5} parent=11 // pred_check
        %p365 = pneg %p255
      $region50: #{image_encoder_forward.5} parent=11 // pred_check_branch
        %367 = sbr.rel (%p365) target = $region52
      $region51: #{image_encoder_forward.5} parent=11 // pred_region
        _
      $region52: #{image_encoder_forward.5} parent=11 // pred_fallthru
        _
      // Predicated region
      $region53: #{image_encoder_forward.5} parent=11 // pred_check
        %p368 = pneg %p276
      $region54: #{image_encoder_forward.5} parent=11 // pred_check_branch
        %370 = sbr.rel (%p368) target = $region56
      $region55: #{image_encoder_forward.5} parent=11 // pred_region
        _
      $region56: #{image_encoder_forward.5} parent=11 // pred_fallthru
        _
      // Predicated region
      $region57: #{image_encoder_forward.5} parent=11 // pred_check
        %p371 = pneg %p297
      $region58: #{image_encoder_forward.5} parent=11 // pred_check_branch
        %373 = sbr.rel (%p371) target = $region60
      $region59: #{image_encoder_forward.5} parent=11 // pred_region
        _
      $region60: #{image_encoder_forward.5} parent=11 // pred_fallthru
        _
    $region12: #{image_encoder_forward.5} parent=5 // pred_fallthru
      _
    %p374 = scmp.lt.s32.totalorder %s19, 2
    // Predicated region
    $region61: #{image_encoder_forward.5} parent=5 // pred_check
      %p375 = pneg %p374
    $region62: #{image_encoder_forward.5} parent=5 // pred_check_branch
      %377 = sbr.rel (%p375) target = $region64
    $region63: #{image_encoder_forward.5} parent=5 // pred_region
      // Predicated region
      $region65: #{image_encoder_forward.5} parent=63 // pred_check
        %p378 = pneg %p39
      $region66: #{image_encoder_forward.5} parent=63 // pred_check_branch
        %380 = sbr.rel (%p378) target = $region68
      $region67: #{image_encoder_forward.5} parent=63 // pred_region
        %p381 = scmp.lt.s32.totalorder %s19, 1
        %s382 = scalar_select %p381, %s19, 1
        %s383 = smul.addr %s382, 3
        %s384 = smul.addr %s383, 8
        %s385 = scalar_lea.vmem %s0, %s384
      $region68: #{image_encoder_forward.5} parent=63 // pred_fallthru
        _
    $region64: #{image_encoder_forward.5} parent=5 // pred_fallthru
      _
    %p386 = scmp.le.s32.totalorder 1, %s19
    %p387 = scmp.lt.s32.totalorder %s19, 3
    %p388 = pnand %p386, %p387
    %p389 = pneg %p388
    // Predicated region
    $region69: #{image_encoder_forward.5} parent=5 // pred_check
      _
    $region70: #{image_encoder_forward.5} parent=5 // pred_check_branch
      %391 = sbr.rel (%p388) target = $region72
    $region71: #{image_encoder_forward.5} parent=5 // pred_region
      %s392 = ssub.s32 %s19, 1
      %p393 = scmp.lt.s32.totalorder %s24, 1
      %s394 = scalar_select %p393, %s24, 1
      %s395 = smul.addr %s394, 3
      %s396 = smul.addr %s395, 8
      %s397 = scalar_lea.vmem %s0, %s396
      %p398 = pneg %p45
      %p399 = pneg %p42
      %p400 = pneg %p66
      %p401 = pneg %p63
      %p402 = pneg %p87
      %p403 = pneg %p84
      %p404 = pneg %p108
      %p405 = pneg %p105
      %p406 = pneg %p129
      %p407 = pneg %p126
      %p408 = pneg %p150
      %p409 = pneg %p147
      %p410 = pneg %p171
      %p411 = pneg %p168
      %p412 = pneg %p192
      %p413 = pneg %p189
      %p414 = pneg %p213
      %p415 = pneg %p210
      %p416 = pneg %p234
      %p417 = pneg %p231
      %p418 = pneg %p255
      %p419 = pneg %p252
      %p420 = pneg %p276
      %p421 = pneg %p273
      %p422 = pneg %p297
      %p423 = pneg %p294
      %p424 = pneg %p323
      %p425 = pneg %p320
      %p426 = scmp.lt.s32.totalorder %s24, 1
      %s427 = scalar_select %p426, %s24, 1
      %s428 = smul.addr %s427, 3
      %s429 = smul.addr %s428, 8
      %s430 = scalar_lea.vmem %s13, %s429
      %p431 = scmp.lt.s32.totalorder %s24, 1
      %s432 = scalar_select %p431, %s24, 1
      %s433 = smul.addr %s432, 3
      %s434 = smul.addr %s433, 8
      %s435 = scalar_lea.vmem %s0, %s434
      %p436 = scmp.lt.s32.totalorder %s24, 1
      %s437 = scalar_select %p436, %s24, 1
      %s438 = smul.addr %s437, 3
      %s439 = smul.addr %s438, 8
      %s440 = scalar_lea.vmem %s13, %s439
      %v442 = vld [vmem:[%s435] sm:$0xff]
      %v443 = vld [vmem:[%s435 + $0x8] sm:$0xff]
      %v444 = vld [vmem:[%s435 + $0x10] sm:$0xff]
      %v445 = vld [vmem:[%s1] sm:$0x1]
      %v446 = vld [vmem:[%s2] sm:$0x1]
      %447 = vadd.xlane.f32.xlu0 %v442
      %v448 = vpop.xlane.xlu0 %447
      %449 = vadd.xlane.f32.xlu0 %v443
      %v450 = vpop.xlane.xlu0 %449
      %451 = vadd.xlane.f32.xlu0 %v444
      %v452 = vpop.xlane.xlu0 %451
      %v453 = vrcp.pop 128.0
      %v454 = vmul.f32 %v448, %v453
      %v455 = vmul.f32 %v450, %v453
      %v456 = vmul.f32 %v452, %v453
      %v457 = vsub.f32 %v442, %v454
      %v458 = vsub.f32 %v443, %v455
      %v459 = vsub.f32 %v444, %v456
      %v460 = vmul.f32 %v457, %v457
      %v461 = vmul.f32 %v458, %v458
      %v462 = vmul.f32 %v459, %v459
      %463 = vadd.xlane.f32.xlu0 %v460
      %v464 = vpop.xlane.xlu0 %463
      %465 = vadd.xlane.f32.xlu0 %v461
      %v466 = vpop.xlane.xlu0 %465
      %467 = vadd.xlane.f32.xlu0 %v462
      %v468 = vpop.xlane.xlu0 %467
      %v469 = vmul.f32 %v464, %v453
      %v470 = vmul.f32 %v466, %v453
      %v471 = vmul.f32 %v468, %v453
      %v472 = vadd.f32 %v469, 1e-12
      %v473 = vadd.f32 %v470, 1e-12
      %v474 = vadd.f32 %v471, 1e-12
      %v475 = vrsqrt.pop %v472
      %v476 = vrsqrt.pop %v473
      %v477 = vrsqrt.pop %v474
      %v478 = vmul.f32 %v457, %v475
      %v479 = vmul.f32 %v458, %v476
      %v480 = vmul.f32 %v459, %v477
      %v482 = vlaneseq
      %v483 = vshrl.u32 %v482, 7
      %v484 = vsub.s32 0, %v483
      %v485 = vrot.slane %v445, %v484
      %v487 = vmul.f32 %v478, %v485
      %v488 = vmul.f32 %v479, %v485
      %v489 = vmul.f32 %v480, %v485
      %v491 = vlaneseq
      %v492 = vshrl.u32 %v491, 7
      %v493 = vsub.s32 0, %v492
      %v494 = vrot.slane %v446, %v493
      %v496 = vadd.f32 %v487, %v494
      %v497 = vadd.f32 %v488, %v494
      %v498 = vadd.f32 %v489, %v494
      %v499 = vpack.c.bf16 %v497, %v496
      %v500 = vpack.c.bf16 %v498, %v498
      %v501 = vld [vmem:[%s3] sm:$0xff]
      %v502 = vld [vmem:[%s3 + $0x8] sm:$0xf]
      %v503 = vld [vmem:[%s3 + $0xc] sm:$0xff]
      %v504 = vld [vmem:[%s3 + $0x14] sm:$0xf]
      %v505 = vld [vmem:[%s3 + $0x18] sm:$0xff]
      %v506 = vld [vmem:[%s3 + $0x20] sm:$0xf]
      %v507 = vld [vmem:[%s3 + $0x24] sm:$0xff]
      %v508 = vld [vmem:[%s3 + $0x2c] sm:$0xf]
      %v509 = vld [vmem:[%s3 + $0x30] sm:$0xff]
      %v510 = vld [vmem:[%s3 + $0x38] sm:$0xf]
      %v511 = vld [vmem:[%s3 + $0x3c] sm:$0xff]
      %v512 = vld [vmem:[%s3 + $0x44] sm:$0xf]
      %v513 = vld [vmem:[%s3 + $0x48] sm:$0xff]
      %v514 = vld [vmem:[%s3 + $0x50] sm:$0xf]
      %v515 = vld [vmem:[%s3 + $0x54] sm:$0xff]
      %v516 = vld [vmem:[%s3 + $0x5c] sm:$0xf]
      %v517 = vld [vmem:[%s3 + $0x60] sm:$0xff]
      %v518 = vld [vmem:[%s3 + $0x68] sm:$0xf]
      %v519 = vld [vmem:[%s3 + $0x6c] sm:$0xff]
      %v520 = vld [vmem:[%s3 + $0x74] sm:$0xf]
      %v521 = vld [vmem:[%s3 + $0x78] sm:$0xff]
      %v522 = vld [vmem:[%s3 + $0x80] sm:$0xf]
      %v523 = vld [vmem:[%s3 + $0x84] sm:$0xff]
      %v524 = vld [vmem:[%s3 + $0x8c] sm:$0xf]
      %v525 = vld [vmem:[%s3 + $0x90] sm:$0xff]
      %v526 = vld [vmem:[%s3 + $0x98] sm:$0xf]
      %v527 = vld [vmem:[%s3 + $0x9c] sm:$0xff]
      %v528 = vld [vmem:[%s3 + $0xa4] sm:$0xf]
      %v529 = vld [vmem:[%s3 + $0xa8] sm:$0xff]
      %v530 = vld [vmem:[%s3 + $0xb0] sm:$0xf]
      %v531 = vld [vmem:[%s3 + $0xb4] sm:$0xff]
      %v532 = vld [vmem:[%s3 + $0xbc] sm:$0xf]
      %v533 = vld [vmem:[%s4] sm:$0x7]
      %v535 = vlaneseq
      %v536 = vshrl.u32 %v535, 7
      %v537 = vsub.s32 0, %v536
      %v538 = vrot.slane %v533, %v537
      %v539 = vlaneseq
      %v540 = vshrl.u32 %v539, 7
      %v541 = vsub.s32 1, %v540
      %v542 = vrot.slane %v533, %v541
      %v543 = vlaneseq
      %v544 = vshrl.u32 %v543, 7
      %v545 = vsub.s32 2, %v544
      %v546 = vrot.slane %v533, %v545
      %v582 = vunpack.c.l.b16 %v501
      %v583 = vunpack.c.h.b16 %v501
      %v584 = vunpack.c.l.b16 %v502
      %v585 = vunpack.c.l.b16 %v503
      %v586 = vunpack.c.h.b16 %v503
      %v587 = vunpack.c.l.b16 %v504
      %v588 = vunpack.c.l.b16 %v505
      %v589 = vunpack.c.h.b16 %v505
      %v590 = vunpack.c.l.b16 %v506
      %v591 = vunpack.c.l.b16 %v507
      %v592 = vunpack.c.h.b16 %v507
      %v593 = vunpack.c.l.b16 %v508
      %v594 = vunpack.c.l.b16 %v509
      %v595 = vunpack.c.h.b16 %v509
      %v596 = vunpack.c.l.b16 %v510
      %v597 = vunpack.c.l.b16 %v511
      %v598 = vunpack.c.h.b16 %v511
      %v599 = vunpack.c.l.b16 %v512
      %v600 = vunpack.c.l.b16 %v513
      %v601 = vunpack.c.h.b16 %v513
      %v602 = vunpack.c.l.b16 %v514
      %v603 = vunpack.c.l.b16 %v515
      %v604 = vunpack.c.h.b16 %v515
      %v605 = vunpack.c.l.b16 %v516
      %v606 = vunpack.c.l.b16 %v517
      %v607 = vunpack.c.h.b16 %v517
      %v608 = vunpack.c.l.b16 %v518
      %v609 = vunpack.c.l.b16 %v519
      %v610 = vunpack.c.h.b16 %v519
      %v611 = vunpack.c.l.b16 %v520
      %v612 = vunpack.c.l.b16 %v521
      %v613 = vunpack.c.h.b16 %v521
      %v614 = vunpack.c.l.b16 %v522
      %v615 = vunpack.c.l.b16 %v523
      %v616 = vunpack.c.h.b16 %v523
      %v617 = vunpack.c.l.b16 %v524
      %v618 = vunpack.c.l.b16 %v525
      %v619 = vunpack.c.h.b16 %v525
      %v620 = vunpack.c.l.b16 %v526
      %v621 = vunpack.c.l.b16 %v527
      %v622 = vunpack.c.h.b16 %v527
      %v623 = vunpack.c.l.b16 %v528
      %v624 = vunpack.c.l.b16 %v529
      %v625 = vunpack.c.h.b16 %v529
      %v626 = vunpack.c.l.b16 %v530
      %v627 = vunpack.c.l.b16 %v531
      %v628 = vunpack.c.h.b16 %v531
      %v629 = vunpack.c.l.b16 %v532
      %v630 = vpack.c.b16 %v585, %v582
      %v631 = vpack.c.b16 %v586, %v583
      %v632 = vpack.c.b16 %v587, %v584
      %v633 = vpack.c.b16 %v591, %v588
      %v634 = vpack.c.b16 %v592, %v589
      %v635 = vpack.c.b16 %v593, %v590
      %v636 = vpack.c.b16 %v597, %v594
      %v637 = vpack.c.b16 %v598, %v595
      %v638 = vpack.c.b16 %v599, %v596
      %v639 = vpack.c.b16 %v603, %v600
      %v640 = vpack.c.b16 %v604, %v601
      %v641 = vpack.c.b16 %v605, %v602
      %v642 = vpack.c.b16 %v609, %v606
      %v643 = vpack.c.b16 %v610, %v607
      %v644 = vpack.c.b16 %v611, %v608
      %v645 = vpack.c.b16 %v615, %v612
      %v646 = vpack.c.b16 %v616, %v613
      %v647 = vpack.c.b16 %v617, %v614
      %v648 = vpack.c.b16 %v621, %v618
      %v649 = vpack.c.b16 %v622, %v619
      %v650 = vpack.c.b16 %v623, %v620
      %v651 = vpack.c.b16 %v627, %v624
      %v652 = vpack.c.b16 %v628, %v625
      %v653 = vpack.c.b16 %v629, %v626
      %678 = vmatprep.subr.bf16.mxu0 %v631
      %679 = vmatpush1.bf16.msra.mxu0 %v630
      %680 = vmatprep.subr.bf16.mxu0 %v634
      %681 = vmatpush1.bf16.msra.mxu0 %v633
      %682 = vmatprep.subr.bf16.mxu0 %v637
      %683 = vmatpush1.bf16.msra.mxu0 %v636
      %684 = vmatprep.subr.bf16.mxu0 %v640
      %685 = vmatpush1.bf16.msra.mxu0 %v639
      %686 = vmatprep.subr.bf16.mxu0 %v643
      %687 = vmatpush1.bf16.msra.mxu0 %v642
      %688 = vmatprep.subr.bf16.mxu0 %v646
      %689 = vmatpush1.bf16.msra.mxu0 %v645
      %690 = vmatprep.subr.bf16.mxu0 %v649
      %691 = vmatpush1.bf16.msra.mxu0 %v648
      %692 = vmatprep.subr.bf16.mxu0 %v652
      %693 = vmatpush1.bf16.msra.mxu0 %v651
      %694 = vmatprep.subr.bf16.mxu0 0
      %695 = vmatpush1.bf16.msra.mxu0 0
      %696 = vmatprep.subr.bf16.mxu0 0
      %697 = vmatpush1.bf16.msra.mxu0 0
      %698 = vmatprep.subr.bf16.mxu0 0
      %699 = vmatpush1.bf16.msra.mxu0 0
      %700 = vmatprep.subr.bf16.mxu0 0
      %701 = vmatpush1.bf16.msra.mxu0 0
      %702 = vmatprep.subr.bf16.mxu0 0
      %703 = vmatpush1.bf16.msra.mxu0 0
      %704 = vmatprep.subr.bf16.mxu0 0
      %705 = vmatpush1.bf16.msra.mxu0 0
      %706 = vmatprep.subr.bf16.mxu0 0
      %707 = vmatpush1.bf16.msra.mxu0 0
      %708 = vmatprep.subr.bf16.mxu0 0
      %709 = vmatpush1.bf16.msra.mxu0 0
      %710 = vmatprep.mubr.bf16.mxu0 0
      %711 = vmatmul.mubr.bf16.gmra.mrb[0].mxu0 %v499
      %v712 = vpop.f32.mrb[0].mxu0
      %v713 = vadd.f32 %v538, %v712
      %v714 = vpop.f32.mrb[0].mxu0
      %v715 = vadd.f32 %v542, %v714
      %v716 = vpop.f32.mrb[0].mxu0
      %v717 = vadd.f32 %v538, %v716
      %v718 = vpop.f32.mrb[0].mxu0
      %v719 = vadd.f32 %v542, %v718
      %720 = vmatprep.mubr.bf16.mxu0 0
      %721 = vmatmul.mubr.bf16.gmra.mrb[0].mxu0 %v500
      %v722 = vpop.f32.mrb[0].mxu0
      %v723 = vadd.f32 %v538, %v722
      %v724 = vpop.f32.mrb[0].mxu0
      %v725 = vadd.f32 %v542, %v724
      %v726 = vpop.f32.mrb[0].mxu0
      %v727 = vpop.f32.mrb[0].mxu0
      %728 = vdwg.mxu0
      %729 = vmatprep.subr.bf16.mxu0 0
      %730 = vmatpush1.bf16.msra.mxu0 %v632
      %731 = vmatprep.subr.bf16.mxu0 0
      %732 = vmatpush1.bf16.msra.mxu0 %v635
      %733 = vmatprep.subr.bf16.mxu0 0
      %734 = vmatpush1.bf16.msra.mxu0 %v638
      %735 = vmatprep.subr.bf16.mxu0 0
      %736 = vmatpush1.bf16.msra.mxu0 %v641
      %737 = vmatprep.subr.bf16.mxu0 0
      %738 = vmatpush1.bf16.msra.mxu0 %v644
      %739 = vmatprep.subr.bf16.mxu0 0
      %740 = vmatpush1.bf16.msra.mxu0 %v647
      %741 = vmatprep.subr.bf16.mxu0 0
      %742 = vmatpush1.bf16.msra.mxu0 %v650
      %743 = vmatprep.subr.bf16.mxu0 0
      %744 = vmatpush1.bf16.msra.mxu0 %v653
      %745 = vmatprep.subr.bf16.mxu0 0
      %746 = vmatpush1.bf16.msra.mxu0 0
      %747 = vmatprep.subr.bf16.mxu0 0
      %748 = vmatpush1.bf16.msra.mxu0 0
      %749 = vmatprep.subr.bf16.mxu0 0
      %750 = vmatpush1.bf16.msra.mxu0 0
      %751 = vmatprep.subr.bf16.mxu0 0
      %752 = vmatpush1.bf16.msra.mxu0 0
      %753 = vmatprep.subr.bf16.mxu0 0
      %754 = vmatpush1.bf16.msra.mxu0 0
      %755 = vmatprep.subr.bf16.mxu0 0
      %756 = vmatpush1.bf16.msra.mxu0 0
      %757 = vmatprep.subr.bf16.mxu0 0
      %758 = vmatpush1.bf16.msra.mxu0 0
      %759 = vmatprep.subr.bf16.mxu0 0
      %760 = vmatpush1.bf16.msra.mxu0 0
      %761 = vmatprep.mubr.bf16.mxu0 0
      %762 = vmatmul.mubr.bf16.gmra.mrb[0].mxu0 %v499
      %v763 = vpop.f32.mrb[0].mxu0
      %v764 = vadd.f32 %v546, %v763
      %v765 = vpop.f32.mrb[0].mxu0
      %v766 = vpop.f32.mrb[0].mxu0
      %v767 = vadd.f32 %v546, %v766
      %v768 = vpop.f32.mrb[0].mxu0
      %769 = vmatprep.mubr.bf16.mxu0 0
      %770 = vmatmul.mubr.bf16.gmra.mrb[0].mxu0 %v500
      %v771 = vpop.f32.mrb[0].mxu0
      %v772 = vadd.f32 %v546, %v771
      %v773 = vpop.f32.mrb[0].mxu0
      %v774 = vpop.f32.mrb[0].mxu0
      %v775 = vpop.f32.mrb[0].mxu0
      %776 = vdwg.mxu0
      %v777 = vlaneseq
      %v778 = vand.u32 %v777, 127
      %vm779 = vcmp.lt.s32.totalorder %v778, 17
      %v780 = vpack.c.bf16 %v717, %v713
      %v781 = vpack.c.bf16 %v723, %v723
      %v782 = vpack.c.bf16 %v719, %v715
      %v783 = vpack.c.bf16 %v725, %v725
      %vm784 = vcmask 261120
      %v786 = vsel %vm784, %v780, 0
      %v789 = vsel %vm784, %v781, 0
      %v792 = vsel %vm784, %v782, 0
      %v795 = vsel %vm784, %v783, 0
      %797 = vmatprep.subr.bf16.mxu0 0
      %798 = vmatpush1.bf16.xpose.msra.mxu0 %v792
      %799 = vmatprep.subr.bf16.mxu0 0
      %800 = vmatpush1.bf16.xpose.msra.mxu0 %v795
      %801 = vmatprep.subr.bf16.mxu0 0
      %802 = vmatpush1.bf16.xpose.msra.mxu0 0
      %803 = vmatprep.subr.bf16.mxu0 0
      %804 = vmatpush1.bf16.xpose.msra.mxu0 0
      %805 = vmatprep.subr.bf16.mxu0 0
      %806 = vmatpush1.bf16.xpose.msra.mxu0 0
      %807 = vmatprep.subr.bf16.mxu0 0
      %808 = vmatpush1.bf16.xpose.msra.mxu0 0
      %809 = vmatprep.subr.bf16.mxu0 0
      %810 = vmatpush1.bf16.xpose.msra.mxu0 0
      %811 = vmatprep.subr.bf16.mxu0 0
      %812 = vmatpush1.bf16.xpose.msra.mxu0 0
      %813 = vmatprep.subr.bf16.mxu0 0
      %814 = vmatpush1.bf16.xpose.msra.mxu0 0
      %815 = vmatprep.subr.bf16.mxu0 0
      %816 = vmatpush1.bf16.xpose.msra.mxu0 0
      %817 = vmatprep.subr.bf16.mxu0 0
      %818 = vmatpush1.bf16.xpose.msra.mxu0 0
      %819 = vmatprep.subr.bf16.mxu0 0
      %820 = vmatpush1.bf16.xpose.msra.mxu0 0
      %821 = vmatprep.subr.bf16.mxu0 0
      %822 = vmatpush1.bf16.xpose.msra.mxu0 0
      %823 = vmatprep.subr.bf16.mxu0 0
      %824 = vmatpush1.bf16.xpose.msra.mxu0 0
      %825 = vmatprep.subr.bf16.mxu0 0
      %826 = vmatpush1.bf16.xpose.msra.mxu0 0
      %827 = vmatprep.subr.bf16.mxu0 0
      %828 = vmatpush1.bf16.xpose.msra.mxu0 0
      %829 = vmatprep.mubr.bf16.mxu0 0
      %830 = vmatmul.mubr.bf16.gmra.mrb[0].mxu0 %v786
      %v831 = vpop.f32.mrb[0].mxu0
      %v832 = vadd.f32 0.0, %v831
      %v833 = vpop.f32.mrb[0].mxu0
      %v834 = vpop.f32.mrb[0].mxu0
      %v835 = vadd.f32 0.0, %v834
      %v836 = vpop.f32.mrb[0].mxu0
      %837 = vmatprep.mubr.bf16.mxu0 0
      %838 = vmatmul.mubr.bf16.gmra.mrb[0].mxu0 %v789
      %v839 = vpop.f32.mrb[0].mxu0
      %v840 = vadd.f32 0.0, %v839
      %v841 = vpop.f32.mrb[0].mxu0
      %v842 = vpop.f32.mrb[0].mxu0
      %v843 = vpop.f32.mrb[0].mxu0
      %844 = vdwg.mxu0
      %v845 = vmul.f32 %v832, 0.17677669
      %v846 = vmul.f32 %v835, 0.17677669
      %v847 = vmul.f32 %v840, 0.17677669
      %v848 = vsel %vm779, %v845, -1e+30
      %v849 = vsel %vm779, %v846, -1e+30
      %v850 = vsel %vm779, %v847, -1e+30
      %vm851 = vcmask 195584
      %v852 = vsel %vm851, %v848, -inf
      %853 = vmax.xlane.f32.xlu0 %v852
      %v854 = vpop.xlane.xlu0 %853
      %v855 = vsel %vm851, %v849, -inf
      %856 = vmax.xlane.f32.xlu0 %v855
      %v857 = vpop.xlane.xlu0 %856
      %v858 = vsel %vm851, %v850, -inf
      %859 = vmax.xlane.f32.xlu0 %v858
      %v860 = vpop.xlane.xlu0 %859
      %v861 = vsub.f32 %v848, %v854
      %v862 = vsub.f32 %v849, %v857
      %v863 = vsub.f32 %v850, %v860
      %v864 = vmul.f32 %v861, 1.442695
      %v865 = vpow.pop %v864
      %v866 = vmul.f32 %v862, 1.442695
      %v867 = vpow.pop %v866
      %v868 = vmul.f32 %v863, 1.442695
      %v869 = vpow.pop %v868
      %v870 = vsel %vm851, %v865, 0.0
      %871 = vadd.xlane.f32.xlu0 %v870
      %v872 = vpop.xlane.xlu0 %871
      %v873 = vsel %vm851, %v867, 0.0
      %874 = vadd.xlane.f32.xlu0 %v873
      %v875 = vpop.xlane.xlu0 %874
      %v876 = vsel %vm851, %v869, 0.0
      %877 = vadd.xlane.f32.xlu0 %v876
      %v878 = vpop.xlane.xlu0 %877
      %v879 = vrcp.pop %v872
      %v880 = vrcp.pop %v875
      %v881 = vrcp.pop %v878
      %v882 = vmul.f32 %v865, %v879
      %v883 = vmul.f32 %v867, %v880
      %v884 = vmul.f32 %v869, %v881
      %v885 = vpack.c.bf16 %v883, %v882
      %v886 = vpack.c.bf16 %v884, %v884
      %v887 = vpack.c.bf16 %v767, %v764
      %v888 = vpack.c.bf16 %v772, %v772
      %v890 = vsel %vm851, %v885, 0
      %v893 = vsel %vm851, %v886, 0
      %vm895 = vcmask 1043456
      %v897 = vsel %vm895, %v888, 0
      %899 = vmatprep.subr.bf16.mxu0 0
      %900 = vmatpush1.bf16.msra.mxu0 %v887
      %901 = vmatprep.subr.bf16.mxu0 0
      %902 = vmatpush1.bf16.msra.mxu0 %v897
      %903 = vmatprep.subr.bf16.mxu0 0
      %904 = vmatpush1.bf16.msra.mxu0 0
      %905 = vmatprep.subr.bf16.mxu0 0
      %906 = vmatpush1.bf16.msra.mxu0 0
      %907 = vmatprep.subr.bf16.mxu0 0
      %908 = vmatpush1.bf16.msra.mxu0 0
      %909 = vmatprep.subr.bf16.mxu0 0
      %910 = vmatpush1.bf16.msra.mxu0 0
      %911 = vmatprep.subr.bf16.mxu0 0
      %912 = vmatpush1.bf16.msra.mxu0 0
      %913 = vmatprep.subr.bf16.mxu0 0
      %914 = vmatpush1.bf16.msra.mxu0 0
      %915 = vmatprep.subr.bf16.mxu0 0
      %916 = vmatpush1.bf16.msra.mxu0 0
      %917 = vmatprep.subr.bf16.mxu0 0
      %918 = vmatpush1.bf16.msra.mxu0 0
      %919 = vmatprep.subr.bf16.mxu0 0
      %920 = vmatpush1.bf16.msra.mxu0 0
      %921 = vmatprep.subr.bf16.mxu0 0
      %922 = vmatpush1.bf16.msra.mxu0 0
      %923 = vmatprep.subr.bf16.mxu0 0
      %924 = vmatpush1.bf16.msra.mxu0 0
      %925 = vmatprep.subr.bf16.mxu0 0
      %926 = vmatpush1.bf16.msra.mxu0 0
      %927 = vmatprep.subr.bf16.mxu0 0
      %928 = vmatpush1.bf16.msra.mxu0 0
      %929 = vmatprep.subr.bf16.mxu0 0
      %930 = vmatpush1.bf16.msra.mxu0 0
      %931 = vmatprep.mubr.bf16.mxu0 0
      %932 = vmatmul.mubr.bf16.gmra.mrb[0].mxu0 %v890
      %v933 = vpop.f32.mrb[0].mxu0
      %v934 = vadd.f32 0.0, %v933
      %v935 = vpop.f32.mrb[0].mxu0
      %v936 = vpop.f32.mrb[0].mxu0
      %v937 = vadd.f32 0.0, %v936
      %v938 = vpop.f32.mrb[0].mxu0
      %939 = vmatprep.mubr.bf16.mxu0 0
      %940 = vmatmul.mubr.bf16.gmra.mrb[0].mxu0 %v893
      %v941 = vpop.f32.mrb[0].mxu0
      %v942 = vadd.f32 0.0, %v941
      %v943 = vpop.f32.mrb[0].mxu0
      %v944 = vpop.f32.mrb[0].mxu0
      %v945 = vpop.f32.mrb[0].mxu0
      %946 = vdwg.mxu0
      %949 = vrot.lane.b32.xlu0 %v780, 96
      %v950 = vpop.permute.xlu0 %949
      %951 = vrot.lane.b32.xlu0 %v781, 96
      %v952 = vpop.permute.xlu0 %951
      %955 = vrot.lane.b32.xlu0 %v782, 96
      %v956 = vpop.permute.xlu0 %955
      %957 = vrot.lane.b32.xlu0 %v783, 96
      %v958 = vpop.permute.xlu0 %957
      %v960 = vsel %vm784, %v950, 0
      %v963 = vsel %vm784, %v952, 0
      %v966 = vsel %vm784, %v956, 0
      %v969 = vsel %vm784, %v958, 0
      %971 = vmatprep.subr.bf16.mxu0 0
      %972 = vmatpush1.bf16.xpose.msra.mxu0 %v966
      %973 = vmatprep.subr.bf16.mxu0 0
      %974 = vmatpush1.bf16.xpose.msra.mxu0 %v969
      %975 = vmatprep.subr.bf16.mxu0 0
      %976 = vmatpush1.bf16.xpose.msra.mxu0 0
      %977 = vmatprep.subr.bf16.mxu0 0
      %978 = vmatpush1.bf16.xpose.msra.mxu0 0
      %979 = vmatprep.subr.bf16.mxu0 0
      %980 = vmatpush1.bf16.xpose.msra.mxu0 0
      %981 = vmatprep.subr.bf16.mxu0 0
      %982 = vmatpush1.bf16.xpose.msra.mxu0 0
      %983 = vmatprep.subr.bf16.mxu0 0
      %984 = vmatpush1.bf16.xpose.msra.mxu0 0
      %985 = vmatprep.subr.bf16.mxu0 0
      %986 = vmatpush1.bf16.xpose.msra.mxu0 0
      %987 = vmatprep.subr.bf16.mxu0 0
      %988 = vmatpush1.bf16.xpose.msra.mxu0 0
      %989 = vmatprep.subr.bf16.mxu0 0
      %990 = vmatpush1.bf16.xpose.msra.mxu0 0
      %991 = vmatprep.subr.bf16.mxu0 0
      %992 = vmatpush1.bf16.xpose.msra.mxu0 0
      %993 = vmatprep.subr.bf16.mxu0 0
      %994 = vmatpush1.bf16.xpose.msra.mxu0 0
      %995 = vmatprep.subr.bf16.mxu0 0
      %996 = vmatpush1.bf16.xpose.msra.mxu0 0
      %997 = vmatprep.subr.bf16.mxu0 0
      %998 = vmatpush1.bf16.xpose.msra.mxu0 0
      %999 = vmatprep.subr.bf16.mxu0 0
      %1000 = vmatpush1.bf16.xpose.msra.mxu0 0
      %1001 = vmatprep.subr.bf16.mxu0 0
      %1002 = vmatpush1.bf16.xpose.msra.mxu0 0
      %1003 = vmatprep.mubr.bf16.mxu0 0
      %1004 = vmatmul.mubr.bf16.gmra.mrb[0].mxu0 %v960
      %v1005 = vpop.f32.mrb[0].mxu0
      %v1006 = vadd.f32 0.0, %v1005
      %v1007 = vpop.f32.mrb[0].mxu0
      %v1008 = vpop.f32.mrb[0].mxu0
      %v1009 = vadd.f32 0.0, %v1008
      %v1010 = vpop.f32.mrb[0].mxu0
      %1011 = vmatprep.mubr.bf16.mxu0 0
      %1012 = vmatmul.mubr.bf16.gmra.mrb[0].mxu0 %v963
      %v1013 = vpop.f32.mrb[0].mxu0
      %v1014 = vadd.f32 0.0, %v1013
      %v1015 = vpop.f32.mrb[0].mxu0
      %v1016 = vpop.f32.mrb[0].mxu0
      %v1017 = vpop.f32.mrb[0].mxu0
      %1018 = vdwg.mxu0
      %v1019 = vmul.f32 %v1006, 0.17677669
      %v1020 = vmul.f32 %v1009, 0.17677669
      %v1021 = vmul.f32 %v1014, 0.17677669
      %v1022 = vsel %vm779, %v1019, -1e+30
      %v1023 = vsel %vm779, %v1020, -1e+30
      %v1024 = vsel %vm779, %v1021, -1e+30
      %v1025 = vsel %vm851, %v1022, -inf
      %1026 = vmax.xlane.f32.xlu0 %v1025
      %v1027 = vpop.xlane.xlu0 %1026
      %v1028 = vsel %vm851, %v1023, -inf
      %1029 = vmax.xlane.f32.xlu0 %v1028
      %v1030 = vpop.xlane.xlu0 %1029
      %v1031 = vsel %vm851, %v1024, -inf
      %1032 = vmax.xlane.f32.xlu0 %v1031
      %v1033 = vpop.xlane.xlu0 %1032
      %v1034 = vsub.f32 %v1022, %v1027
      %v1035 = vsub.f32 %v1023, %v1030
      %v1036 = vsub.f32 %v1024, %v1033
      %v1037 = vmul.f32 %v1034, 1.442695
      %v1038 = vpow.pop %v1037
      %v1039 = vmul.f32 %v1035, 1.442695
      %v1040 = vpow.pop %v1039
      %v1041 = vmul.f32 %v1036, 1.442695
      %v1042 = vpow.pop %v1041
      %v1043 = vsel %vm851, %v1038, 0.0
      %1044 = vadd.xlane.f32.xlu0 %v1043
      %v1045 = vpop.xlane.xlu0 %1044
      %v1046 = vsel %vm851, %v1040, 0.0
      %1047 = vadd.xlane.f32.xlu0 %v1046
      %v1048 = vpop.xlane.xlu0 %1047
      %v1049 = vsel %vm851, %v1042, 0.0
      %1050 = vadd.xlane.f32.xlu0 %v1049
      %v1051 = vpop.xlane.xlu0 %1050
      %v1052 = vrcp.pop %v1045
      %v1053 = vrcp.pop %v1048
      %v1054 = vrcp.pop %v1051
      %v1055 = vmul.f32 %v1038, %v1052
      %v1056 = vmul.f32 %v1040, %v1053
      %v1057 = vmul.f32 %v1042, %v1054
      %v1058 = vpack.c.bf16 %v1056, %v1055
      %v1059 = vpack.c.bf16 %v1057, %v1057
      %1062 = vrot.lane.b32.xlu0 %v887, 96
      %v1063 = vpop.permute.xlu0 %1062
      %1064 = vrot.lane.b32.xlu0 %v888, 96
      %v1065 = vpop.permute.xlu0 %1064
      %v1068 = vsel %vm851, %v1058, 0
      %v1071 = vsel %vm851, %v1059, 0
      %v1074 = vsel %vm895, %v1065, 0
      %1076 = vmatprep.subr.bf16.mxu0 0
      %1077 = vmatpush1.bf16.msra.mxu0 %v1063
      %1078 = vmatprep.subr.bf16.mxu0 0
      %1079 = vmatpush1.bf16.msra.mxu0 %v1074
      %1080 = vmatprep.subr.bf16.mxu0 0
      %1081 = vmatpush1.bf16.msra.mxu0 0
      %1082 = vmatprep.subr.bf16.mxu0 0
      %1083 = vmatpush1.bf16.msra.mxu0 0
      %1084 = vmatprep.subr.bf16.mxu0 0
      %1085 = vmatpush1.bf16.msra.mxu0 0
      %1086 = vmatprep.subr.bf16.mxu0 0
      %1087 = vmatpush1.bf16.msra.mxu0 0
      %1088 = vmatprep.subr.bf16.mxu0 0
      %1089 = vmatpush1.bf16.msra.mxu0 0
      %1090 = vmatprep.subr.bf16.mxu0 0
      %1091 = vmatpush1.bf16.msra.mxu0 0
      %1092 = vmatprep.subr.bf16.mxu0 0
      %1093 = vmatpush1.bf16.msra.mxu0 0
      %1094 = vmatprep.subr.bf16.mxu0 0
      %1095 = vmatpush1.bf16.msra.mxu0 0
      %1096 = vmatprep.subr.bf16.mxu0 0
      %1097 = vmatpush1.bf16.msra.mxu0 0
      %1098 = vmatprep.subr.bf16.mxu0 0
      %1099 = vmatpush1.bf16.msra.mxu0 0
      %1100 = vmatprep.subr.bf16.mxu0 0
      %1101 = vmatpush1.bf16.msra.mxu0 0
      %1102 = vmatprep.subr.bf16.mxu0 0
      %1103 = vmatpush1.bf16.msra.mxu0 0
      %1104 = vmatprep.subr.bf16.mxu0 0
      %1105 = vmatpush1.bf16.msra.mxu0 0
      %1106 = vmatprep.subr.bf16.mxu0 0
      %1107 = vmatpush1.bf16.msra.mxu0 0
      %1108 = vmatprep.mubr.bf16.mxu0 0
      %1109 = vmatmul.mubr.bf16.gmra.mrb[0].mxu0 %v1068
      %v1110 = vpop.f32.mrb[0].mxu0
      %v1111 = vadd.f32 0.0, %v1110
      %v1112 = vpop.f32.mrb[0].mxu0
      %v1113 = vpop.f32.mrb[0].mxu0
      %v1114 = vadd.f32 0.0, %v1113
      %v1115 = vpop.f32.mrb[0].mxu0
      %1116 = vmatprep.mubr.bf16.mxu0 0
      %1117 = vmatmul.mubr.bf16.gmra.mrb[0].mxu0 %v1071
      %v1118 = vpop.f32.mrb[0].mxu0
      %v1119 = vadd.f32 0.0, %v1118
      %v1120 = vpop.f32.mrb[0].mxu0
      %v1121 = vpop.f32.mrb[0].mxu0
      %v1122 = vpop.f32.mrb[0].mxu0
      %1123 = vdwg.mxu0
      %1124 = vrot.lane.b32.xlu0 %v780, 64
      %v1125 = vpop.permute.xlu0 %1124
      %1126 = vrot.lane.b32.xlu0 %v781, 64
      %v1127 = vpop.permute.xlu0 %1126
      %1128 = vrot.lane.b32.xlu0 %v782, 64
      %v1129 = vpop.permute.xlu0 %1128
      %1130 = vrot.lane.b32.xlu0 %v783, 64
      %v1131 = vpop.permute.xlu0 %1130
      %v1133 = vsel %vm784, %v1125, 0
      %v1136 = vsel %vm784, %v1127, 0
      %v1139 = vsel %vm784, %v1129, 0
      %v1142 = vsel %vm784, %v1131, 0
      %1144 = vmatprep.subr.bf16.mxu0 0
      %1145 = vmatpush1.bf16.xpose.msra.mxu0 %v1139
      %1146 = vmatprep.subr.bf16.mxu0 0
      %1147 = vmatpush1.bf16.xpose.msra.mxu0 %v1142
      %1148 = vmatprep.subr.bf16.mxu0 0
      %1149 = vmatpush1.bf16.xpose.msra.mxu0 0
      %1150 = vmatprep.subr.bf16.mxu0 0
      %1151 = vmatpush1.bf16.xpose.msra.mxu0 0
      %1152 = vmatprep.subr.bf16.mxu0 0
      %1153 = vmatpush1.bf16.xpose.msra.mxu0 0
      %1154 = vmatprep.subr.bf16.mxu0 0
      %1155 = vmatpush1.bf16.xpose.msra.mxu0 0
      %1156 = vmatprep.subr.bf16.mxu0 0
      %1157 = vmatpush1.bf16.xpose.msra.mxu0 0
      %1158 = vmatprep.subr.bf16.mxu0 0
      %1159 = vmatpush1.bf16.xpose.msra.mxu0 0
      %1160 = vmatprep.subr.bf16.mxu0 0
      %1161 = vmatpush1.bf16.xpose.msra.mxu0 0
      %1162 = vmatprep.subr.bf16.mxu0 0
      %1163 = vmatpush1.bf16.xpose.msra.mxu0 0
      %1164 = vmatprep.subr.bf16.mxu0 0
      %1165 = vmatpush1.bf16.xpose.msra.mxu0 0
      %1166 = vmatprep.subr.bf16.mxu0 0
      %1167 = vmatpush1.bf16.xpose.msra.mxu0 0
      %1168 = vmatprep.subr.bf16.mxu0 0
      %1169 = vmatpush1.bf16.xpose.msra.mxu0 0
      %1170 = vmatprep.subr.bf16.mxu0 0
      %1171 = vmatpush1.bf16.xpose.msra.mxu0 0
      %1172 = vmatprep.subr.bf16.mxu0 0
      %1173 = vmatpush1.bf16.xpose.msra.mxu0 0
      %1174 = vmatprep.subr.bf16.mxu0 0
      %1175 = vmatpush1.bf16.xpose.msra.mxu0 0
      %1176 = vmatprep.mubr.bf16.mxu0 0
      %1177 = vmatmul.mubr.bf16.gmra.mrb[0].mxu0 %v1133
      %v1178 = vpop.f32.mrb[0].mxu0
      %v1179 = vadd.f32 0.0, %v1178
      %v1180 = vpop.f32.mrb[0].mxu0
      %v1181 = vpop.f32.mrb[0].mxu0
      %v1182 = vadd.f32 0.0, %v1181
      %v1183 = vpop.f32.mrb[0].mxu0
      %1184 = vmatprep.mubr.bf16.mxu0 0
      %1185 = vmatmul.mubr.bf16.gmra.mrb[0].mxu0 %v1136
      %v1186 = vpop.f32.mrb[0].mxu0
      %v1187 = vadd.f32 0.0, %v1186
      %v1188 = vpop.f32.mrb[0].mxu0
      %v1189 = vpop.f32.mrb[0].mxu0
      %v1190 = vpop.f32.mrb[0].mxu0
      %1191 = vdwg.mxu0
      %v1192 = vmul.f32 %v1179, 0.17677669
      %v1193 = vmul.f32 %v1182, 0.17677669
      %v1194 = vmul.f32 %v1187, 0.17677669
      %v1195 = vsel %vm779, %v1192, -1e+30
      %v1196 = vsel %vm779, %v1193, -1e+30
      %v1197 = vsel %vm779, %v1194, -1e+30
      %v1198 = vsel %vm851, %v1195, -inf
      %1199 = vmax.xlane.f32.xlu0 %v1198
      %v1200 = vpop.xlane.xlu0 %1199
      %v1201 = vsel %vm851, %v1196, -inf
      %1202 = vmax.xlane.f32.xlu0 %v1201
      %v1203 = vpop.xlane.xlu0 %1202
      %v1204 = vsel %vm851, %v1197, -inf
      %1205 = vmax.xlane.f32.xlu0 %v1204
      %v1206 = vpop.xlane.xlu0 %1205
      %v1207 = vsub.f32 %v1195, %v1200
      %v1208 = vsub.f32 %v1196, %v1203
      %v1209 = vsub.f32 %v1197, %v1206
      %v1210 = vmul.f32 %v1207, 1.442695
      %v1211 = vpow.pop %v1210
      %v1212 = vmul.f32 %v1208, 1.442695
      %v1213 = vpow.pop %v1212
      %v1214 = vmul.f32 %v1209, 1.442695
      %v1215 = vpow.pop %v1214
      %v1216 = vsel %vm851, %v1211, 0.0
      %1217 = vadd.xlane.f32.xlu0 %v1216
      %v1218 = vpop.xlane.xlu0 %1217
      %v1219 = vsel %vm851, %v1213, 0.0
      %1220 = vadd.xlane.f32.xlu0 %v1219
      %v1221 = vpop.xlane.xlu0 %1220
      %v1222 = vsel %vm851, %v1215, 0.0
      %1223 = vadd.xlane.f32.xlu0 %v1222
      %v1224 = vpop.xlane.xlu0 %1223
      %v1225 = vrcp.pop %v1218
      %v1226 = vrcp.pop %v1221
      %v1227 = vrcp.pop %v1224
      %v1228 = vmul.f32 %v1211, %v1225
      %v1229 = vmul.f32 %v1213, %v1226
      %v1230 = vmul.f32 %v1215, %v1227
      %v1231 = vpack.c.bf16 %v1229, %v1228
      %v1232 = vpack.c.bf16 %v1230, %v1230
      %1233 = vrot.lane.b32.xlu0 %v887, 64
      %v1234 = vpop.permute.xlu0 %1233
      %1235 = vrot.lane.b32.xlu0 %v888, 64
      %v1236 = vpop.permute.xlu0 %1235
      %v1239 = vsel %vm851, %v1231, 0
      %v1242 = vsel %vm851, %v1232, 0
      %v1245 = vsel %vm895, %v1236, 0
      %1247 = vmatprep.subr.bf16.mxu0 0
      %1248 = vmatpush1.bf16.msra.mxu0 %v1234
      %1249 = vmatprep.subr.bf16.mxu0 0
      %1250 = vmatpush1.bf16.msra.mxu0 %v1245
      %1251 = vmatprep.subr.bf16.mxu0 0
      %1252 = vmatpush1.bf16.msra.mxu0 0
      %1253 = vmatprep.subr.bf16.mxu0 0
      %1254 = vmatpush1.bf16.msra.mxu0 0
      %1255 = vmatprep.subr.bf16.mxu0 0
      %1256 = vmatpush1.bf16.msra.mxu0 0
      %1257 = vmatprep.subr.bf16.mxu0 0
      %1258 = vmatpush1.bf16.msra.mxu0 0
      %1259 = vmatprep.subr.bf16.mxu0 0
      %1260 = vmatpush1.bf16.msra.mxu0 0
      %1261 = vmatprep.subr.bf16.mxu0 0
      %1262 = vmatpush1.bf16.msra.mxu0 0
      %1263 = vmatprep.subr.bf16.mxu0 0
      %1264 = vmatpush1.bf16.msra.mxu0 0
      %1265 = vmatprep.subr.bf16.mxu0 0
      %1266 = vmatpush1.bf16.msra.mxu0 0
      %1267 = vmatprep.subr.bf16.mxu0 0
      %1268 = vmatpush1.bf16.msra.mxu0 0
      %1269 = vmatprep.subr.bf16.mxu0 0
      %1270 = vmatpush1.bf16.msra.mxu0 0
      %1271 = vmatprep.subr.bf16.mxu0 0
      %1272 = vmatpush1.bf16.msra.mxu0 0
      %1273 = vmatprep.subr.bf16.mxu0 0
      %1274 = vmatpush1.bf16.msra.mxu0 0
      %1275 = vmatprep.subr.bf16.mxu0 0
      %1276 = vmatpush1.bf16.msra.mxu0 0
      %1277 = vmatprep.subr.bf16.mxu0 0
      %1278 = vmatpush1.bf16.msra.mxu0 0
      %1279 = vmatprep.mubr.bf16.mxu0 0
      %1280 = vmatmul.mubr.bf16.gmra.mrb[0].mxu0 %v1239
      %v1281 = vpop.f32.mrb[0].mxu0
      %v1282 = vadd.f32 0.0, %v1281
      %v1283 = vpop.f32.mrb[0].mxu0
      %v1284 = vpop.f32.mrb[0].mxu0
      %v1285 = vadd.f32 0.0, %v1284
      %v1286 = vpop.f32.mrb[0].mxu0
      %1287 = vmatprep.mubr.bf16.mxu0 0
      %1288 = vmatmul.mubr.bf16.gmra.mrb[0].mxu0 %v1242
      %v1289 = vpop.f32.mrb[0].mxu0
      %v1290 = vadd.f32 0.0, %v1289
      %v1291 = vpop.f32.mrb[0].mxu0
      %v1292 = vpop.f32.mrb[0].mxu0
      %v1293 = vpop.f32.mrb[0].mxu0
      %1294 = vdwg.mxu0
      %1295 = vrot.lane.b32.xlu0 %v780, 32
      %v1296 = vpop.permute.xlu0 %1295
      %1297 = vrot.lane.b32.xlu0 %v781, 32
      %v1298 = vpop.permute.xlu0 %1297
      %1299 = vrot.lane.b32.xlu0 %v782, 32
      %v1300 = vpop.permute.xlu0 %1299
      %1301 = vrot.lane.b32.xlu0 %v783, 32
      %v1302 = vpop.permute.xlu0 %1301
      %v1304 = vsel %vm784, %v1296, 0
      %v1307 = vsel %vm784, %v1298, 0
      %v1310 = vsel %vm784, %v1300, 0
      %v1313 = vsel %vm784, %v1302, 0
      %1315 = vmatprep.subr.bf16.mxu0 0
      %1316 = vmatpush1.bf16.xpose.msra.mxu0 %v1310
      %1317 = vmatprep.subr.bf16.mxu0 0
      %1318 = vmatpush1.bf16.xpose.msra.mxu0 %v1313
      %1319 = vmatprep.subr.bf16.mxu0 0
      %1320 = vmatpush1.bf16.xpose.msra.mxu0 0
      %1321 = vmatprep.subr.bf16.mxu0 0
      %1322 = vmatpush1.bf16.xpose.msra.mxu0 0
      %1323 = vmatprep.subr.bf16.mxu0 0
      %1324 = vmatpush1.bf16.xpose.msra.mxu0 0
      %1325 = vmatprep.subr.bf16.mxu0 0
      %1326 = vmatpush1.bf16.xpose.msra.mxu0 0
      %1327 = vmatprep.subr.bf16.mxu0 0
      %1328 = vmatpush1.bf16.xpose.msra.mxu0 0
      %1329 = vmatprep.subr.bf16.mxu0 0
      %1330 = vmatpush1.bf16.xpose.msra.mxu0 0
      %1331 = vmatprep.subr.bf16.mxu0 0
      %1332 = vmatpush1.bf16.xpose.msra.mxu0 0
      %1333 = vmatprep.subr.bf16.mxu0 0
      %1334 = vmatpush1.bf16.xpose.msra.mxu0 0
      %1335 = vmatprep.subr.bf16.mxu0 0
      %1336 = vmatpush1.bf16.xpose.msra.mxu0 0
      %1337 = vmatprep.subr.bf16.mxu0 0
      %1338 = vmatpush1.bf16.xpose.msra.mxu0 0
      %1339 = vmatprep.subr.bf16.mxu0 0
      %1340 = vmatpush1.bf16.xpose.msra.mxu0 0
      %1341 = vmatprep.subr.bf16.mxu0 0
      %1342 = vmatpush1.bf16.xpose.msra.mxu0 0
      %1343 = vmatprep.subr.bf16.mxu0 0
      %1344 = vmatpush1.bf16.xpose.msra.mxu0 0
      %1345 = vmatprep.subr.bf16.mxu0 0
      %1346 = vmatpush1.bf16.xpose.msra.mxu0 0
      %1347 = vmatprep.mubr.bf16.mxu0 0
      %1348 = vmatmul.mubr.bf16.gmra.mrb[0].mxu0 %v1304
      %v1349 = vpop.f32.mrb[0].mxu0
      %v1350 = vadd.f32 0.0, %v1349
      %v1351 = vpop.f32.mrb[0].mxu0
      %v1352 = vpop.f32.mrb[0].mxu0
      %v1353 = vadd.f32 0.0, %v1352
      %v1354 = vpop.f32.mrb[0].mxu0
      %1355 = vmatprep.mubr.bf16.mxu0 0
      %1356 = vmatmul.mubr.bf16.gmra.mrb[0].mxu0 %v1307
      %v1357 = vpop.f32.mrb[0].mxu0
      %v1358 = vadd.f32 0.0, %v1357
      %v1359 = vpop.f32.mrb[0].mxu0
      %v1360 = vpop.f32.mrb[0].mxu0
      %v1361 = vpop.f32.mrb[0].mxu0
      %1362 = vdwg.mxu0
      %v1363 = vmul.f32 %v1350, 0.17677669
      %v1364 = vmul.f32 %v1353, 0.17677669
      %v1365 = vmul.f32 %v1358, 0.17677669
      %v1366 = vsel %vm779, %v1363, -1e+30
      %v1367 = vsel %vm779, %v1364, -1e+30
      %v1368 = vsel %vm779, %v1365, -1e+30
      %v1369 = vsel %vm851, %v1366, -inf
      %1370 = vmax.xlane.f32.xlu0 %v1369
      %v1371 = vpop.xlane.xlu0 %1370
      %v1372 = vsel %vm851, %v1367, -inf
      %1373 = vmax.xlane.f32.xlu0 %v1372
      %v1374 = vpop.xlane.xlu0 %1373
      %v1375 = vsel %vm851, %v1368, -inf
      %1376 = vmax.xlane.f32.xlu0 %v1375
      %v1377 = vpop.xlane.xlu0 %1376
      %v1378 = vsub.f32 %v1366, %v1371
      %v1379 = vsub.f32 %v1367, %v1374
      %v1380 = vsub.f32 %v1368, %v1377
      %v1381 = vmul.f32 %v1378, 1.442695
      %v1382 = vpow.pop %v1381
      %v1383 = vmul.f32 %v1379, 1.442695
      %v1384 = vpow.pop %v1383
      %v1385 = vmul.f32 %v1380, 1.442695
      %v1386 = vpow.pop %v1385
      %v1387 = vsel %vm851, %v1382, 0.0
      %1388 = vadd.xlane.f32.xlu0 %v1387
      %v1389 = vpop.xlane.xlu0 %1388
      %v1390 = vsel %vm851, %v1384, 0.0
      %1391 = vadd.xlane.f32.xlu0 %v1390
      %v1392 = vpop.xlane.xlu0 %1391
      %v1393 = vsel %vm851, %v1386, 0.0
      %1394 = vadd.xlane.f32.xlu0 %v1393
      %v1395 = vpop.xlane.xlu0 %1394
      %v1396 = vrcp.pop %v1389
      %v1397 = vrcp.pop %v1392
      %v1398 = vrcp.pop %v1395
      %v1399 = vmul.f32 %v1382, %v1396
      %v1400 = vmul.f32 %v1384, %v1397
      %v1401 = vmul.f32 %v1386, %v1398
      %v1402 = vpack.c.bf16 %v1400, %v1399
      %v1403 = vpack.c.bf16 %v1401, %v1401
      %1404 = vrot.lane.b32.xlu0 %v887, 32
      %v1405 = vpop.permute.xlu0 %1404
      %1406 = vrot.lane.b32.xlu0 %v888, 32
      %v1407 = vpop.permute.xlu0 %1406
      %v1410 = vsel %vm851, %v1402, 0
      %v1413 = vsel %vm851, %v1403, 0
      %v1416 = vsel %vm895, %v1407, 0
      %1418 = vmatprep.subr.bf16.mxu0 0
      %1419 = vmatpush1.bf16.msra.mxu0 %v1405
      %1420 = vmatprep.subr.bf16.mxu0 0
      %1421 = vmatpush1.bf16.msra.mxu0 %v1416
      %1422 = vmatprep.subr.bf16.mxu0 0
      %1423 = vmatpush1.bf16.msra.mxu0 0
      %1424 = vmatprep.subr.bf16.mxu0 0
      %1425 = vmatpush1.bf16.msra.mxu0 0
      %1426 = vmatprep.subr.bf16.mxu0 0
      %1427 = vmatpush1.bf16.msra.mxu0 0
      %1428 = vmatprep.subr.bf16.mxu0 0
      %1429 = vmatpush1.bf16.msra.mxu0 0
      %1430 = vmatprep.subr.bf16.mxu0 0
      %1431 = vmatpush1.bf16.msra.mxu0 0
      %1432 = vmatprep.subr.bf16.mxu0 0
      %1433 = vmatpush1.bf16.msra.mxu0 0
      %1434 = vmatprep.subr.bf16.mxu0 0
      %1435 = vmatpush1.bf16.msra.mxu0 0
      %1436 = vmatprep.subr.bf16.mxu0 0
      %1437 = vmatpush1.bf16.msra.mxu0 0
      %1438 = vmatprep.subr.bf16.mxu0 0
      %1439 = vmatpush1.bf16.msra.mxu0 0
      %1440 = vmatprep.subr.bf16.mxu0 0
      %1441 = vmatpush1.bf16.msra.mxu0 0
      %1442 = vmatprep.subr.bf16.mxu0 0
      %1443 = vmatpush1.bf16.msra.mxu0 0
      %1444 = vmatprep.subr.bf16.mxu0 0
      %1445 = vmatpush1.bf16.msra.mxu0 0
      %1446 = vmatprep.subr.bf16.mxu0 0
      %1447 = vmatpush1.bf16.msra.mxu0 0
      %1448 = vmatprep.subr.bf16.mxu0 0
      %1449 = vmatpush1.bf16.msra.mxu0 0
      %1450 = vmatprep.mubr.bf16.mxu0 0
      %1451 = vmatmul.mubr.bf16.gmra.mrb[0].mxu0 %v1410
      %v1452 = vpop.f32.mrb[0].mxu0
      %v1453 = vadd.f32 0.0, %v1452
      %v1454 = vpop.f32.mrb[0].mxu0
      %v1455 = vpop.f32.mrb[0].mxu0
      %v1456 = vadd.f32 0.0, %v1455
      %v1457 = vpop.f32.mrb[0].mxu0
      %1458 = vmatprep.mubr.bf16.mxu0 0
      %1459 = vmatmul.mubr.bf16.gmra.mrb[0].mxu0 %v1413
      %v1460 = vpop.f32.mrb[0].mxu0
      %v1461 = vadd.f32 0.0, %v1460
      %v1462 = vpop.f32.mrb[0].mxu0
      %v1463 = vpop.f32.mrb[0].mxu0
      %v1464 = vpop.f32.mrb[0].mxu0
      %1465 = vdwg.mxu0
      %1469 = vrot.lane.b32.xlu0 %v1111, 32
      %v1470 = vpop.permute.xlu0 %1469
      %1471 = vrot.lane.b32.xlu0 %v1114, 32
      %v1472 = vpop.permute.xlu0 %1471
      %1473 = vrot.lane.b32.xlu0 %v1119, 32
      %v1474 = vpop.permute.xlu0 %1473
      %1481 = vrot.lane.b32.xlu0 %v1282, 64
      %v1482 = vpop.permute.xlu0 %1481
      %1483 = vrot.lane.b32.xlu0 %v1285, 64
      %v1484 = vpop.permute.xlu0 %1483
      %1485 = vrot.lane.b32.xlu0 %v1290, 64
      %v1486 = vpop.permute.xlu0 %1485
      %1493 = vrot.lane.b32.xlu0 %v1453, 96
      %v1494 = vpop.permute.xlu0 %1493
      %1495 = vrot.lane.b32.xlu0 %v1456, 96
      %v1496 = vpop.permute.xlu0 %1495
      %1497 = vrot.lane.b32.xlu0 %v1461, 96
      %v1498 = vpop.permute.xlu0 %1497
      %v1502 = vsel %vm784, %v934, %v1470
      %v1503 = vsel %vm784, %v937, %v1472
      %v1504 = vsel %vm784, %v942, %v1474
      %vm1505 = vcmask 523264
      %v1506 = vsel %vm1505, %v1502, %v1482
      %v1507 = vsel %vm1505, %v1503, %v1484
      %v1508 = vsel %vm1505, %v1504, %v1486
      %vm1509 = vcmask 785408
      %v1510 = vsel %vm1509, %v1506, %v1494
      %v1511 = vsel %vm1509, %v1507, %v1496
      %v1512 = vsel %vm1509, %v1508, %v1498
      %v1513 = vpack.c.bf16 %v1511, %v1510
      %v1514 = vpack.c.bf16 %v1512, %v1512
      %v1515 = vld [vmem:[%s5] sm:$0xf]
      %v1516 = vld [vmem:[%s5 + $0x4] sm:$0xf]
      %v1517 = vld [vmem:[%s5 + $0x8] sm:$0xf]
      %v1518 = vld [vmem:[%s5 + $0xc] sm:$0xf]
      %v1519 = vld [vmem:[%s5 + $0x10] sm:$0xf]
      %v1520 = vld [vmem:[%s5 + $0x14] sm:$0xf]
      %v1521 = vld [vmem:[%s5 + $0x18] sm:$0xf]
      %v1522 = vld [vmem:[%s5 + $0x1c] sm:$0xf]
      %v1523 = vld [vmem:[%s5 + $0x20] sm:$0xf]
      %v1524 = vld [vmem:[%s5 + $0x24] sm:$0xf]
      %v1525 = vld [vmem:[%s5 + $0x28] sm:$0xf]
      %v1526 = vld [vmem:[%s5 + $0x2c] sm:$0xf]
      %v1527 = vld [vmem:[%s5 + $0x30] sm:$0xf]
      %v1528 = vld [vmem:[%s5 + $0x34] sm:$0xf]
      %v1529 = vld [vmem:[%s5 + $0x38] sm:$0xf]
      %v1530 = vld [vmem:[%s5 + $0x3c] sm:$0xf]
      %v1547 = vunpack.c.l.b16 %v1515
      %v1548 = vunpack.c.l.b16 %v1516
      %v1549 = vunpack.c.l.b16 %v1517
      %v1550 = vunpack.c.l.b16 %v1518
      %v1551 = vunpack.c.l.b16 %v1519
      %v1552 = vunpack.c.l.b16 %v1520
      %v1553 = vunpack.c.l.b16 %v1521
      %v1554 = vunpack.c.l.b16 %v1522
      %v1555 = vunpack.c.l.b16 %v1523
      %v1556 = vunpack.c.l.b16 %v1524
      %v1557 = vunpack.c.l.b16 %v1525
      %v1558 = vunpack.c.l.b16 %v1526
      %v1559 = vunpack.c.l.b16 %v1527
      %v1560 = vunpack.c.l.b16 %v1528
      %v1561 = vunpack.c.l.b16 %v1529
      %v1562 = vunpack.c.l.b16 %v1530
      %v1563 = vpack.c.b16 %v1548, %v1547
      %v1564 = vpack.c.b16 %v1550, %v1549
      %v1565 = vpack.c.b16 %v1552, %v1551
      %v1566 = vpack.c.b16 %v1554, %v1553
      %v1567 = vpack.c.b16 %v1556, %v1555
      %v1568 = vpack.c.b16 %v1558, %v1557
      %v1569 = vpack.c.b16 %v1560, %v1559
      %v1570 = vpack.c.b16 %v1562, %v1561
      %1579 = vmatprep.subr.bf16.mxu0 0
      %1580 = vmatpush1.bf16.msra.mxu0 %v1563
      %1581 = vmatprep.subr.bf16.mxu0 0
      %1582 = vmatpush1.bf16.msra.mxu0 %v1564
      %1583 = vmatprep.subr.bf16.mxu0 0
      %1584 = vmatpush1.bf16.msra.mxu0 %v1565
      %1585 = vmatprep.subr.bf16.mxu0 0
      %1586 = vmatpush1.bf16.msra.mxu0 %v1566
      %1587 = vmatprep.subr.bf16.mxu0 0
      %1588 = vmatpush1.bf16.msra.mxu0 %v1567
      %1589 = vmatprep.subr.bf16.mxu0 0
      %1590 = vmatpush1.bf16.msra.mxu0 %v1568
      %1591 = vmatprep.subr.bf16.mxu0 0
      %1592 = vmatpush1.bf16.msra.mxu0 %v1569
      %1593 = vmatprep.subr.bf16.mxu0 0
      %1594 = vmatpush1.bf16.msra.mxu0 %v1570
      %1595 = vmatprep.subr.bf16.mxu0 0
      %1596 = vmatpush1.bf16.msra.mxu0 0
      %1597 = vmatprep.subr.bf16.mxu0 0
      %1598 = vmatpush1.bf16.msra.mxu0 0
      %1599 = vmatprep.subr.bf16.mxu0 0
      %1600 = vmatpush1.bf16.msra.mxu0 0
      %1601 = vmatprep.subr.bf16.mxu0 0
      %1602 = vmatpush1.bf16.msra.mxu0 0
      %1603 = vmatprep.subr.bf16.mxu0 0
      %1604 = vmatpush1.bf16.msra.mxu0 0
      %1605 = vmatprep.subr.bf16.mxu0 0
      %1606 = vmatpush1.bf16.msra.mxu0 0
      %1607 = vmatprep.subr.bf16.mxu0 0
      %1608 = vmatpush1.bf16.msra.mxu0 0
      %1609 = vmatprep.subr.bf16.mxu0 0
      %1610 = vmatpush1.bf16.msra.mxu0 0
      %1611 = vmatprep.mubr.bf16.mxu0 0
      %1612 = vmatmul.mubr.bf16.gmra.mrb[0].mxu0 %v1513
      %v1613 = vpop.f32.mrb[0].mxu0
      %v1614 = vadd.f32 0.0, %v1613
      %v1615 = vpop.f32.mrb[0].mxu0
      %v1616 = vpop.f32.mrb[0].mxu0
      %v1617 = vadd.f32 0.0, %v1616
      %v1618 = vpop.f32.mrb[0].mxu0
      %1619 = vmatprep.mubr.bf16.mxu0 0
      %1620 = vmatmul.mubr.bf16.gmra.mrb[0].mxu0 %v1514
      %v1621 = vpop.f32.mrb[0].mxu0
      %v1622 = vadd.f32 0.0, %v1621
      %v1623 = vpop.f32.mrb[0].mxu0
      %v1624 = vpop.f32.mrb[0].mxu0
      %v1625 = vpop.f32.mrb[0].mxu0
      %1626 = vdwg.mxu0
      %v1627 = vadd.f32 %v442, %v1614
      %v1628 = vadd.f32 %v443, %v1617
      %v1629 = vadd.f32 %v444, %v1622
      %v1630 = vld [vmem:[%s6] sm:$0x1]
      %v1632 = vlaneseq
      %v1633 = vshrl.u32 %v1632, 7
      %v1634 = vsub.s32 0, %v1633
      %v1635 = vrot.slane %v1630, %v1634
      %v1637 = vadd.f32 %v1627, %v1635
      %v1638 = vadd.f32 %v1628, %v1635
      %v1639 = vadd.f32 %v1629, %v1635
      %v1640 = vld [vmem:[%s7] sm:$0x1]
      %v1641 = vld [vmem:[%s8] sm:$0x1]
      %1642 = vadd.xlane.f32.xlu0 %v1637
      %v1643 = vpop.xlane.xlu0 %1642
      %1644 = vadd.xlane.f32.xlu0 %v1638
      %v1645 = vpop.xlane.xlu0 %1644
      %1646 = vadd.xlane.f32.xlu0 %v1639
      %v1647 = vpop.xlane.xlu0 %1646
      %v1648 = vmul.f32 %v1643, %v453
      %v1649 = vmul.f32 %v1645, %v453
      %v1650 = vmul.f32 %v1647, %v453
      %v1651 = vsub.f32 %v1637, %v1648
      %v1652 = vsub.f32 %v1638, %v1649
      %v1653 = vsub.f32 %v1639, %v1650
      %v1654 = vmul.f32 %v1651, %v1651
      %v1655 = vmul.f32 %v1652, %v1652
      %v1656 = vmul.f32 %v1653, %v1653
      %1657 = vadd.xlane.f32.xlu0 %v1654
      %v1658 = vpop.xlane.xlu0 %1657
      %1659 = vadd.xlane.f32.xlu0 %v1655
      %v1660 = vpop.xlane.xlu0 %1659
      %1661 = vadd.xlane.f32.xlu0 %v1656
      %v1662 = vpop.xlane.xlu0 %1661
      %v1663 = vmul.f32 %v1658, %v453
      %v1664 = vmul.f32 %v1660, %v453
      %v1665 = vmul.f32 %v1662, %v453
      %v1666 = vadd.f32 %v1663, 1e-12
      %v1667 = vadd.f32 %v1664, 1e-12
      %v1668 = vadd.f32 %v1665, 1e-12
      %v1669 = vrsqrt.pop %v1666
      %v1670 = vrsqrt.pop %v1667
      %v1671 = vrsqrt.pop %v1668
      %v1672 = vmul.f32 %v1651, %v1669
      %v1673 = vmul.f32 %v1652, %v1670
      %v1674 = vmul.f32 %v1653, %v1671
      %v1676 = vlaneseq
      %v1677 = vshrl.u32 %v1676, 7
      %v1678 = vsub.s32 0, %v1677
      %v1679 = vrot.slane %v1640, %v1678
      %v1681 = vmul.f32 %v1672, %v1679
      %v1682 = vmul.f32 %v1673, %v1679
      %v1683 = vmul.f32 %v1674, %v1679
      %v1685 = vlaneseq
      %v1686 = vshrl.u32 %v1685, 7
      %v1687 = vsub.s32 0, %v1686
      %v1688 = vrot.slane %v1641, %v1687
      %v1690 = vadd.f32 %v1681, %v1688
      %v1691 = vadd.f32 %v1682, %v1688
      %v1692 = vadd.f32 %v1683, %v1688
      %v1693 = vpack.c.bf16 %v1691, %v1690
      %v1694 = vpack.c.bf16 %v1692, %v1692
      %v1695 = vld [vmem:[%s9] sm:$0xff]
      %v1696 = vld [vmem:[%s9 + $0x8] sm:$0xff]
      %v1697 = vld [vmem:[%s9 + $0x10] sm:$0xff]
      %v1698 = vld [vmem:[%s9 + $0x18] sm:$0xff]
      %v1699 = vld [vmem:[%s9 + $0x20] sm:$0xff]
      %v1700 = vld [vmem:[%s9 + $0x28] sm:$0xff]
      %v1701 = vld [vmem:[%s9 + $0x30] sm:$0xff]
      %v1702 = vld [vmem:[%s9 + $0x38] sm:$0xff]
      %v1703 = vld [vmem:[%s9 + $0x40] sm:$0xff]
      %v1704 = vld [vmem:[%s9 + $0x48] sm:$0xff]
      %v1705 = vld [vmem:[%s9 + $0x50] sm:$0xff]
      %v1706 = vld [vmem:[%s9 + $0x58] sm:$0xff]
      %v1707 = vld [vmem:[%s9 + $0x60] sm:$0xff]
      %v1708 = vld [vmem:[%s9 + $0x68] sm:$0xff]
      %v1709 = vld [vmem:[%s9 + $0x70] sm:$0xff]
      %v1710 = vld [vmem:[%s9 + $0x78] sm:$0xff]
      %v1711 = vld [vmem:[%s10] sm:$0x3]
      %v1713 = vlaneseq
      %v1714 = vshrl.u32 %v1713, 7
      %v1715 = vsub.s32 0, %v1714
      %v1716 = vrot.slane %v1711, %v1715
      %v1717 = vlaneseq
      %v1718 = vshrl.u32 %v1717, 7
      %v1719 = vsub.s32 1, %v1718
      %v1720 = vrot.slane %v1711, %v1719
      %v1739 = vunpack.c.l.b16 %v1695
      %v1740 = vunpack.c.h.b16 %v1695
      %v1741 = vunpack.c.l.b16 %v1696
      %v1742 = vunpack.c.h.b16 %v1696
      %v1743 = vunpack.c.l.b16 %v1697
      %v1744 = vunpack.c.h.b16 %v1697
      %v1745 = vunpack.c.l.b16 %v1698
      %v1746 = vunpack.c.h.b16 %v1698
      %v1747 = vunpack.c.l.b16 %v1699
      %v1748 = vunpack.c.h.b16 %v1699
      %v1749 = vunpack.c.l.b16 %v1700
      %v1750 = vunpack.c.h.b16 %v1700
      %v1751 = vunpack.c.l.b16 %v1701
      %v1752 = vunpack.c.h.b16 %v1701
      %v1753 = vunpack.c.l.b16 %v1702
      %v1754 = vunpack.c.h.b16 %v1702
      %v1755 = vunpack.c.l.b16 %v1703
      %v1756 = vunpack.c.h.b16 %v1703
      %v1757 = vunpack.c.l.b16 %v1704
      %v1758 = vunpack.c.h.b16 %v1704
      %v1759 = vunpack.c.l.b16 %v1705
      %v1760 = vunpack.c.h.b16 %v1705
      %v1761 = vunpack.c.l.b16 %v1706
      %v1762 = vunpack.c.h.b16 %v1706
      %v1763 = vunpack.c.l.b16 %v1707
      %v1764 = vunpack.c.h.b16 %v1707
      %v1765 = vunpack.c.l.b16 %v1708
      %v1766 = vunpack.c.h.b16 %v1708
      %v1767 = vunpack.c.l.b16 %v1709
      %v1768 = vunpack.c.h.b16 %v1709
      %v1769 = vunpack.c.l.b16 %v1710
      %v1770 = vunpack.c.h.b16 %v1710
      %v1771 = vpack.c.b16 %v1741, %v1739
      %v1772 = vpack.c.b16 %v1742, %v1740
      %v1773 = vpack.c.b16 %v1745, %v1743
      %v1774 = vpack.c.b16 %v1746, %v1744
      %v1775 = vpack.c.b16 %v1749, %v1747
      %v1776 = vpack.c.b16 %v1750, %v1748
      %v1777 = vpack.c.b16 %v1753, %v1751
      %v1778 = vpack.c.b16 %v1754, %v1752
      %v1779 = vpack.c.b16 %v1757, %v1755
      %v1780 = vpack.c.b16 %v1758, %v1756
      %v1781 = vpack.c.b16 %v1761, %v1759
      %v1782 = vpack.c.b16 %v1762, %v1760
      %v1783 = vpack.c.b16 %v1765, %v1763
      %v1784 = vpack.c.b16 %v1766, %v1764
      %v1785 = vpack.c.b16 %v1769, %v1767
      %v1786 = vpack.c.b16 %v1770, %v1768
      %1803 = vmatprep.subr.bf16.mxu0 %v1772
      %1804 = vmatpush1.bf16.msra.mxu0 %v1771
      %1805 = vmatprep.subr.bf16.mxu0 %v1774
      %1806 = vmatpush1.bf16.msra.mxu0 %v1773
      %1807 = vmatprep.subr.bf16.mxu0 %v1776
      %1808 = vmatpush1.bf16.msra.mxu0 %v1775
      %1809 = vmatprep.subr.bf16.mxu0 %v1778
      %1810 = vmatpush1.bf16.msra.mxu0 %v1777
      %1811 = vmatprep.subr.bf16.mxu0 %v1780
      %1812 = vmatpush1.bf16.msra.mxu0 %v1779
      %1813 = vmatprep.subr.bf16.mxu0 %v1782
      %1814 = vmatpush1.bf16.msra.mxu0 %v1781
      %1815 = vmatprep.subr.bf16.mxu0 %v1784
      %1816 = vmatpush1.bf16.msra.mxu0 %v1783
      %1817 = vmatprep.subr.bf16.mxu0 %v1786
      %1818 = vmatpush1.bf16.msra.mxu0 %v1785
      %1819 = vmatprep.subr.bf16.mxu0 0
      %1820 = vmatpush1.bf16.msra.mxu0 0
      %1821 = vmatprep.subr.bf16.mxu0 0
      %1822 = vmatpush1.bf16.msra.mxu0 0
      %1823 = vmatprep.subr.bf16.mxu0 0
      %1824 = vmatpush1.bf16.msra.mxu0 0
      %1825 = vmatprep.subr.bf16.mxu0 0
      %1826 = vmatpush1.bf16.msra.mxu0 0
      %1827 = vmatprep.subr.bf16.mxu0 0
      %1828 = vmatpush1.bf16.msra.mxu0 0
      %1829 = vmatprep.subr.bf16.mxu0 0
      %1830 = vmatpush1.bf16.msra.mxu0 0
      %1831 = vmatprep.subr.bf16.mxu0 0
      %1832 = vmatpush1.bf16.msra.mxu0 0
      %1833 = vmatprep.subr.bf16.mxu0 0
      %1834 = vmatpush1.bf16.msra.mxu0 0
      %1835 = vmatprep.mubr.bf16.mxu0 0
      %1836 = vmatmul.mubr.bf16.gmra.mrb[0].mxu0 %v1693
      %v1837 = vpop.f32.mrb[0].mxu0
      %v1838 = vadd.f32 %v1716, %v1837
      %v1839 = vpop.f32.mrb[0].mxu0
      %v1840 = vadd.f32 %v1720, %v1839
      %v1841 = vpop.f32.mrb[0].mxu0
      %v1842 = vadd.f32 %v1716, %v1841
      %v1843 = vpop.f32.mrb[0].mxu0
      %v1844 = vadd.f32 %v1720, %v1843
      %1845 = vmatprep.mubr.bf16.mxu0 0
      %1846 = vmatmul.mubr.bf16.gmra.mrb[0].mxu0 %v1694
      %v1847 = vpop.f32.mrb[0].mxu0
      %v1848 = vadd.f32 %v1716, %v1847
      %v1849 = vpop.f32.mrb[0].mxu0
      %v1850 = vadd.f32 %v1720, %v1849
      %v1851 = vpop.f32.mrb[0].mxu0
      %v1852 = vpop.f32.mrb[0].mxu0
      %1853 = vdwg.mxu0
      %v1854 = vmul.f32 %v1838, %v1838
      %v1855 = vmul.f32 %v1840, %v1840
      %v1856 = vmul.f32 %v1842, %v1842
      %v1857 = vmul.f32 %v1844, %v1844
      %v1858 = vmul.f32 %v1848, %v1848
      %v1859 = vmul.f32 %v1850, %v1850
      %v1860 = vmul.f32 %v1838, %v1854
      %v1861 = vmul.f32 %v1840, %v1855
      %v1862 = vmul.f32 %v1842, %v1856
      %v1863 = vmul.f32 %v1844, %v1857
      %v1864 = vmul.f32 %v1848, %v1858
      %v1865 = vmul.f32 %v1850, %v1859
      %v1866 = vmul.f32 %v1860, 0.044715
      %v1867 = vmul.f32 %v1861, 0.044715
      %v1868 = vmul.f32 %v1862, 0.044715
      %v1869 = vmul.f32 %v1863, 0.044715
      %v1870 = vmul.f32 %v1864, 0.044715
      %v1871 = vmul.f32 %v1865, 0.044715
      %v1872 = vadd.f32 %v1838, %v1866
      %v1873 = vadd.f32 %v1840, %v1867
      %v1874 = vadd.f32 %v1842, %v1868
      %v1875 = vadd.f32 %v1844, %v1869
      %v1876 = vadd.f32 %v1848, %v1870
      %v1877 = vadd.f32 %v1850, %v1871
      %v1878 = vmul.f32 %v1872, 0.7978846
      %v1879 = vmul.f32 %v1873, 0.7978846
      %v1880 = vmul.f32 %v1874, 0.7978846
      %v1881 = vmul.f32 %v1875, 0.7978846
      %v1882 = vmul.f32 %v1876, 0.7978846
      %v1883 = vmul.f32 %v1877, 0.7978846
      %v1884 = vtanh.pop %v1878
      %v1885 = vtanh.pop %v1879
      %v1886 = vtanh.pop %v1880
      %v1887 = vtanh.pop %v1881
      %v1888 = vtanh.pop %v1882
      %v1889 = vtanh.pop %v1883
      %v1890 = vadd.f32 %v1884, 1.0
      %v1891 = vadd.f32 %v1885, 1.0
      %v1892 = vadd.f32 %v1886, 1.0
      %v1893 = vadd.f32 %v1887, 1.0
      %v1894 = vadd.f32 %v1888, 1.0
      %v1895 = vadd.f32 %v1889, 1.0
      %v1896 = vmul.f32 %v1890, 0.5
      %v1897 = vmul.f32 %v1891, 0.5
      %v1898 = vmul.f32 %v1892, 0.5
      %v1899 = vmul.f32 %v1893, 0.5
      %v1900 = vmul.f32 %v1894, 0.5
      %v1901 = vmul.f32 %v1895, 0.5
      %v1902 = vmul.f32 %v1838, %v1896
      %v1903 = vmul.f32 %v1840, %v1897
      %v1904 = vmul.f32 %v1842, %v1898
      %v1905 = vmul.f32 %v1844, %v1899
      %v1906 = vmul.f32 %v1848, %v1900
      %v1907 = vmul.f32 %v1850, %v1901
      %v1908 = vpack.c.bf16 %v1904, %v1902
      %v1909 = vpack.c.bf16 %v1905, %v1903
      %v1910 = vpack.c.bf16 %v1906, %v1906
      %v1911 = vpack.c.bf16 %v1907, %v1907
      %v1912 = vld [vmem:[%s11] sm:$0xf]
      %v1913 = vld [vmem:[%s11 + $0x4] sm:$0xf]
      %v1914 = vld [vmem:[%s11 + $0x8] sm:$0xf]
      %v1915 = vld [vmem:[%s11 + $0xc] sm:$0xf]
      %v1916 = vld [vmem:[%s11 + $0x10] sm:$0xf]
      %v1917 = vld [vmem:[%s11 + $0x14] sm:$0xf]
      %v1918 = vld [vmem:[%s11 + $0x18] sm:$0xf]
      %v1919 = vld [vmem:[%s11 + $0x1c] sm:$0xf]
      %v1920 = vld [vmem:[%s11 + $0x20] sm:$0xf]
      %v1921 = vld [vmem:[%s11 + $0x24] sm:$0xf]
      %v1922 = vld [vmem:[%s11 + $0x28] sm:$0xf]
      %v1923 = vld [vmem:[%s11 + $0x2c] sm:$0xf]
      %v1924 = vld [vmem:[%s11 + $0x30] sm:$0xf]
      %v1925 = vld [vmem:[%s11 + $0x34] sm:$0xf]
      %v1926 = vld [vmem:[%s11 + $0x38] sm:$0xf]
      %v1927 = vld [vmem:[%s11 + $0x3c] sm:$0xf]
      %v1928 = vld [vmem:[%s11 + $0x40] sm:$0xf]
      %v1929 = vld [vmem:[%s11 + $0x44] sm:$0xf]
      %v1930 = vld [vmem:[%s11 + $0x48] sm:$0xf]
      %v1931 = vld [vmem:[%s11 + $0x4c] sm:$0xf]
      %v1932 = vld [vmem:[%s11 + $0x50] sm:$0xf]
      %v1933 = vld [vmem:[%s11 + $0x54] sm:$0xf]
      %v1934 = vld [vmem:[%s11 + $0x58] sm:$0xf]
      %v1935 = vld [vmem:[%s11 + $0x5c] sm:$0xf]
      %v1936 = vld [vmem:[%s11 + $0x60] sm:$0xf]
      %v1937 = vld [vmem:[%s11 + $0x64] sm:$0xf]
      %v1938 = vld [vmem:[%s11 + $0x68] sm:$0xf]
      %v1939 = vld [vmem:[%s11 + $0x6c] sm:$0xf]
      %v1940 = vld [vmem:[%s11 + $0x70] sm:$0xf]
      %v1941 = vld [vmem:[%s11 + $0x74] sm:$0xf]
      %v1942 = vld [vmem:[%s11 + $0x78] sm:$0xf]
      %v1943 = vld [vmem:[%s11 + $0x7c] sm:$0xf]
      %v1976 = vunpack.c.l.b16 %v1912
      %v1977 = vunpack.c.l.b16 %v1913
      %v1978 = vunpack.c.l.b16 %v1914
      %v1979 = vunpack.c.l.b16 %v1915
      %v1980 = vunpack.c.l.b16 %v1916
      %v1981 = vunpack.c.l.b16 %v1917
      %v1982 = vunpack.c.l.b16 %v1918
      %v1983 = vunpack.c.l.b16 %v1919
      %v1984 = vunpack.c.l.b16 %v1920
      %v1985 = vunpack.c.l.b16 %v1921
      %v1986 = vunpack.c.l.b16 %v1922
      %v1987 = vunpack.c.l.b16 %v1923
      %v1988 = vunpack.c.l.b16 %v1924
      %v1989 = vunpack.c.l.b16 %v1925
      %v1990 = vunpack.c.l.b16 %v1926
      %v1991 = vunpack.c.l.b16 %v1927
      %v1992 = vunpack.c.l.b16 %v1928
      %v1993 = vunpack.c.l.b16 %v1929
      %v1994 = vunpack.c.l.b16 %v1930
      %v1995 = vunpack.c.l.b16 %v1931
      %v1996 = vunpack.c.l.b16 %v1932
      %v1997 = vunpack.c.l.b16 %v1933
      %v1998 = vunpack.c.l.b16 %v1934
      %v1999 = vunpack.c.l.b16 %v1935
      %v2000 = vunpack.c.l.b16 %v1936
      %v2001 = vunpack.c.l.b16 %v1937
      %v2002 = vunpack.c.l.b16 %v1938
      %v2003 = vunpack.c.l.b16 %v1939
      %v2004 = vunpack.c.l.b16 %v1940
      %v2005 = vunpack.c.l.b16 %v1941
      %v2006 = vunpack.c.l.b16 %v1942
      %v2007 = vunpack.c.l.b16 %v1943
      %v2008 = vpack.c.b16 %v1977, %v1976
      %v2009 = vpack.c.b16 %v1979, %v1978
      %v2010 = vpack.c.b16 %v1981, %v1980
      %v2011 = vpack.c.b16 %v1983, %v1982
      %v2012 = vpack.c.b16 %v1985, %v1984
      %v2013 = vpack.c.b16 %v1987, %v1986
      %v2014 = vpack.c.b16 %v1989, %v1988
      %v2015 = vpack.c.b16 %v1991, %v1990
      %v2016 = vpack.c.b16 %v1993, %v1992
      %v2017 = vpack.c.b16 %v1995, %v1994
      %v2018 = vpack.c.b16 %v1997, %v1996
      %v2019 = vpack.c.b16 %v1999, %v1998
      %v2020 = vpack.c.b16 %v2001, %v2000
      %v2021 = vpack.c.b16 %v2003, %v2002
      %v2022 = vpack.c.b16 %v2005, %v2004
      %v2023 = vpack.c.b16 %v2007, %v2006
      %2040 = vmatprep.subr.bf16.mxu0 0
      %2041 = vmatpush1.bf16.msra.mxu0 %v2008
      %2042 = vmatprep.subr.bf16.mxu0 0
      %2043 = vmatpush1.bf16.msra.mxu0 %v2009
      %2044 = vmatprep.subr.bf16.mxu0 0
      %2045 = vmatpush1.bf16.msra.mxu0 %v2010
      %2046 = vmatprep.subr.bf16.mxu0 0
      %2047 = vmatpush1.bf16.msra.mxu0 %v2011
      %2048 = vmatprep.subr.bf16.mxu0 0
      %2049 = vmatpush1.bf16.msra.mxu0 %v2012
      %2050 = vmatprep.subr.bf16.mxu0 0
      %2051 = vmatpush1.bf16.msra.mxu0 %v2013
      %2052 = vmatprep.subr.bf16.mxu0 0
      %2053 = vmatpush1.bf16.msra.mxu0 %v2014
      %2054 = vmatprep.subr.bf16.mxu0 0
      %2055 = vmatpush1.bf16.msra.mxu0 %v2015
      %2056 = vmatprep.subr.bf16.mxu0 0
      %2057 = vmatpush1.bf16.msra.mxu0 %v2016
      %2058 = vmatprep.subr.bf16.mxu0 0
      %2059 = vmatpush1.bf16.msra.mxu0 %v2017
      %2060 = vmatprep.subr.bf16.mxu0 0
      %2061 = vmatpush1.bf16.msra.mxu0 %v2018
      %2062 = vmatprep.subr.bf16.mxu0 0
      %2063 = vmatpush1.bf16.msra.mxu0 %v2019
      %2064 = vmatprep.subr.bf16.mxu0 0
      %2065 = vmatpush1.bf16.msra.mxu0 %v2020
      %2066 = vmatprep.subr.bf16.mxu0 0
      %2067 = vmatpush1.bf16.msra.mxu0 %v2021
      %2068 = vmatprep.subr.bf16.mxu0 0
      %2069 = vmatpush1.bf16.msra.mxu0 %v2022
      %2070 = vmatprep.subr.bf16.mxu0 0
      %2071 = vmatpush1.bf16.msra.mxu0 %v2023
      %2072 = vmatprep.mubr.bf16.mxu0 %v1909
      %2073 = vmatmul.mubr.bf16.gmra.mrb[0].mxu0 %v1908
      %v2074 = vpop.f32.mrb[0].mxu0
      %v2075 = vadd.f32 0.0, %v2074
      %v2076 = vpop.f32.mrb[0].mxu0
      %v2077 = vpop.f32.mrb[0].mxu0
      %v2078 = vadd.f32 0.0, %v2077
      %v2079 = vpop.f32.mrb[0].mxu0
      %2080 = vmatprep.mubr.bf16.mxu0 %v1911
      %2081 = vmatmul.mubr.bf16.gmra.mrb[0].mxu0 %v1910
      %v2082 = vpop.f32.mrb[0].mxu0
      %v2083 = vadd.f32 0.0, %v2082
      %v2084 = vpop.f32.mrb[0].mxu0
      %v2085 = vpop.f32.mrb[0].mxu0
      %v2086 = vpop.f32.mrb[0].mxu0
      %2087 = vdwg.mxu0
      %v2088 = vadd.f32 %v1637, %v2075
      %v2089 = vadd.f32 %v1638, %v2078
      %v2090 = vadd.f32 %v1639, %v2083
      %v2091 = vld [vmem:[%s12] sm:$0x1]
      %v2093 = vlaneseq
      %v2094 = vshrl.u32 %v2093, 7
      %v2095 = vsub.s32 0, %v2094
      %v2096 = vrot.slane %v2091, %v2095
      %v2098 = vadd.f32 %v2088, %v2096
      %v2099 = vadd.f32 %v2089, %v2096
      %v2100 = vadd.f32 %v2090, %v2096
      %2101 = vst [vmem:[%s440] sm:$0xff] %v2098
      %2102 = vst [vmem:[%s440 + $0x8] sm:$0xff] %v2099
      %2103 = vst [vmem:[%s440 + $0x10] sm:$0xff] %v2100
      %p2104 = scmp.lt.s32.totalorder %s24, 1
      %s2105 = scalar_select %p2104, %s24, 1
      %s2106 = smul.addr %s2105, 3
      %s2107 = smul.addr %s2106, 8
      %s2108 = scalar_lea.vmem %s13, %s2107
      // Predicated region
      $region73: #{image_encoder_forward.5} parent=71 // pred_check
        %p2109 = pneg %p320
      $region74: #{image_encoder_forward.5} parent=71 // pred_check_branch
        %2111 = sbr.rel (%p2109) target = $region76
      $region75: #{image_encoder_forward.5} parent=71 // pred_region
        _
      $region76: #{image_encoder_forward.5} parent=71 // pred_fallthru
        _
    $region72: #{image_encoder_forward.5} parent=5 // pred_fallthru
      _
    %p2112 = scmp.le.s32.totalorder 2, %s19
    // Predicated region
    $region77: #{image_encoder_forward.5} parent=5 // pred_check
      %p2113 = pneg %p2112
    $region78: #{image_encoder_forward.5} parent=5 // pred_check_branch
      %2115 = sbr.rel (%p2113) target = $region80
    $region79: #{image_encoder_forward.5} parent=5 // pred_region
      %s2116 = ssub.s32 %s19, 2
      // Predicated region
      $region81: #{image_encoder_forward.5} parent=79 // pred_check
        %p2117 = pneg %p326
      $region82: #{image_encoder_forward.5} parent=79 // pred_check_branch
        %2119 = sbr.rel (%p2117) target = $region84
      $region83: #{image_encoder_forward.5} parent=79 // pred_region
        %p2120 = scmp.lt.s32.totalorder %s25, 1
        %s2121 = scalar_select %p2120, %s25, 1
        %s2122 = smul.addr %s2121, 3
        %s2123 = smul.addr %s2122, 8
        %s2124 = scalar_lea.vmem %s13, %s2123
      $region84: #{image_encoder_forward.5} parent=79 // pred_fallthru
        _
    $region80: #{image_encoder_forward.5} parent=5 // pred_fallthru
      _
  $region6: #{image_encoder_forward.5} parent=0 // loop_footer
    %s23 = sadd.s32 1, %s19
  $region7: #{image_encoder_forward.5} parent=0 // loop_footer_branch
    %18 = sbr.rel target = $region3
  $region8: #{image_encoder_forward.5} parent=0 // loop_exit
    _

</llo_original>
